<compile_context>
chip_gen: v6e
topology: v6e:2x2x1
jax: 0.10.0
libtpu: 0.0.40
codegen_flags: <defaults>
</compile_context>

<pallas_src>
import jax
import jax.numpy as jnp
from jax.experimental import pallas as pl
from jax.experimental.pallas import tpu as pltpu


# ----------------------------- config (__C) ---------------------------------
class CFG:
    HIDDEN_SIZE = 512     # __C.HIDDEN_SIZE (GatedCrossAttentionBlock dim=512)
    SELECT_NUM = 16       # __C.SELECT_NUM
    CLASS_NUM = 3         # __C.CLASS_NUM -> box channels = CLASS_NUM + 5 = 8
    ANCHORS = 3           # anchors per grid cell
    IMG = 32              # input image spatial size
    GRID = 8              # s-scale grid (8x8 = 64 cells)
    SEQ = 8               # token sequence length


_H = CFG.HIDDEN_SIZE
_C = CFG.CLASS_NUM + 5            # 8
_A = CFG.ANCHORS                  # 3
_G = CFG.GRID * CFG.GRID          # 64 grid cells
_NBOX = _A * _C                   # 24 box channels per cell
_SFEAT = 256                      # s-scale feature width
_NVIS = _SFEAT + _NBOX            # 280
_NVIS_PAD = 384                   # padded to a multiple of 128 lanes


# ===================== single fused forward kernel ===========================
def _fused_net_kernel(patch_ref, tok_ref, embed_ref,
                      wvis_ref, bvis_ref,
                      wfs_ref, bfs_ref,
                      wtok_ref, btok_ref,
                      wqgt_ref, bqgt_ref,
                      box_ref, obj_ref, score_ref):
    BG = patch_ref.shape[0]
    B = tok_ref.shape[0] // CFG.SEQ
    G = BG // B
    Vp, H = embed_ref.shape
    D = wfs_ref.shape[1]

    # ---- visual encoder stand-in: ONE folded MXU pass [W_s | W_s @ W_box] ---
    # TODO(synk): fold is only valid for this linear stand-in; the real YOLO
    #             encoder is nonlinear and needs separate passes + box decode.
    vis = (jnp.dot(patch_ref[...], wvis_ref[...],
                   preferred_element_type=jnp.float32) + bvis_ref[...])  # (BG, 384)
    s = vis[:, :_SFEAT]                                   # (BG, 256) f32
    raw = vis[:, _SFEAT:_SFEAT + _NBOX]                   # (BG, 24)

    boxes_t = jnp.transpose(jax.nn.sigmoid(raw))          # (24, BG) lane-dense
    box_ref[...] = boxes_t
    # anchor-mean objectness (channel 4 of each anchor), already lane shaped
    obj_ref[...] = (boxes_t[4:5, :]
                    + boxes_t[4 + _C:5 + _C, :]
                    + boxes_t[4 + 2 * _C:5 + 2 * _C, :]) * (1.0 / 3.0)

    # ---- language encoder stand-in (y_1 only; y_2/y_3 are dead at eval) -----
    # Embedding gather as one-hot @ table MXU pass (table is VMEM resident).
    ids = tok_ref[...]                                    # (B*S, 1) int32
    iota = jax.lax.broadcasted_iota(jnp.int32, (ids.shape[0], Vp), 1)
    onehot = jnp.where(iota == ids, 1.0, 0.0).astype(jnp.bfloat16)
    emb = jnp.dot(onehot, embed_ref[...],
                  preferred_element_type=jnp.float32)     # (B*S, H)
    feat = jnp.tanh(jnp.dot(emb.astype(jnp.bfloat16), wtok_ref[...],
                            preferred_element_type=jnp.float32) + btok_ref[...])
    # TODO(synk): real language encoder masks padding tokens in the pooling.
    pooled = jnp.mean(feat.reshape(B, CFG.SEQ, H), axis=1)          # (B, H)

    # ---- fused language projections (W_flat folded in): [Wq | Wgate | Wts] --
    qgt = (jnp.dot(pooled.astype(jnp.bfloat16), wqgt_ref[...],
                   preferred_element_type=jnp.float32) + bqgt_ref[...])  # (B, 3D)
    q = qgt[:, 0:D]
    gate = jax.nn.sigmoid(qgt[:, D:2 * D])
    y1 = qgt[:, 2 * D:3 * D]                              # linear_ts(flat_lang_feat)

    # ---- MultiScaleFusion stand-in, s branch (1x1 conv == matmul) -----------
    s_new = (jnp.dot(s.astype(jnp.bfloat16), wfs_ref[...],
                     preferred_element_type=jnp.float32)
             + bfs_ref[...]).reshape(B, G, D)             # (B, G, D) f32

    # ---- GatedCrossAttentionBlock stand-in + WeakREChead similarity ---------
    # Elementwise kept in f32 so v5e (no bf16 VPU/EUP) is not penalized.
    gated = s_new + gate[:, None, :] * jnp.tanh(s_new * q[:, None, :])
    score = jnp.sum(gated * y1[:, None, :], axis=-1)      # (B, G)
    # lane-dense (1, B*G) output slab, written per batch via static slices
    for b in range(B):
        score_ref[:, b * G:(b + 1) * G] = score[b:b + 1, :]


def _fused_net_call(patches, tokens, p):
    BG, Kp = patches.shape
    BS = tokens.shape[0]
    Vp, H = p["embed"].shape
    return pl.pallas_call(
        _fused_net_kernel,
        out_shape=(jax.ShapeDtypeStruct((_NBOX, BG), jnp.float32),   # boxes (transposed)
                   jax.ShapeDtypeStruct((1, BG), jnp.float32),       # anchor-mean objectness
                   jax.ShapeDtypeStruct((1, BG), jnp.float32)),      # similarity scores
        grid=(1,),
        in_specs=[
            pl.BlockSpec((BG, Kp), lambda i: (0, 0)),
            pl.BlockSpec((BS, 1), lambda i: (0, 0)),
            pl.BlockSpec((Vp, H), lambda i: (0, 0)),
            pl.BlockSpec((Kp, _NVIS_PAD), lambda i: (0, 0)),
            pl.BlockSpec((1, _NVIS_PAD), lambda i: (0, 0)),
            pl.BlockSpec((_SFEAT, H), lambda i: (0, 0)),
            pl.BlockSpec((1, H), lambda i: (0, 0)),
            pl.BlockSpec((H, H), lambda i: (0, 0)),
            pl.BlockSpec((1, H), lambda i: (0, 0)),
            pl.BlockSpec((H, 3 * H), lambda i: (0, 0)),
            pl.BlockSpec((1, 3 * H), lambda i: (0, 0)),
        ],
        out_specs=(pl.BlockSpec((_NBOX, BG), lambda i: (0, 0)),
                   pl.BlockSpec((1, BG), lambda i: (0, 0)),
                   pl.BlockSpec((1, BG), lambda i: (0, 0))),
        # TODO(synk): once the real (heavy) encoders replace the stand-ins,
        #             split B*G over a ("parallel",) grid axis (dual-TC on v7x)
        #             and set vmem_limit_bytes against its 64 MiB VMEM.
        compiler_params=pltpu.CompilerParams(dimension_semantics=("arbitrary",)),
    )(patches, tokens, p["embed"],
      p["w_vis"], p["b_vis"],
      p["w_fs"], p["b_fs"],
      p["w_tok"], p["b_tok"],
      p["w_qgt"], p["b_qgt"])


# ============================ Net.forward (eval) =============================
def _patchify(x_nchw, grid):
    """NCHW image -> (B, grid*grid, p*p*C) channels-last patches.
    TODO(synk): fold into a BlockSpec index_map if a real (large) visual
    encoder is ever ported."""
    B, C, Hh, Ww = x_nchw.shape
    p = Hh // grid
    x = x_nchw.reshape(B, C, grid, p, grid, p)
    x = x.transpose(0, 2, 4, 3, 5, 1)
    return x.reshape(B, grid * grid, p * p * C)


def net_forward(params, x, y):
    B = x.shape[0]
    G = _G

    # frozen visual encoder input (with torch.no_grad()): per-cell patches.
    patches = _patchify(x, CFG.GRID).reshape(B * G, -1).astype(jnp.bfloat16)

    # only y[:, 0, :] is live in the eval path (y_2/y_3, lang_fea, y_new are
    # training-only and pruned).
    tokens = y[:, 0, :].reshape(B * CFG.SEQ, 1)

    # single fused kernel: visual features + box head + objectness mean +
    # language encoding + fusion + gated cross-attention + similarity.
    box_t, obj, score = _fused_net_call(patches, tokens, params)

    boxes_s = jnp.transpose(box_t).reshape(B, G, _A, _C)     # (B, G, A, C)
    mean_i = obj.reshape(B, G)                               # anchor-mean objectness
    scores_all = score.reshape(B, G)                         # WeakREChead similarity

    # top-k grid selection; ascending sort matches torch masked_select order.
    _vals, indices = jax.lax.top_k(mean_i, CFG.SELECT_NUM)
    sorted_idx = jnp.sort(indices, axis=1)                   # (B, sel)
    box_sml_new = jnp.take_along_axis(
        boxes_s, sorted_idx[:, :, None, None], axis=1)       # (B, sel, A, C)

    # WeakREChead (eval): argmax similarity over the selected cells.
    sel_scores = jnp.take_along_axis(scores_all, sorted_idx, axis=1)
    best = jnp.argmax(sel_scores, axis=1)                    # (B,)

    # get_boxes: pick the one-hot-selected cell, center->corner, best anchor.
    chosen = jnp.take_along_axis(
        box_sml_new, best[:, None, None, None], axis=1)[:, 0]  # (B, A, C)
    cx, cy, w, h, sc = (chosen[..., 0], chosen[..., 1],
                        chosen[..., 2], chosen[..., 3], chosen[..., 4])
    x0 = cx - w * 0.5
    y0 = cy - h * 0.5
    x1 = x0 + w
    y1 = y0 + h
    refined = jnp.stack([x0, y0, x1, y1, sc], axis=-1)       # (B, A, 5)
    ind = jnp.argmax(refined[:, :, 4], axis=-1)              # first max (torch tie rule)
    box_new = jnp.take_along_axis(refined, ind[:, None, None], axis=1)
    return box_new                                           # (B, 1, 5)


# ============================ parameter init =================================
def init_params(key, token_size):
    H = _H
    Kp = (CFG.IMG // CFG.GRID) ** 2 * 3                      # 48
    keys = iter(jax.random.split(key, 12))

    def w32(shape, scale=0.02):
        return scale * jax.random.normal(next(keys), shape, dtype=jnp.float32)

    def z(n):
        return jnp.zeros((n,), jnp.float32)

    # ---- raw (f32) stand-in weights ----------------------------------------
    w_s = w32((Kp, _SFEAT)); b_s = z(_SFEAT)
    w_box = w32((_SFEAT, _NBOX)); b_box = z(_NBOX)
    w_tok = w32((H, H)); b_tok = z(H)
    w_flat = w32((H, H)); b_flat = z(H)
    w_fs = w32((_SFEAT, H)); b_fs = z(H)                     # MultiScaleFusion s-branch
    w_q = w32((H, H)); w_gate = w32((H, H)); w_ts = w32((H, H))
    b_q = z(H); b_gate = z(H); b_ts = z(H)
    embed = 0.1 * jax.random.normal(next(keys), (token_size, H), dtype=jnp.float32)

    # ---- linear-chain folds (composed in f32, single bf16 cast) -------------
    # visual head: raw = (patch @ W_s + b_s) @ W_box + b_box
    #   -> [W_s | W_s @ W_box], N padded 280 -> 384 (no partial lane tile).
    w_vis = jnp.concatenate([w_s, w_s @ w_box], axis=1)              # (Kp, 280)
    b_vis = jnp.concatenate([b_s, b_s @ w_box + b_box])              # (280,)
    pad = _NVIS_PAD - _NVIS
    w_vis = jnp.pad(w_vis, ((0, 0), (0, pad)))
    b_vis = jnp.pad(b_vis, (0, pad))

    # language head: qgt = (pooled @ W_flat + b_flat) @ [Wq|Wgate|Wts] + b
    w_qgt_raw = jnp.concatenate([w_q, w_gate, w_ts], axis=1)         # (H, 3H)
    b_qgt_raw = jnp.concatenate([b_q, b_gate, b_ts])                 # (3H,)
    w_qgt = w_flat @ w_qgt_raw
    b_qgt = b_flat @ w_qgt_raw + b_qgt_raw

    # vocab padded to a lane-tile multiple so the one-hot gather matmul has no
    # partial K tile (pad rows are never selected: token ids < token_size).
    Vp = ((token_size + 127) // 128) * 128
    embed = jnp.pad(embed, ((0, Vp - token_size), (0, 0)))

    # NOTE: linear_vs (1024 -> HIDDEN) is declared by the reference
    # Net.__init__ but never used in forward(); omitted here.
    return {
        "embed": embed.astype(jnp.bfloat16),
        "w_vis": w_vis.astype(jnp.bfloat16), "b_vis": b_vis.reshape(1, -1),
        "w_fs": w_fs.astype(jnp.bfloat16), "b_fs": b_fs.reshape(1, -1),
        "w_tok": w_tok.astype(jnp.bfloat16), "b_tok": b_tok.reshape(1, -1),
        "w_qgt": w_qgt.astype(jnp.bfloat16), "b_qgt": b_qgt.reshape(1, -1),
    }


# ================================ main =======================================
if __name__ == "__main__":
    B = 2
    token_size = 100
    key = jax.random.PRNGKey(0)
    kx, ky, kp = jax.random.split(key, 3)

    x = jax.random.normal(kx, (B, 3, CFG.IMG, CFG.IMG), dtype=jnp.float32)  # NCHW
    y = jax.random.randint(ky, (B, 3, CFG.SEQ), 0, token_size, dtype=jnp.int32)

    params = init_params(kp, token_size)

    box_pred = jax.jit(net_forward)(params, x, y)
    box_pred = jax.block_until_ready(box_pred)

    assert box_pred.shape == (B, 1, 5), box_pred.shape
    assert bool(jnp.all(jnp.isfinite(box_pred)))
    print("KERNEL_OK")
</pallas_src>

<mosaic_0001>
module attributes {stable_mosaic.version = 11 : i64} {
  func.func @_fused_net_kernel(%arg0: i32, %arg1: memref<128x48xbf16, #tpu.memory_space<vmem>>, %arg2: memref<16x1xi32, #tpu.memory_space<vmem>>, %arg3: memref<128x512xbf16, #tpu.memory_space<vmem>>, %arg4: memref<48x384xbf16, #tpu.memory_space<vmem>>, %arg5: memref<1x384xf32, #tpu.memory_space<vmem>>, %arg6: memref<256x512xbf16, #tpu.memory_space<vmem>>, %arg7: memref<1x512xf32, #tpu.memory_space<vmem>>, %arg8: memref<512x512xbf16, #tpu.memory_space<vmem>>, %arg9: memref<1x512xf32, #tpu.memory_space<vmem>>, %arg10: memref<512x1536xbf16, #tpu.memory_space<vmem>>, %arg11: memref<1x1536xf32, #tpu.memory_space<vmem>>, %arg12: memref<24x128xf32, #tpu.memory_space<vmem>>, %arg13: memref<1x128xf32, #tpu.memory_space<vmem>>, %arg14: memref<1x128xf32, #tpu.memory_space<vmem>>) attributes {dimension_semantics = [#tpu.dimension_semantics<arbitrary>], iteration_bounds = array<i64: 1>, scalar_prefetch = 0 : i64, scratch_operands = 0 : i64, tpu.core_type = #tpu.core_type<tc>, window_params = [{pipeline_mode = #tpu.pipeline_mode<synchronous>, transform_indices = @transform_0, window_bounds = array<i64: 128, 48>}, {pipeline_mode = #tpu.pipeline_mode<synchronous>, transform_indices = @transform_1, window_bounds = array<i64: 16, 1>}, {pipeline_mode = #tpu.pipeline_mode<synchronous>, transform_indices = @transform_2, window_bounds = array<i64: 128, 512>}, {pipeline_mode = #tpu.pipeline_mode<synchronous>, transform_indices = @transform_3, window_bounds = array<i64: 48, 384>}, {pipeline_mode = #tpu.pipeline_mode<synchronous>, transform_indices = @transform_4, window_bounds = array<i64: 1, 384>}, {pipeline_mode = #tpu.pipeline_mode<synchronous>, transform_indices = @transform_5, window_bounds = array<i64: 256, 512>}, {pipeline_mode = #tpu.pipeline_mode<synchronous>, transform_indices = @transform_6, window_bounds = array<i64: 1, 512>}, {pipeline_mode = #tpu.pipeline_mode<synchronous>, transform_indices = @transform_7, window_bounds = array<i64: 512, 512>}, {pipeline_mode = #tpu.pipeline_mode<synchronous>, transform_indices = @transform_8, window_bounds = array<i64: 1, 512>}, {pipeline_mode = #tpu.pipeline_mode<synchronous>, transform_indices = @transform_9, window_bounds = array<i64: 512, 1536>}, {pipeline_mode = #tpu.pipeline_mode<synchronous>, transform_indices = @transform_10, window_bounds = array<i64: 1, 1536>}, {pipeline_mode = #tpu.pipeline_mode<synchronous>, transform_indices = @transform_11, window_bounds = array<i64: 24, 128>}, {pipeline_mode = #tpu.pipeline_mode<synchronous>, transform_indices = @transform_12, window_bounds = array<i64: 1, 128>}, {pipeline_mode = #tpu.pipeline_mode<synchronous>, transform_indices = @transform_13, window_bounds = array<i64: 1, 128>}]} {
    %c0 = arith.constant 0 : index
    %c0_0 = arith.constant 0 : index
    %0 = vector.load %arg1[%c0, %c0_0] : memref<128x48xbf16, #tpu.memory_space<vmem>>, vector<128x48xbf16>
    %c0_1 = arith.constant 0 : index
    %c0_2 = arith.constant 0 : index
    %1 = vector.load %arg4[%c0_1, %c0_2] : memref<48x384xbf16, #tpu.memory_space<vmem>>, vector<48x384xbf16>
    %cst = arith.constant dense<0.000000e+00> : vector<128x384xf32>
    %2 = tpu.matmul %0, %1, %cst {dimension_numbers = #tpu.dot_dimension_numbers<[1], [0], [0], [1], [0, 0, 1, 1], [], []>} : vector<128x48xbf16>, vector<48x384xbf16>, vector<128x384xf32> -> vector<128x384xf32>
    %c0_3 = arith.constant 0 : index
    %c0_4 = arith.constant 0 : index
    %3 = vector.load %arg5[%c0_3, %c0_4] : memref<1x384xf32, #tpu.memory_space<vmem>>, vector<1x384xf32>
    %4 = vector.broadcast %3 : vector<1x384xf32> to vector<128x384xf32>
    %5 = arith.addf %2, %4 : vector<128x384xf32>
    %6 = vector.extract_strided_slice %5 {offsets = [0, 0], sizes = [128, 256], strides = [1, 1]} : vector<128x384xf32> to vector<128x256xf32>
    %7 = vector.extract_strided_slice %5 {offsets = [0, 256], sizes = [128, 24], strides = [1, 1]} : vector<128x384xf32> to vector<128x24xf32>
    %8 = arith.negf %7 : vector<128x24xf32>
    %9 = math.exp %8 : vector<128x24xf32>
    %cst_5 = arith.constant 1.000000e+00 : f32
    %10 = vector.broadcast %cst_5 : f32 to vector<128x24xf32>
    %11 = arith.addf %10, %9 : vector<128x24xf32>
    %12 = arith.divf %10, %11 : vector<128x24xf32>
    %13 = tpu.transpose %12, [1, 0] : vector<128x24xf32> -> vector<24x128xf32>
    %c0_6 = arith.constant 0 : index
    %c0_7 = arith.constant 0 : index
    %14 = vector.load %arg12[%c0_6, %c0_7] : memref<24x128xf32, #tpu.memory_space<vmem>>, vector<24x128xf32>
    tpu.vector_store %arg12[%c0_6, %c0_7], %13 {strides = array<i32>} : memref<24x128xf32, #tpu.memory_space<vmem>>, vector<24x128xf32>,
    %15 = vector.extract_strided_slice %13 {offsets = [4, 0], sizes = [1, 128], strides = [1, 1]} : vector<24x128xf32> to vector<1x128xf32>
    %16 = vector.extract_strided_slice %13 {offsets = [12, 0], sizes = [1, 128], strides = [1, 1]} : vector<24x128xf32> to vector<1x128xf32>
    %17 = arith.addf %15, %16 : vector<1x128xf32>
    %18 = vector.extract_strided_slice %13 {offsets = [20, 0], sizes = [1, 128], strides = [1, 1]} : vector<24x128xf32> to vector<1x128xf32>
    %19 = arith.addf %17, %18 : vector<1x128xf32>
    %cst_8 = arith.constant 0.333333343 : f32
    %20 = vector.broadcast %cst_8 : f32 to vector<1x128xf32>
    %21 = arith.mulf %19, %20 : vector<1x128xf32>
    %c0_9 = arith.constant 0 : index
    %c0_10 = arith.constant 0 : index
    %22 = vector.load %arg13[%c0_9, %c0_10] : memref<1x128xf32, #tpu.memory_space<vmem>>, vector<1x128xf32>
    tpu.vector_store %arg13[%c0_9, %c0_10], %21 {strides = array<i32>} : memref<1x128xf32, #tpu.memory_space<vmem>>, vector<1x128xf32>,
    %c0_11 = arith.constant 0 : index
    %c0_12 = arith.constant 0 : index
    %23 = vector.load %arg2[%c0_11, %c0_12] : memref<16x1xi32, #tpu.memory_space<vmem>>, vector<16x1xi32>
    %24 = tpu.iota {dimensions = array<i32: 1>} : vector<16x128xi32>
    %25 = vector.broadcast %23 : vector<16x1xi32> to vector<16x128xi32>
    %26 = arith.cmpi eq, %24, %25 : vector<16x128xi32>
    %cst_13 = arith.constant 1.000000e+00 : f32
    %cst_14 = arith.constant 0.000000e+00 : f32
    %27 = vector.broadcast %cst_13 : f32 to vector<16x128xf32>
    %28 = vector.broadcast %cst_14 : f32 to vector<16x128xf32>
    %29 = arith.select %26, %27, %28 : vector<16x128xi1>, vector<16x128xf32>
    %30 = arith.truncf %29 : vector<16x128xf32> to vector<16x128xbf16>
    %c0_15 = arith.constant 0 : index
    %c0_16 = arith.constant 0 : index
    %31 = vector.load %arg3[%c0_15, %c0_16] : memref<128x512xbf16, #tpu.memory_space<vmem>>, vector<128x512xbf16>
    %cst_17 = arith.constant dense<0.000000e+00> : vector<16x512xf32>
    %32 = tpu.matmul %30, %31, %cst_17 {dimension_numbers = #tpu.dot_dimension_numbers<[1], [0], [0], [1], [0, 0, 1, 1], [], []>} : vector<16x128xbf16>, vector<128x512xbf16>, vector<16x512xf32> -> vector<16x512xf32>
    %33 = arith.truncf %32 : vector<16x512xf32> to vector<16x512xbf16>
    %c0_18 = arith.constant 0 : index
    %c0_19 = arith.constant 0 : index
    %34 = vector.load %arg8[%c0_18, %c0_19] : memref<512x512xbf16, #tpu.memory_space<vmem>>, vector<512x512xbf16>
    %cst_20 = arith.constant dense<0.000000e+00> : vector<16x512xf32>
    %35 = tpu.matmul %33, %34, %cst_20 {dimension_numbers = #tpu.dot_dimension_numbers<[1], [0], [0], [1], [0, 0, 1, 1], [], []>} : vector<16x512xbf16>, vector<512x512xbf16>, vector<16x512xf32> -> vector<16x512xf32>
    %c0_21 = arith.constant 0 : index
    %c0_22 = arith.constant 0 : index
    %36 = vector.load %arg9[%c0_21, %c0_22] : memref<1x512xf32, #tpu.memory_space<vmem>>, vector<1x512xf32>
    %37 = vector.broadcast %36 : vector<1x512xf32> to vector<16x512xf32>
    %38 = arith.addf %35, %37 : vector<16x512xf32>
    %39 = math.tanh %38 : vector<16x512xf32>
    %40 = vector.shape_cast %39 : vector<16x512xf32> to vector<2x8x512xf32>
    %cst_23 = arith.constant dense<0.000000e+00> : vector<2x512xf32>
    %41 = vector.multi_reduction <add>, %40, %cst_23 [1] : vector<2x8x512xf32> to vector<2x512xf32>
    %cst_24 = arith.constant 8.000000e+00 : f32
    %42 = vector.broadcast %cst_24 : f32 to vector<2x512xf32>
    %43 = arith.divf %41, %42 : vector<2x512xf32>
    %44 = arith.truncf %43 : vector<2x512xf32> to vector<2x512xbf16>
    %c0_25 = arith.constant 0 : index
    %c0_26 = arith.constant 0 : index
    %45 = vector.load %arg10[%c0_25, %c0_26] : memref<512x1536xbf16, #tpu.memory_space<vmem>>, vector<512x1536xbf16>
    %cst_27 = arith.constant dense<0.000000e+00> : vector<2x1536xf32>
    %46 = tpu.matmul %44, %45, %cst_27 {dimension_numbers = #tpu.dot_dimension_numbers<[1], [0], [0], [1], [0, 0, 1, 1], [], []>} : vector<2x512xbf16>, vector<512x1536xbf16>, vector<2x1536xf32> -> vector<2x1536xf32>
    %c0_28 = arith.constant 0 : index
    %c0_29 = arith.constant 0 : index
    %47 = vector.load %arg11[%c0_28, %c0_29] : memref<1x1536xf32, #tpu.memory_space<vmem>>, vector<1x1536xf32>
    %48 = vector.broadcast %47 : vector<1x1536xf32> to vector<2x1536xf32>
    %49 = arith.addf %46, %48 : vector<2x1536xf32>
    %50 = vector.extract_strided_slice %49 {offsets = [0, 0], sizes = [2, 512], strides = [1, 1]} : vector<2x1536xf32> to vector<2x512xf32>
    %51 = vector.extract_strided_slice %49 {offsets = [0, 512], sizes = [2, 512], strides = [1, 1]} : vector<2x1536xf32> to vector<2x512xf32>
    %52 = arith.negf %51 : vector<2x512xf32>
    %53 = math.exp %52 : vector<2x512xf32>
    %cst_30 = arith.constant 1.000000e+00 : f32
    %54 = vector.broadcast %cst_30 : f32 to vector<2x512xf32>
    %55 = arith.addf %54, %53 : vector<2x512xf32>
    %56 = arith.divf %54, %55 : vector<2x512xf32>
    %57 = vector.extract_strided_slice %49 {offsets = [0, 1024], sizes = [2, 512], strides = [1, 1]} : vector<2x1536xf32> to vector<2x512xf32>
    %58 = arith.truncf %6 : vector<128x256xf32> to vector<128x256xbf16>
    %c0_31 = arith.constant 0 : index
    %c0_32 = arith.constant 0 : index
    %59 = vector.load %arg6[%c0_31, %c0_32] : memref<256x512xbf16, #tpu.memory_space<vmem>>, vector<256x512xbf16>
    %cst_33 = arith.constant dense<0.000000e+00> : vector<128x512xf32>
    %60 = tpu.matmul %58, %59, %cst_33 {dimension_numbers = #tpu.dot_dimension_numbers<[1], [0], [0], [1], [0, 0, 1, 1], [], []>} : vector<128x256xbf16>, vector<256x512xbf16>, vector<128x512xf32> -> vector<128x512xf32>
    %c0_34 = arith.constant 0 : index
    %c0_35 = arith.constant 0 : index
    %61 = vector.load %arg7[%c0_34, %c0_35] : memref<1x512xf32, #tpu.memory_space<vmem>>, vector<1x512xf32>
    %62 = vector.broadcast %61 : vector<1x512xf32> to vector<128x512xf32>
    %63 = arith.addf %60, %62 : vector<128x512xf32>
    %64 = vector.shape_cast %63 : vector<128x512xf32> to vector<2x64x512xf32>
    %65 = vector.shape_cast %56 : vector<2x512xf32> to vector<2x1x512xf32>
    %66 = vector.shape_cast %50 : vector<2x512xf32> to vector<2x1x512xf32>
    %67 = vector.broadcast %66 : vector<2x1x512xf32> to vector<2x64x512xf32>
    %68 = arith.mulf %64, %67 : vector<2x64x512xf32>
    %69 = math.tanh %68 : vector<2x64x512xf32>
    %70 = vector.broadcast %65 : vector<2x1x512xf32> to vector<2x64x512xf32>
    %71 = arith.mulf %70, %69 : vector<2x64x512xf32>
    %72 = arith.addf %64, %71 : vector<2x64x512xf32>
    %73 = vector.shape_cast %57 : vector<2x512xf32> to vector<2x1x512xf32>
    %74 = vector.broadcast %73 : vector<2x1x512xf32> to vector<2x64x512xf32>
    %75 = arith.mulf %72, %74 : vector<2x64x512xf32>
    %cst_36 = arith.constant dense<0.000000e+00> : vector<2x64xf32>
    %76 = vector.multi_reduction <add>, %75, %cst_36 [2] : vector<2x64x512xf32> to vector<2x64xf32>
    %77 = vector.extract_strided_slice %76 {offsets = [0, 0], sizes = [1, 64], strides = [1, 1]} : vector<2x64xf32> to vector<1x64xf32>
    %c0_37 = arith.constant 0 : index
    %c0_38 = arith.constant 0 : index
    %78 = vector.load %arg14[%c0_37, %c0_38] : memref<1x128xf32, #tpu.memory_space<vmem>>, vector<1x64xf32>
    tpu.vector_store %arg14[%c0_37, %c0_38], %77 {strides = array<i32>} : memref<1x128xf32, #tpu.memory_space<vmem>>, vector<1x64xf32>,
    %79 = vector.extract_strided_slice %76 {offsets = [1, 0], sizes = [1, 64], strides = [1, 1]} : vector<2x64xf32> to vector<1x64xf32>
    %c0_39 = arith.constant 0 : index
    %c64 = arith.constant 64 : index
    %80 = vector.load %arg14[%c0_39, %c64] : memref<1x128xf32, #tpu.memory_space<vmem>>, vector<1x64xf32>
    tpu.vector_store %arg14[%c0_39, %c64], %79 {strides = array<i32>} : memref<1x128xf32, #tpu.memory_space<vmem>>, vector<1x64xf32>,
    return
  }
  func.func @transform_0(%arg0: i32) -> (i32, i32) {
    %c0_i32 = arith.constant 0 : i32
    %c0_i32_0 = arith.constant 0 : i32
    %c0_i32_1 = arith.constant 0 : i32
    return %c0_i32, %c0_i32_0 : i32, i32
  }
  func.func @transform_1(%arg0: i32) -> (i32, i32) {
    %c0_i32 = arith.constant 0 : i32
    %c0_i32_0 = arith.constant 0 : i32
    %c0_i32_1 = arith.constant 0 : i32
    return %c0_i32, %c0_i32_0 : i32, i32
  }
  func.func @transform_2(%arg0: i32) -> (i32, i32) {
    %c0_i32 = arith.constant 0 : i32
    %c0_i32_0 = arith.constant 0 : i32
    %c0_i32_1 = arith.constant 0 : i32
    return %c0_i32, %c0_i32_0 : i32, i32
  }
  func.func @transform_3(%arg0: i32) -> (i32, i32) {
    %c0_i32 = arith.constant 0 : i32
    %c0_i32_0 = arith.constant 0 : i32
    %c0_i32_1 = arith.constant 0 : i32
    return %c0_i32, %c0_i32_0 : i32, i32
  }
  func.func @transform_4(%arg0: i32) -> (i32, i32) {
    %c0_i32 = arith.constant 0 : i32
    %c0_i32_0 = arith.constant 0 : i32
    %c0_i32_1 = arith.constant 0 : i32
    return %c0_i32, %c0_i32_0 : i32, i32
  }
  func.func @transform_5(%arg0: i32) -> (i32, i32) {
    %c0_i32 = arith.constant 0 : i32
    %c0_i32_0 = arith.constant 0 : i32
    %c0_i32_1 = arith.constant 0 : i32
    return %c0_i32, %c0_i32_0 : i32, i32
  }
  func.func @transform_6(%arg0: i32) -> (i32, i32) {
    %c0_i32 = arith.constant 0 : i32
    %c0_i32_0 = arith.constant 0 : i32
    %c0_i32_1 = arith.constant 0 : i32
    return %c0_i32, %c0_i32_0 : i32, i32
  }
  func.func @transform_7(%arg0: i32) -> (i32, i32) {
    %c0_i32 = arith.constant 0 : i32
    %c0_i32_0 = arith.constant 0 : i32
    %c0_i32_1 = arith.constant 0 : i32
    return %c0_i32, %c0_i32_0 : i32, i32
  }
  func.func @transform_8(%arg0: i32) -> (i32, i32) {
    %c0_i32 = arith.constant 0 : i32
    %c0_i32_0 = arith.constant 0 : i32
    %c0_i32_1 = arith.constant 0 : i32
    return %c0_i32, %c0_i32_0 : i32, i32
  }
  func.func @transform_9(%arg0: i32) -> (i32, i32) {
    %c0_i32 = arith.constant 0 : i32
    %c0_i32_0 = arith.constant 0 : i32
    %c0_i32_1 = arith.constant 0 : i32
    return %c0_i32, %c0_i32_0 : i32, i32
  }
  func.func @transform_10(%arg0: i32) -> (i32, i32) {
    %c0_i32 = arith.constant 0 : i32
    %c0_i32_0 = arith.constant 0 : i32
    %c0_i32_1 = arith.constant 0 : i32
    return %c0_i32, %c0_i32_0 : i32, i32
  }
  func.func @transform_11(%arg0: i32) -> (i32, i32) {
    %c0_i32 = arith.constant 0 : i32
    %c0_i32_0 = arith.constant 0 : i32
    %c0_i32_1 = arith.constant 0 : i32
    return %c0_i32, %c0_i32_0 : i32, i32
  }
  func.func @transform_12(%arg0: i32) -> (i32, i32) {
    %c0_i32 = arith.constant 0 : i32
    %c0_i32_0 = arith.constant 0 : i32
    %c0_i32_1 = arith.constant 0 : i32
    return %c0_i32, %c0_i32_0 : i32, i32
  }
  func.func @transform_13(%arg0: i32) -> (i32, i32) {
    %c0_i32 = arith.constant 0 : i32
    %c0_i32_0 = arith.constant 0 : i32
    %c0_i32_1 = arith.constant 0 : i32
    return %c0_i32, %c0_i32_0 : i32, i32
  }
}

</mosaic_0001>

<llo_original>
// kernel: squeeze.0
$region0: #{squeeze.0}
  %s0 = inlined_call_operand.vmem [shape: s32[2,1,8], index: 0, kind: input, shape index: {}]
  %s1 = inlined_call_operand.vmem [shape: s32[16,1], index: 1, kind: output, shape index: {}]
  $region1: #{squeeze.0} parent=0
    #allocation0 [shape = 'u8[4096]{0}', space=vmem, size = 0x1000, scoped, tag = 'scoped mem for input reshape']
    %s3 = sshll.u32 1, 2
    %s4 = ssub.s32 %s3, 1
    %v5 = vld [vmem:[%s0] sm:%s4]
    %6 = vst [vmem:[#allocation0] sm:%s4] %v5
    %v7 = vld [vmem:[#allocation0] sm:$0x3]
    %vm8 = vcmask 7168
    %9 = vst.msk [vmem:[%s1] ss:$8 sm:$0x3] %vm8, %v7
    %v10 = vld [vmem:[#allocation0] sm:$0x3]
    %11 = vrot.lane.b32.xlu0 %v10, 127
    %v12 = vpop.permute.xlu0 %11
    %vm13 = vcmask 7168
    %s14 = scalar_lea.vmem %s1, 1
    %15 = vst.msk [vmem:[%s14] ss:$8 sm:$0x3] %vm13, %v12
    %v16 = vld [vmem:[#allocation0] sm:$0x3]
    %17 = vrot.lane.b32.xlu0 %v16, 126
    %v18 = vpop.permute.xlu0 %17
    %vm19 = vcmask 7168
    %s20 = scalar_lea.vmem %s1, 2
    %21 = vst.msk [vmem:[%s20] ss:$8 sm:$0x3] %vm19, %v18
    %v22 = vld [vmem:[#allocation0] sm:$0x3]
    %23 = vrot.lane.b32.xlu0 %v22, 125
    %v24 = vpop.permute.xlu0 %23
    %vm25 = vcmask 7168
    %s26 = scalar_lea.vmem %s1, 3
    %27 = vst.msk [vmem:[%s26] ss:$8 sm:$0x3] %vm25, %v24
    %v28 = vld [vmem:[#allocation0] sm:$0x3]
    %29 = vrot.lane.b32.xlu0 %v28, 124
    %v30 = vpop.permute.xlu0 %29
    %vm31 = vcmask 7168
    %s32 = scalar_lea.vmem %s1, 4
    %33 = vst.msk [vmem:[%s32] ss:$8 sm:$0x3] %vm31, %v30
    %v34 = vld [vmem:[#allocation0] sm:$0x3]
    %35 = vrot.lane.b32.xlu0 %v34, 123
    %v36 = vpop.permute.xlu0 %35
    %vm37 = vcmask 7168
    %s38 = scalar_lea.vmem %s1, 5
    %39 = vst.msk [vmem:[%s38] ss:$8 sm:$0x3] %vm37, %v36
    %v40 = vld [vmem:[#allocation0] sm:$0x3]
    %41 = vrot.lane.b32.xlu0 %v40, 122
    %v42 = vpop.permute.xlu0 %41
    %vm43 = vcmask 7168
    %s44 = scalar_lea.vmem %s1, 6
    %45 = vst.msk [vmem:[%s44] ss:$8 sm:$0x3] %vm43, %v42
    %v46 = vld [vmem:[#allocation0] sm:$0x3]
    %47 = vrot.lane.b32.xlu0 %v46, 121
    %v48 = vpop.permute.xlu0 %47
    %vm49 = vcmask 7168
    %s50 = scalar_lea.vmem %s1, 7
    %51 = vst.msk [vmem:[%s50] ss:$8 sm:$0x3] %vm49, %v48

// kernel: net_forward.1
$region0: #{net_forward.1}
  #allocation0 [shape = 'u32[]', space=smem, size = 0x4, offset = 0x4, fixed_abs, tag = 'smem constant byte address 0x4 - core index']
  #allocation1 [shape = 'u32[144,128]{1,0:T(1,128)}', space=vmem, size = 0x12000, scoped, tag = 'internal scratch']
  %s0 = inlined_call_operand.vmem [shape: bf16[128,48], index: 0, kind: input, shape index: {}]
  %s1 = inlined_call_operand.vmem [shape: s32[16,1], index: 1, kind: input, shape index: {}]
  %s2 = inlined_call_operand.hbm [shape: bf16[128,512], index: 2, kind: input, shape index: {}]
  %s3 = inlined_call_operand.hbm [shape: bf16[48,384], index: 3, kind: input, shape index: {}]
  %s4 = inlined_call_operand.hbm [shape: f32[1,384], index: 4, kind: input, shape index: {}]
  %s5 = inlined_call_operand.vmem [shape: bf16[256,512], index: 5, kind: input, shape index: {}]
  %s6 = inlined_call_operand.hbm [shape: f32[1,512], index: 6, kind: input, shape index: {}]
  %s7 = inlined_call_operand.vmem [shape: bf16[512,512], index: 7, kind: input, shape index: {}]
  %s8 = inlined_call_operand.hbm [shape: f32[1,512], index: 8, kind: input, shape index: {}]
  %s9 = inlined_call_operand.hbm [shape: bf16[512,1536], index: 9, kind: input, shape index: {}]
  %s10 = inlined_call_operand.hbm [shape: f32[1,1536], index: 10, kind: input, shape index: {}]
  %s11 = inlined_call_operand.vmem [shape: f32[24,128], index: 11, kind: output, shape index: {0}]
  %s12 = inlined_call_operand.vmem [shape: f32[1,128], index: 12, kind: output, shape index: {1}]
  %s13 = inlined_call_operand.vmem [shape: f32[1,128], index: 13, kind: output, shape index: {2}]
  %14 = xla_tuple %s11, %s12, %s13
  %s15 = sld [smem:[#allocation0]]
  $region98: #{net_forward.1} parent=0
    _
  %s17 = ssub.s32 1, %s15
  %s18 = scalar_select 0, %s17, %s15
  $region1: #{net_forward.1} parent=0
    #allocation2 [shape = 'u8[131072]{0}', space=vmem, size = 0x20000, scoped, tag = 'input window, operand 2, single buffered']
    #allocation3 [shape = 's32[1]{0}', space=sflag, size = 0x4, scoped, tag = 'scoped memory for net_forward.1']
    #allocation4 [shape = 'u8[36864]{0}', space=vmem, size = 0x9000, scoped, tag = 'input window, operand 3, single buffered']
    #allocation5 [shape = 's32[1]{0}', space=sflag, size = 0x4, scoped, tag = 'scoped memory for net_forward.1']
    #allocation6 [shape = 'u8[1536]{0}', space=vmem, size = 0x800, scoped, tag = 'input window, operand 4, single buffered']
    #allocation7 [shape = 'u8[2048]{0}', space=vmem, size = 0x800, scoped, tag = 'input window, operand 6, single buffered']
    #allocation8 [shape = 's32[1]{0}', space=sflag, size = 0x4, scoped, tag = 'scoped memory for net_forward.1']
    #allocation9 [shape = 'u8[2048]{0}', space=vmem, size = 0x800, scoped, tag = 'input window, operand 8, single buffered']
    #allocation10 [shape = 'u8[1572864]{0}', space=vmem, size = 0x180000, scoped, tag = 'input window, operand 9, single buffered']
    #allocation11 [shape = 's32[1]{0}', space=sflag, size = 0x4, scoped, tag = 'scoped memory for net_forward.1']
    #allocation12 [shape = 'u8[6144]{0}', space=vmem, size = 0x1800, scoped, tag = 'input window, operand 10, single buffered']
    %19 = vsyncpa [#allocation3], 0
    %20 = vsyncpa [#allocation5], 0
    %21 = vsyncpa [#allocation8], 0
    %22 = vsyncpa [#allocation11], 0
    // Predicated region
    $region2: #{net_forward.1} parent=1 // pred_check
      _
    $region3: #{net_forward.1} parent=1 // pred_check_branch
      %24 = sbr.rel (0) target = $region5
    $region4: #{net_forward.1} parent=1 // pred_region
      _
    $region5: #{net_forward.1} parent=1 // pred_fallthru
      _
    // Predicated region
    $region6: #{net_forward.1} parent=1 // pred_check
      _
    $region7: #{net_forward.1} parent=1 // pred_check_branch
      %26 = sbr.rel (0) target = $region9
    $region8: #{net_forward.1} parent=1 // pred_region
      _
    $region9: #{net_forward.1} parent=1 // pred_fallthru
      _
    // Predicated region
    $region10: #{net_forward.1} parent=1 // pred_check
      _
    $region11: #{net_forward.1} parent=1 // pred_check_branch
      %28 = sbr.rel (0) target = $region13
    $region12: #{net_forward.1} parent=1 // pred_region
      %s30 = ssub.s32 4096, 4096
      %31 = vsyncadd [#allocation3], %s30
      %s32 = sshll.u32 [#allocation2], 4
      %s33 = int_to_ptr.vmem [resolvable:$true] %s32
      %38 = dma.hbm_to_vmem [thread:$0]  %s2, 4096, %s33, [#allocation3], 256, 256, 16
    $region13: #{net_forward.1} parent=1 // pred_fallthru
      _
    // Predicated region
    $region14: #{net_forward.1} parent=1 // pred_check
      _
    $region15: #{net_forward.1} parent=1 // pred_check_branch
      %40 = sbr.rel (0) target = $region17
    $region16: #{net_forward.1} parent=1 // pred_region
      %s42 = ssub.s32 1152, 1152
      %43 = vsyncadd [#allocation5], %s42
      %s44 = sshll.u32 [#allocation4], 4
      %s45 = int_to_ptr.vmem [resolvable:$true] %s44
      %50 = dma.hbm_to_vmem [thread:$0]  %s3, 1152, %s45, [#allocation5], 192, 192, 12
    $region17: #{net_forward.1} parent=1 // pred_fallthru
      _
    // Predicated region
    $region18: #{net_forward.1} parent=1 // pred_check
      _
    $region19: #{net_forward.1} parent=1 // pred_check_branch
      %52 = sbr.rel (0) target = $region21
    $region20: #{net_forward.1} parent=1 // pred_region
      %s54 = ssub.s32 48, 48
      %55 = vsyncadd [#allocation5], %s54
      %s57 = sshll.u32 [#allocation6], 4
      %s58 = int_to_ptr.vmem [resolvable:$true] %s57
      %60 = dma.hbm_to_vmem [thread:$0]  %s4, 48, %s58, [#allocation5]
    $region21: #{net_forward.1} parent=1 // pred_fallthru
      _
    // Predicated region
    $region22: #{net_forward.1} parent=1 // pred_check
      _
    $region23: #{net_forward.1} parent=1 // pred_check_branch
      %62 = sbr.rel (0) target = $region25
    $region24: #{net_forward.1} parent=1 // pred_region
      _
    $region25: #{net_forward.1} parent=1 // pred_fallthru
      _
    // Predicated region
    $region26: #{net_forward.1} parent=1 // pred_check
      _
    $region27: #{net_forward.1} parent=1 // pred_check_branch
      %64 = sbr.rel (0) target = $region29
    $region28: #{net_forward.1} parent=1 // pred_region
      %s66 = ssub.s32 64, 64
      %67 = vsyncadd [#allocation8], %s66
      %s69 = sshll.u32 [#allocation7], 4
      %s70 = int_to_ptr.vmem [resolvable:$true] %s69
      %72 = dma.hbm_to_vmem [thread:$0]  %s6, 64, %s70, [#allocation8]
    $region29: #{net_forward.1} parent=1 // pred_fallthru
      _
    // Predicated region
    $region30: #{net_forward.1} parent=1 // pred_check
      _
    $region31: #{net_forward.1} parent=1 // pred_check_branch
      %74 = sbr.rel (0) target = $region33
    $region32: #{net_forward.1} parent=1 // pred_region
      _
    $region33: #{net_forward.1} parent=1 // pred_fallthru
      _
    // Predicated region
    $region34: #{net_forward.1} parent=1 // pred_check
      _
    $region35: #{net_forward.1} parent=1 // pred_check_branch
      %76 = sbr.rel (0) target = $region37
    $region36: #{net_forward.1} parent=1 // pred_region
      %s78 = ssub.s32 64, 64
      %79 = vsyncadd [#allocation8], %s78
      %s81 = sshll.u32 [#allocation9], 4
      %s82 = int_to_ptr.vmem [resolvable:$true] %s81
      %84 = dma.hbm_to_vmem [thread:$0]  %s8, 64, %s82, [#allocation8]
    $region37: #{net_forward.1} parent=1 // pred_fallthru
      _
    // Predicated region
    $region38: #{net_forward.1} parent=1 // pred_check
      _
    $region39: #{net_forward.1} parent=1 // pred_check_branch
      %86 = sbr.rel (0) target = $region41
    $region40: #{net_forward.1} parent=1 // pred_region
      %s88 = ssub.s32 49152, 49152
      %89 = vsyncadd [#allocation11], %s88
      %s90 = sshll.u32 [#allocation10], 4
      %s91 = int_to_ptr.vmem [resolvable:$true] %s90
      %96 = dma.hbm_to_vmem [thread:$0]  %s9, 49152, %s91, [#allocation11], 768, 768, 48
    $region41: #{net_forward.1} parent=1 // pred_fallthru
      _
    // Predicated region
    $region42: #{net_forward.1} parent=1 // pred_check
      _
    $region43: #{net_forward.1} parent=1 // pred_check_branch
      %98 = sbr.rel (0) target = $region45
    $region44: #{net_forward.1} parent=1 // pred_region
      %s100 = ssub.s32 192, 192
      %101 = vsyncadd [#allocation11], %s100
      %s103 = sshll.u32 [#allocation12], 4
      %s104 = int_to_ptr.vmem [resolvable:$true] %s103
      %106 = dma.hbm_to_vmem [thread:$0]  %s10, 192, %s104, [#allocation11]
    $region45: #{net_forward.1} parent=1 // pred_fallthru
      _
    // Predicated region
    $region46: #{net_forward.1} parent=1 // pred_check
      _
    $region47: #{net_forward.1} parent=1 // pred_check_branch
      %108 = sbr.rel (0) target = $region49
    $region48: #{net_forward.1} parent=1 // pred_region
      %109 = dma.done [#allocation3], 4096
    $region49: #{net_forward.1} parent=1 // pred_fallthru
      _
    // Predicated region
    $region50: #{net_forward.1} parent=1 // pred_check
      _
    $region51: #{net_forward.1} parent=1 // pred_check_branch
      %111 = sbr.rel (0) target = $region53
    $region52: #{net_forward.1} parent=1 // pred_region
      %112 = dma.done [#allocation5], 1152
    $region53: #{net_forward.1} parent=1 // pred_fallthru
      _
    // Predicated region
    $region54: #{net_forward.1} parent=1 // pred_check
      _
    $region55: #{net_forward.1} parent=1 // pred_check_branch
      %114 = sbr.rel (0) target = $region57
    $region56: #{net_forward.1} parent=1 // pred_region
      %115 = dma.done [#allocation5], 48
    $region57: #{net_forward.1} parent=1 // pred_fallthru
      _
    // Predicated region
    $region58: #{net_forward.1} parent=1 // pred_check
      _
    $region59: #{net_forward.1} parent=1 // pred_check_branch
      %117 = sbr.rel (0) target = $region61
    $region60: #{net_forward.1} parent=1 // pred_region
      %118 = dma.done [#allocation8], 64
    $region61: #{net_forward.1} parent=1 // pred_fallthru
      _
    // Predicated region
    $region62: #{net_forward.1} parent=1 // pred_check
      _
    $region63: #{net_forward.1} parent=1 // pred_check_branch
      %120 = sbr.rel (0) target = $region65
    $region64: #{net_forward.1} parent=1 // pred_region
      %121 = dma.done [#allocation8], 64
    $region65: #{net_forward.1} parent=1 // pred_fallthru
      _
    // Predicated region
    $region66: #{net_forward.1} parent=1 // pred_check
      _
    $region67: #{net_forward.1} parent=1 // pred_check_branch
      %123 = sbr.rel (0) target = $region69
    $region68: #{net_forward.1} parent=1 // pred_region
      %124 = dma.done [#allocation11], 49152
    $region69: #{net_forward.1} parent=1 // pred_fallthru
      _
    // Predicated region
    $region70: #{net_forward.1} parent=1 // pred_check
      _
    $region71: #{net_forward.1} parent=1 // pred_check_branch
      %126 = sbr.rel (0) target = $region73
    $region72: #{net_forward.1} parent=1 // pred_region
      %127 = dma.done [#allocation11], 192
    $region73: #{net_forward.1} parent=1 // pred_fallthru
      _
    %v129 = vld [vmem:[%s0] sm:$0xf]
    %v130 = vld [vmem:[%s0 + $0x4] sm:$0xf]
    %v131 = vld [vmem:[%s0 + $0x8] sm:$0xf]
    %v132 = vld [vmem:[%s0 + $0xc] sm:$0xf]
    %v133 = vld [vmem:[%s0 + $0x10] sm:$0xf]
    %v134 = vld [vmem:[%s0 + $0x14] sm:$0xf]
    %v135 = vld [vmem:[%s0 + $0x18] sm:$0xf]
    %v136 = vld [vmem:[%s0 + $0x1c] sm:$0xf]
    %v137 = vld [vmem:[%s0 + $0x20] sm:$0xf]
    %v138 = vld [vmem:[%s0 + $0x24] sm:$0xf]
    %v139 = vld [vmem:[%s0 + $0x28] sm:$0xf]
    %v140 = vld [vmem:[%s0 + $0x2c] sm:$0xf]
    %v141 = vld [vmem:[%s0 + $0x30] sm:$0xf]
    %v142 = vld [vmem:[%s0 + $0x34] sm:$0xf]
    %v143 = vld [vmem:[%s0 + $0x38] sm:$0xf]
    %v144 = vld [vmem:[%s0 + $0x3c] sm:$0xf]
    %v145 = vld [vmem:[#allocation4] sm:$0xff]
    %v146 = vld [vmem:[#allocation4 + $0x8] sm:$0xf]
    %v147 = vld [vmem:[#allocation4 + $0xc] sm:$0xff]
    %v148 = vld [vmem:[#allocation4 + $0x14] sm:$0xf]
    %v149 = vld [vmem:[#allocation4 + $0x18] sm:$0xff]
    %v150 = vld [vmem:[#allocation4 + $0x20] sm:$0xf]
    %v151 = vld [vmem:[#allocation4 + $0x24] sm:$0xff]
    %v152 = vld [vmem:[#allocation4 + $0x2c] sm:$0xf]
    %v153 = vld [vmem:[#allocation4 + $0x30] sm:$0xff]
    %v154 = vld [vmem:[#allocation4 + $0x38] sm:$0xf]
    %v155 = vld [vmem:[#allocation4 + $0x3c] sm:$0xff]
    %v156 = vld [vmem:[#allocation4 + $0x44] sm:$0xf]
    %v157 = vld [vmem:[#allocation6] sm:$0x7]
    %v159 = vlaneseq
    %v160 = vshrl.u32 %v159, 7
    %v161 = vsub.s32 0, %v160
    %v162 = vrot.slane %v157, %v161
    %v163 = vlaneseq
    %v164 = vshrl.u32 %v163, 7
    %v165 = vsub.s32 1, %v164
    %v166 = vrot.slane %v157, %v165
    %v167 = vlaneseq
    %v168 = vshrl.u32 %v167, 7
    %v169 = vsub.s32 2, %v168
    %v170 = vrot.slane %v157, %v169
    %v190 = vunpack.c.l.b16 %v129
    %v191 = vunpack.c.l.b16 %v130
    %v192 = vunpack.c.l.b16 %v131
    %v193 = vunpack.c.l.b16 %v132
    %v194 = vunpack.c.l.b16 %v133
    %v195 = vunpack.c.l.b16 %v134
    %v196 = vunpack.c.l.b16 %v135
    %v197 = vunpack.c.l.b16 %v136
    %v198 = vunpack.c.l.b16 %v137
    %v199 = vunpack.c.l.b16 %v138
    %v200 = vunpack.c.l.b16 %v139
    %v201 = vunpack.c.l.b16 %v140
    %v202 = vunpack.c.l.b16 %v141
    %v203 = vunpack.c.l.b16 %v142
    %v204 = vunpack.c.l.b16 %v143
    %v205 = vunpack.c.l.b16 %v144
    %v206 = vpack.c.b16 %v191, %v190
    %v207 = vpack.c.b16 %v193, %v192
    %v208 = vpack.c.b16 %v195, %v194
    %v209 = vpack.c.b16 %v197, %v196
    %v210 = vpack.c.b16 %v199, %v198
    %v211 = vpack.c.b16 %v201, %v200
    %v212 = vpack.c.b16 %v203, %v202
    %v213 = vpack.c.b16 %v205, %v204
    %v226 = vunpack.c.l.b16 %v145
    %v227 = vunpack.c.h.b16 %v145
    %v228 = vunpack.c.l.b16 %v146
    %v229 = vunpack.c.l.b16 %v147
    %v230 = vunpack.c.h.b16 %v147
    %v231 = vunpack.c.l.b16 %v148
    %v232 = vunpack.c.l.b16 %v149
    %v233 = vunpack.c.h.b16 %v149
    %v234 = vunpack.c.l.b16 %v150
    %v235 = vunpack.c.l.b16 %v151
    %v236 = vunpack.c.h.b16 %v151
    %v237 = vunpack.c.l.b16 %v152
    %v238 = vunpack.c.l.b16 %v153
    %v239 = vunpack.c.h.b16 %v153
    %v240 = vunpack.c.l.b16 %v154
    %v241 = vunpack.c.l.b16 %v155
    %v242 = vunpack.c.h.b16 %v155
    %v243 = vunpack.c.l.b16 %v156
    %v244 = vpack.c.b16 %v229, %v226
    %v245 = vpack.c.b16 %v230, %v227
    %v246 = vpack.c.b16 %v231, %v228
    %v247 = vpack.c.b16 %v235, %v232
    %v248 = vpack.c.b16 %v236, %v233
    %v249 = vpack.c.b16 %v237, %v234
    %v250 = vpack.c.b16 %v241, %v238
    %v251 = vpack.c.b16 %v242, %v239
    %v252 = vpack.c.b16 %v243, %v240
    %vm262 = vcmask 392192
    %v264 = vsel %vm262, %v206, 0
    %v267 = vsel %vm262, %v207, 0
    %v270 = vsel %vm262, %v208, 0
    %v273 = vsel %vm262, %v209, 0
    %v276 = vsel %vm262, %v210, 0
    %v279 = vsel %vm262, %v211, 0
    %v282 = vsel %vm262, %v212, 0
    %v285 = vsel %vm262, %v213, 0
    %287 = vmatprep.subr.bf16.mxu0 0
    %288 = vmatpush1.bf16.msra.mxu0 0
    %289 = vmatprep.subr.bf16.mxu0 0
    %290 = vmatpush1.bf16.msra.mxu0 0
    %291 = vmatprep.subr.bf16.mxu0 0
    %292 = vmatpush1.bf16.msra.mxu0 0
    %293 = vmatprep.subr.bf16.mxu0 0
    %294 = vmatpush1.bf16.msra.mxu0 0
    %295 = vmatprep.subr.bf16.mxu0 0
    %296 = vmatpush1.bf16.msra.mxu0 0
    %297 = vmatprep.subr.bf16.mxu0 %v251
    %298 = vmatpush1.bf16.msra.mxu0 %v250
    %299 = vmatprep.subr.bf16.mxu0 %v248
    %300 = vmatpush1.bf16.msra.mxu0 %v247
    %301 = vmatprep.subr.bf16.mxu0 %v245
    %302 = vmatpush1.bf16.msra.mxu0 %v244
    %303 = vmatprep.subr.bf16.mxu0 0
    %304 = vmatpush2.bf16.msra.mxu0 0
    %305 = vmatprep.subr.bf16.mxu0 0
    %306 = vmatpush2.bf16.msra.mxu0 0
    %307 = vmatprep.subr.bf16.mxu0 0
    %308 = vmatpush2.bf16.msra.mxu0 0
    %309 = vmatprep.subr.bf16.mxu0 0
    %310 = vmatpush2.bf16.msra.mxu0 0
    %311 = vmatprep.subr.bf16.mxu0 0
    %312 = vmatpush2.bf16.msra.mxu0 0
    %313 = vmatprep.subr.bf16.mxu0 0
    %314 = vmatpush2.bf16.msra.mxu0 0
    %315 = vmatprep.subr.bf16.mxu0 0
    %316 = vmatpush2.bf16.msra.mxu0 0
    %317 = vmatprep.subr.bf16.mxu0 0
    %318 = vmatpush2.bf16.msra.mxu0 0
    %319 = vmatprep.mubr.bf16.mxu0 0
    %320 = vmatmul.mubr.bf16.gmra.mxu0 %v264
    %v321 = vpop.f32.mrf.mxu0
    %v322 = vadd.f32 %v162, %v321
    %v323 = vpop.f32.mrf.mxu0
    %v324 = vadd.f32 %v166, %v323
    %v325 = vpop.f32.mrf.mxu0
    %v326 = vadd.f32 %v162, %v325
    %v327 = vpop.f32.mrf.mxu0
    %v328 = vadd.f32 %v166, %v327
    %329 = vmatprep.mubr.bf16.mxu0 0
    %330 = vmatmul.mubr.bf16.gmra.mxu0 %v267
    %v331 = vpop.f32.mrf.mxu0
    %v332 = vadd.f32 %v162, %v331
    %v333 = vpop.f32.mrf.mxu0
    %v334 = vadd.f32 %v166, %v333
    %v335 = vpop.f32.mrf.mxu0
    %v336 = vadd.f32 %v162, %v335
    %v337 = vpop.f32.mrf.mxu0
    %v338 = vadd.f32 %v166, %v337
    %339 = vmatprep.mubr.bf16.mxu0 0
    %340 = vmatmul.mubr.bf16.gmra.mxu0 %v270
    %v341 = vpop.f32.mrf.mxu0
    %v342 = vadd.f32 %v162, %v341
    %v343 = vpop.f32.mrf.mxu0
    %v344 = vadd.f32 %v166, %v343
    %v345 = vpop.f32.mrf.mxu0
    %v346 = vadd.f32 %v162, %v345
    %v347 = vpop.f32.mrf.mxu0
    %v348 = vadd.f32 %v166, %v347
    %349 = vmatprep.mubr.bf16.mxu0 0
    %350 = vmatmul.mubr.bf16.gmra.mxu0 %v273
    %v351 = vpop.f32.mrf.mxu0
    %v352 = vadd.f32 %v162, %v351
    %v353 = vpop.f32.mrf.mxu0
    %v354 = vadd.f32 %v166, %v353
    %v355 = vpop.f32.mrf.mxu0
    %v356 = vadd.f32 %v162, %v355
    %v357 = vpop.f32.mrf.mxu0
    %v358 = vadd.f32 %v166, %v357
    %359 = vmatprep.mubr.bf16.mxu0 0
    %360 = vmatmul.mubr.bf16.gmra.mxu0 %v276
    %v361 = vpop.f32.mrf.mxu0
    %v362 = vadd.f32 %v162, %v361
    %v363 = vpop.f32.mrf.mxu0
    %v364 = vadd.f32 %v166, %v363
    %v365 = vpop.f32.mrf.mxu0
    %v366 = vadd.f32 %v162, %v365
    %v367 = vpop.f32.mrf.mxu0
    %v368 = vadd.f32 %v166, %v367
    %369 = vmatprep.mubr.bf16.mxu0 0
    %370 = vmatmul.mubr.bf16.gmra.mxu0 %v279
    %v371 = vpop.f32.mrf.mxu0
    %v372 = vadd.f32 %v162, %v371
    %v373 = vpop.f32.mrf.mxu0
    %v374 = vadd.f32 %v166, %v373
    %v375 = vpop.f32.mrf.mxu0
    %v376 = vadd.f32 %v162, %v375
    %v377 = vpop.f32.mrf.mxu0
    %v378 = vadd.f32 %v166, %v377
    %379 = vmatprep.mubr.bf16.mxu0 0
    %380 = vmatmul.mubr.bf16.gmra.mxu0 %v282
    %v381 = vpop.f32.mrf.mxu0
    %v382 = vadd.f32 %v162, %v381
    %v383 = vpop.f32.mrf.mxu0
    %v384 = vadd.f32 %v166, %v383
    %v385 = vpop.f32.mrf.mxu0
    %v386 = vadd.f32 %v162, %v385
    %v387 = vpop.f32.mrf.mxu0
    %v388 = vadd.f32 %v166, %v387
    %389 = vmatprep.mubr.bf16.mxu0 0
    %390 = vmatmul.mubr.bf16.gmra.mxu0 %v285
    %v391 = vpop.f32.mrf.mxu0
    %v392 = vadd.f32 %v162, %v391
    %v393 = vpop.f32.mrf.mxu0
    %v394 = vadd.f32 %v166, %v393
    %v395 = vpop.f32.mrf.mxu0
    %v396 = vadd.f32 %v162, %v395
    %v397 = vpop.f32.mrf.mxu0
    %v398 = vadd.f32 %v166, %v397
    %399 = vdwg.mxu0
    %400 = vmatprep.subr.bf16.mxu0 0
    %401 = vmatpush1.bf16.msra.mxu0 0
    %402 = vmatprep.subr.bf16.mxu0 0
    %403 = vmatpush1.bf16.msra.mxu0 0
    %404 = vmatprep.subr.bf16.mxu0 0
    %405 = vmatpush1.bf16.msra.mxu0 0
    %406 = vmatprep.subr.bf16.mxu0 0
    %407 = vmatpush1.bf16.msra.mxu0 0
    %408 = vmatprep.subr.bf16.mxu0 0
    %409 = vmatpush1.bf16.msra.mxu0 0
    %410 = vmatprep.subr.bf16.mxu0 0
    %411 = vmatpush1.bf16.msra.mxu0 %v252
    %412 = vmatprep.subr.bf16.mxu0 0
    %413 = vmatpush1.bf16.msra.mxu0 %v249
    %414 = vmatprep.subr.bf16.mxu0 0
    %415 = vmatpush1.bf16.msra.mxu0 %v246
    %416 = vmatprep.subr.bf16.mxu0 0
    %417 = vmatpush2.bf16.msra.mxu0 0
    %418 = vmatprep.subr.bf16.mxu0 0
    %419 = vmatpush2.bf16.msra.mxu0 0
    %420 = vmatprep.subr.bf16.mxu0 0
    %421 = vmatpush2.bf16.msra.mxu0 0
    %422 = vmatprep.subr.bf16.mxu0 0
    %423 = vmatpush2.bf16.msra.mxu0 0
    %424 = vmatprep.subr.bf16.mxu0 0
    %425 = vmatpush2.bf16.msra.mxu0 0
    %426 = vmatprep.subr.bf16.mxu0 0
    %427 = vmatpush2.bf16.msra.mxu0 0
    %428 = vmatprep.subr.bf16.mxu0 0
    %429 = vmatpush2.bf16.msra.mxu0 0
    %430 = vmatprep.subr.bf16.mxu0 0
    %431 = vmatpush2.bf16.msra.mxu0 0
    %432 = vmatprep.mubr.bf16.mxu0 0
    %433 = vmatmul.mubr.bf16.gmra.mxu0 %v264
    %v434 = vpop.f32.mrf.mxu0
    %v435 = vadd.f32 %v170, %v434
    %v436 = vpop.f32.mrf.mxu0
    %v437 = vpop.f32.mrf.mxu0
    %v438 = vadd.f32 %v170, %v437
    %v439 = vpop.f32.mrf.mxu0
    %440 = vmatprep.mubr.bf16.mxu0 0
    %441 = vmatmul.mubr.bf16.gmra.mxu0 %v267
    %v442 = vpop.f32.mrf.mxu0
    %v443 = vadd.f32 %v170, %v442
    %v444 = vpop.f32.mrf.mxu0
    %v445 = vpop.f32.mrf.mxu0
    %v446 = vadd.f32 %v170, %v445
    %v447 = vpop.f32.mrf.mxu0
    %448 = vmatprep.mubr.bf16.mxu0 0
    %449 = vmatmul.mubr.bf16.gmra.mxu0 %v270
    %v450 = vpop.f32.mrf.mxu0
    %v451 = vadd.f32 %v170, %v450
    %v452 = vpop.f32.mrf.mxu0
    %v453 = vpop.f32.mrf.mxu0
    %v454 = vadd.f32 %v170, %v453
    %v455 = vpop.f32.mrf.mxu0
    %456 = vmatprep.mubr.bf16.mxu0 0
    %457 = vmatmul.mubr.bf16.gmra.mxu0 %v273
    %v458 = vpop.f32.mrf.mxu0
    %v459 = vadd.f32 %v170, %v458
    %v460 = vpop.f32.mrf.mxu0
    %v461 = vpop.f32.mrf.mxu0
    %v462 = vadd.f32 %v170, %v461
    %v463 = vpop.f32.mrf.mxu0
    %464 = vmatprep.mubr.bf16.mxu0 0
    %465 = vmatmul.mubr.bf16.gmra.mxu0 %v276
    %v466 = vpop.f32.mrf.mxu0
    %v467 = vadd.f32 %v170, %v466
    %v468 = vpop.f32.mrf.mxu0
    %v469 = vpop.f32.mrf.mxu0
    %v470 = vadd.f32 %v170, %v469
    %v471 = vpop.f32.mrf.mxu0
    %472 = vmatprep.mubr.bf16.mxu0 0
    %473 = vmatmul.mubr.bf16.gmra.mxu0 %v279
    %v474 = vpop.f32.mrf.mxu0
    %v475 = vadd.f32 %v170, %v474
    %v476 = vpop.f32.mrf.mxu0
    %v477 = vpop.f32.mrf.mxu0
    %v478 = vadd.f32 %v170, %v477
    %v479 = vpop.f32.mrf.mxu0
    %480 = vmatprep.mubr.bf16.mxu0 0
    %481 = vmatmul.mubr.bf16.gmra.mxu0 %v282
    %v482 = vpop.f32.mrf.mxu0
    %v483 = vadd.f32 %v170, %v482
    %v484 = vpop.f32.mrf.mxu0
    %v485 = vpop.f32.mrf.mxu0
    %v486 = vadd.f32 %v170, %v485
    %v487 = vpop.f32.mrf.mxu0
    %488 = vmatprep.mubr.bf16.mxu0 0
    %489 = vmatmul.mubr.bf16.gmra.mxu0 %v285
    %v490 = vpop.f32.mrf.mxu0
    %v491 = vadd.f32 %v170, %v490
    %v492 = vpop.f32.mrf.mxu0
    %v493 = vpop.f32.mrf.mxu0
    %v494 = vadd.f32 %v170, %v493
    %v495 = vpop.f32.mrf.mxu0
    %496 = vdwg.mxu0
    %v497 = vxor.u32 %v435, 2147483648
    %v498 = vxor.u32 %v438, 2147483648
    %v499 = vxor.u32 %v443, 2147483648
    %v500 = vxor.u32 %v446, 2147483648
    %v501 = vxor.u32 %v451, 2147483648
    %v502 = vxor.u32 %v454, 2147483648
    %v503 = vxor.u32 %v459, 2147483648
    %v504 = vxor.u32 %v462, 2147483648
    %v505 = vxor.u32 %v467, 2147483648
    %v506 = vxor.u32 %v470, 2147483648
    %v507 = vxor.u32 %v475, 2147483648
    %v508 = vxor.u32 %v478, 2147483648
    %v509 = vxor.u32 %v483, 2147483648
    %v510 = vxor.u32 %v486, 2147483648
    %v511 = vxor.u32 %v491, 2147483648
    %v512 = vxor.u32 %v494, 2147483648
    %v513 = vmul.f32 %v497, 1.442695
    %v514 = vpow.pop %v513
    %v515 = vmul.f32 %v498, 1.442695
    %v516 = vpow.pop %v515
    %v517 = vmul.f32 %v499, 1.442695
    %v518 = vpow.pop %v517
    %v519 = vmul.f32 %v500, 1.442695
    %v520 = vpow.pop %v519
    %v521 = vmul.f32 %v501, 1.442695
    %v522 = vpow.pop %v521
    %v523 = vmul.f32 %v502, 1.442695
    %v524 = vpow.pop %v523
    %v525 = vmul.f32 %v503, 1.442695
    %v526 = vpow.pop %v525
    %v527 = vmul.f32 %v504, 1.442695
    %v528 = vpow.pop %v527
    %v529 = vmul.f32 %v505, 1.442695
    %v530 = vpow.pop %v529
    %v531 = vmul.f32 %v506, 1.442695
    %v532 = vpow.pop %v531
    %v533 = vmul.f32 %v507, 1.442695
    %v534 = vpow.pop %v533
    %v535 = vmul.f32 %v508, 1.442695
    %v536 = vpow.pop %v535
    %v537 = vmul.f32 %v509, 1.442695
    %v538 = vpow.pop %v537
    %v539 = vmul.f32 %v510, 1.442695
    %v540 = vpow.pop %v539
    %v541 = vmul.f32 %v511, 1.442695
    %v542 = vpow.pop %v541
    %v543 = vmul.f32 %v512, 1.442695
    %v544 = vpow.pop %v543
    %v545 = vadd.f32 %v514, 1.0
    %v546 = vadd.f32 %v516, 1.0
    %v547 = vadd.f32 %v518, 1.0
    %v548 = vadd.f32 %v520, 1.0
    %v549 = vadd.f32 %v522, 1.0
    %v550 = vadd.f32 %v524, 1.0
    %v551 = vadd.f32 %v526, 1.0
    %v552 = vadd.f32 %v528, 1.0
    %v553 = vadd.f32 %v530, 1.0
    %v554 = vadd.f32 %v532, 1.0
    %v555 = vadd.f32 %v534, 1.0
    %v556 = vadd.f32 %v536, 1.0
    %v557 = vadd.f32 %v538, 1.0
    %v558 = vadd.f32 %v540, 1.0
    %v559 = vadd.f32 %v542, 1.0
    %v560 = vadd.f32 %v544, 1.0
    %v561 = vrcp.pop %v545
    %v562 = vmul.f32 1.0, %v561
    %v563 = vrcp.pop %v546
    %v564 = vmul.f32 1.0, %v563
    %v565 = vrcp.pop %v547
    %v566 = vmul.f32 1.0, %v565
    %v567 = vrcp.pop %v548
    %v568 = vmul.f32 1.0, %v567
    %v569 = vrcp.pop %v549
    %v570 = vmul.f32 1.0, %v569
    %v571 = vrcp.pop %v550
    %v572 = vmul.f32 1.0, %v571
    %v573 = vrcp.pop %v551
    %v574 = vmul.f32 1.0, %v573
    %v575 = vrcp.pop %v552
    %v576 = vmul.f32 1.0, %v575
    %v577 = vrcp.pop %v553
    %v578 = vmul.f32 1.0, %v577
    %v579 = vrcp.pop %v554
    %v580 = vmul.f32 1.0, %v579
    %v581 = vrcp.pop %v555
    %v582 = vmul.f32 1.0, %v581
    %v583 = vrcp.pop %v556
    %v584 = vmul.f32 1.0, %v583
    %v585 = vrcp.pop %v557
    %v586 = vmul.f32 1.0, %v585
    %v587 = vrcp.pop %v558
    %v588 = vmul.f32 1.0, %v587
    %v589 = vrcp.pop %v559
    %v590 = vmul.f32 1.0, %v589
    %v591 = vrcp.pop %v560
    %v592 = vmul.f32 1.0, %v591
    %593 = vxpose.xlu0.b32.start [1/16] %v562, 128
    %594 = vxpose.xlu0.b32.cont [2/16] %v564, 128
    %595 = vxpose.xlu0.b32.cont [3/16] %v566, 128
    %596 = vxpose.xlu0.b32.cont [4/16] %v568, 128
    %597 = vxpose.xlu0.b32.cont [5/16] %v570, 128
    %598 = vxpose.xlu0.b32.cont [6/16] %v572, 128
    %599 = vxpose.xlu0.b32.cont [7/16] %v574, 128
    %600 = vxpose.xlu0.b32.cont [8/16] %v576, 128
    %601 = vxpose.xlu0.b32.cont [9/16] %v578, 128
    %602 = vxpose.xlu0.b32.cont [10/16] %v580, 128
    %603 = vxpose.xlu0.b32.cont [11/16] %v582, 128
    %604 = vxpose.xlu0.b32.cont [12/16] %v584, 128
    %605 = vxpose.xlu0.b32.cont [13/16] %v586, 128
    %606 = vxpose.xlu0.b32.cont [14/16] %v588, 128
    %607 = vxpose.xlu0.b32.cont [15/16] %v590, 128
    %608 = vxpose.xlu0.b32.end [16/16] %v592, 128
    %v609 = vpop.trf.xlu0
    %v610 = vpop.trf.xlu0
    %v611 = vpop.trf.xlu0
    %v612 = vpop.trf.xlu0
    %v613 = vpop.trf.xlu0
    %v614 = vpop.trf.xlu0
    %v615 = vpop.trf.xlu0
    %v616 = vpop.trf.xlu0
    %v617 = vpop.trf.xlu0
    %v618 = vpop.trf.xlu0
    %v619 = vpop.trf.xlu0
    %v620 = vpop.trf.xlu0
    %v621 = vpop.trf.xlu0
    %v622 = vpop.trf.xlu0
    %v623 = vpop.trf.xlu0
    %v624 = vpop.trf.xlu0
    %625 = vst [vmem:[%s11] sm:$0xff] %v609
    %626 = vst [vmem:[%s11 + $0x8] sm:$0xff] %v610
    %627 = vst [vmem:[%s11 + $0x10] sm:$0xff] %v611
    %v628 = vadd.f32 %v609, %v610
    %v629 = vadd.f32 %v628, %v611
    %v630 = vmul.f32 %v629, 0.33333334
    %631 = vst [vmem:[%s12 - $0x4] sm:$0x10] %v630
    %v632 = vld [vmem:[%s1] sm:$0xff]
    %v633 = vld [vmem:[%s1 + $0x8] sm:$0xff]
    %v634 = vlaneseq
    %v635 = vand.u32 %v634, 127
    %636 = vset.pattern.permute.xlu0 0
    %637 = vperm.xlu0 %636, %v632
    %v638 = vpop.permute.xlu0 %637
    %639 = vset.pattern.permute.xlu0 0
    %640 = vperm.xlu0 %639, %v633
    %v641 = vpop.permute.xlu0 %640
    %vm642 = vcmp.eq.s32.totalorder %v635, %v638
    %vm643 = vcmp.eq.s32.totalorder %v635, %v641
    %v644 = vsel %vm642, 1.0, 0.0
    %v645 = vsel %vm643, 1.0, 0.0
    %v646 = vpack.c.bf16 %v645, %v644
    %v647 = vld [vmem:[#allocation2] sm:$0xff]
    %v648 = vld [vmem:[#allocation2 + $0x8] sm:$0xff]
    %v649 = vld [vmem:[#allocation2 + $0x10] sm:$0xff]
    %v650 = vld [vmem:[#allocation2 + $0x18] sm:$0xff]
    %v651 = vld [vmem:[#allocation2 + $0x20] sm:$0xff]
    %v652 = vld [vmem:[#allocation2 + $0x28] sm:$0xff]
    %v653 = vld [vmem:[#allocation2 + $0x30] sm:$0xff]
    %v654 = vld [vmem:[#allocation2 + $0x38] sm:$0xff]
    %v655 = vld [vmem:[#allocation2 + $0x40] sm:$0xff]
    %v656 = vld [vmem:[#allocation2 + $0x48] sm:$0xff]
    %v657 = vld [vmem:[#allocation2 + $0x50] sm:$0xff]
    %v658 = vld [vmem:[#allocation2 + $0x58] sm:$0xff]
    %v659 = vld [vmem:[#allocation2 + $0x60] sm:$0xff]
    %v660 = vld [vmem:[#allocation2 + $0x68] sm:$0xff]
    %v661 = vld [vmem:[#allocation2 + $0x70] sm:$0xff]
    %v662 = vld [vmem:[#allocation2 + $0x78] sm:$0xff]
    %v663 = vld [vmem:[#allocation2 + $0x80] sm:$0xff]
    %v664 = vld [vmem:[#allocation2 + $0x88] sm:$0xff]
    %v665 = vld [vmem:[#allocation2 + $0x90] sm:$0xff]
    %v666 = vld [vmem:[#allocation2 + $0x98] sm:$0xff]
    %v667 = vld [vmem:[#allocation2 + $0xa0] sm:$0xff]
    %v668 = vld [vmem:[#allocation2 + $0xa8] sm:$0xff]
    %v669 = vld [vmem:[#allocation2 + $0xb0] sm:$0xff]
    %v670 = vld [vmem:[#allocation2 + $0xb8] sm:$0xff]
    %v671 = vld [vmem:[#allocation2 + $0xc0] sm:$0xff]
    %v672 = vld [vmem:[#allocation2 + $0xc8] sm:$0xff]
    %v673 = vld [vmem:[#allocation2 + $0xd0] sm:$0xff]
    %v674 = vld [vmem:[#allocation2 + $0xd8] sm:$0xff]
    %v675 = vld [vmem:[#allocation2 + $0xe0] sm:$0xff]
    %v676 = vld [vmem:[#allocation2 + $0xe8] sm:$0xff]
    %v677 = vld [vmem:[#allocation2 + $0xf0] sm:$0xff]
    %v678 = vld [vmem:[#allocation2 + $0xf8] sm:$0xff]
    %v711 = vunpack.c.l.b16 %v647
    %v712 = vunpack.c.h.b16 %v647
    %v713 = vunpack.c.l.b16 %v648
    %v714 = vunpack.c.h.b16 %v648
    %v715 = vunpack.c.l.b16 %v649
    %v716 = vunpack.c.h.b16 %v649
    %v717 = vunpack.c.l.b16 %v650
    %v718 = vunpack.c.h.b16 %v650
    %v719 = vunpack.c.l.b16 %v651
    %v720 = vunpack.c.h.b16 %v651
    %v721 = vunpack.c.l.b16 %v652
    %v722 = vunpack.c.h.b16 %v652
    %v723 = vunpack.c.l.b16 %v653
    %v724 = vunpack.c.h.b16 %v653
    %v725 = vunpack.c.l.b16 %v654
    %v726 = vunpack.c.h.b16 %v654
    %v727 = vunpack.c.l.b16 %v655
    %v728 = vunpack.c.h.b16 %v655
    %v729 = vunpack.c.l.b16 %v656
    %v730 = vunpack.c.h.b16 %v656
    %v731 = vunpack.c.l.b16 %v657
    %v732 = vunpack.c.h.b16 %v657
    %v733 = vunpack.c.l.b16 %v658
    %v734 = vunpack.c.h.b16 %v658
    %v735 = vunpack.c.l.b16 %v659
    %v736 = vunpack.c.h.b16 %v659
    %v737 = vunpack.c.l.b16 %v660
    %v738 = vunpack.c.h.b16 %v660
    %v739 = vunpack.c.l.b16 %v661
    %v740 = vunpack.c.h.b16 %v661
    %v741 = vunpack.c.l.b16 %v662
    %v742 = vunpack.c.h.b16 %v662
    %v743 = vunpack.c.l.b16 %v663
    %v744 = vunpack.c.h.b16 %v663
    %v745 = vunpack.c.l.b16 %v664
    %v746 = vunpack.c.h.b16 %v664
    %v747 = vunpack.c.l.b16 %v665
    %v748 = vunpack.c.h.b16 %v665
    %v749 = vunpack.c.l.b16 %v666
    %v750 = vunpack.c.h.b16 %v666
    %v751 = vunpack.c.l.b16 %v667
    %v752 = vunpack.c.h.b16 %v667
    %v753 = vunpack.c.l.b16 %v668
    %v754 = vunpack.c.h.b16 %v668
    %v755 = vunpack.c.l.b16 %v669
    %v756 = vunpack.c.h.b16 %v669
    %v757 = vunpack.c.l.b16 %v670
    %v758 = vunpack.c.h.b16 %v670
    %v759 = vunpack.c.l.b16 %v671
    %v760 = vunpack.c.h.b16 %v671
    %v761 = vunpack.c.l.b16 %v672
    %v762 = vunpack.c.h.b16 %v672
    %v763 = vunpack.c.l.b16 %v673
    %v764 = vunpack.c.h.b16 %v673
    %v765 = vunpack.c.l.b16 %v674
    %v766 = vunpack.c.h.b16 %v674
    %v767 = vunpack.c.l.b16 %v675
    %v768 = vunpack.c.h.b16 %v675
    %v769 = vunpack.c.l.b16 %v676
    %v770 = vunpack.c.h.b16 %v676
    %v771 = vunpack.c.l.b16 %v677
    %v772 = vunpack.c.h.b16 %v677
    %v773 = vunpack.c.l.b16 %v678
    %v774 = vunpack.c.h.b16 %v678
    %v775 = vpack.c.b16 %v715, %v711
    %v776 = vpack.c.b16 %v716, %v712
    %v777 = vpack.c.b16 %v717, %v713
    %v778 = vpack.c.b16 %v718, %v714
    %v779 = vpack.c.b16 %v723, %v719
    %v780 = vpack.c.b16 %v724, %v720
    %v781 = vpack.c.b16 %v725, %v721
    %v782 = vpack.c.b16 %v726, %v722
    %v783 = vpack.c.b16 %v731, %v727
    %v784 = vpack.c.b16 %v732, %v728
    %v785 = vpack.c.b16 %v733, %v729
    %v786 = vpack.c.b16 %v734, %v730
    %v787 = vpack.c.b16 %v739, %v735
    %v788 = vpack.c.b16 %v740, %v736
    %v789 = vpack.c.b16 %v741, %v737
    %v790 = vpack.c.b16 %v742, %v738
    %v791 = vpack.c.b16 %v747, %v743
    %v792 = vpack.c.b16 %v748, %v744
    %v793 = vpack.c.b16 %v749, %v745
    %v794 = vpack.c.b16 %v750, %v746
    %v795 = vpack.c.b16 %v755, %v751
    %v796 = vpack.c.b16 %v756, %v752
    %v797 = vpack.c.b16 %v757, %v753
    %v798 = vpack.c.b16 %v758, %v754
    %v799 = vpack.c.b16 %v763, %v759
    %v800 = vpack.c.b16 %v764, %v760
    %v801 = vpack.c.b16 %v765, %v761
    %v802 = vpack.c.b16 %v766, %v762
    %v803 = vpack.c.b16 %v771, %v767
    %v804 = vpack.c.b16 %v772, %v768
    %v805 = vpack.c.b16 %v773, %v769
    %v806 = vpack.c.b16 %v774, %v770
    %839 = vmatprep.subr.bf16.mxu0 %v804
    %840 = vmatpush1.bf16.msra.mxu0 %v803
    %841 = vmatprep.subr.bf16.mxu0 %v800
    %842 = vmatpush1.bf16.msra.mxu0 %v799
    %843 = vmatprep.subr.bf16.mxu0 %v796
    %844 = vmatpush1.bf16.msra.mxu0 %v795
    %845 = vmatprep.subr.bf16.mxu0 %v792
    %846 = vmatpush1.bf16.msra.mxu0 %v791
    %847 = vmatprep.subr.bf16.mxu0 %v788
    %848 = vmatpush1.bf16.msra.mxu0 %v787
    %849 = vmatprep.subr.bf16.mxu0 %v784
    %850 = vmatpush1.bf16.msra.mxu0 %v783
    %851 = vmatprep.subr.bf16.mxu0 %v780
    %852 = vmatpush1.bf16.msra.mxu0 %v779
    %853 = vmatprep.subr.bf16.mxu0 %v776
    %854 = vmatpush1.bf16.msra.mxu0 %v775
    %855 = vmatprep.subr.bf16.mxu0 0
    %856 = vmatpush2.bf16.msra.mxu0 0
    %857 = vmatprep.subr.bf16.mxu0 0
    %858 = vmatpush2.bf16.msra.mxu0 0
    %859 = vmatprep.subr.bf16.mxu0 0
    %860 = vmatpush2.bf16.msra.mxu0 0
    %861 = vmatprep.subr.bf16.mxu0 0
    %862 = vmatpush2.bf16.msra.mxu0 0
    %863 = vmatprep.subr.bf16.mxu0 0
    %864 = vmatpush2.bf16.msra.mxu0 0
    %865 = vmatprep.subr.bf16.mxu0 0
    %866 = vmatpush2.bf16.msra.mxu0 0
    %867 = vmatprep.subr.bf16.mxu0 0
    %868 = vmatpush2.bf16.msra.mxu0 0
    %869 = vmatprep.subr.bf16.mxu0 0
    %870 = vmatpush2.bf16.msra.mxu0 0
    %871 = vmatprep.mubr.bf16.mxu0 0
    %872 = vmatmul.mubr.bf16.gmra.mxu0 %v646
    %v873 = vpop.f32.mrf.mxu0
    %v874 = vadd.f32 0.0, %v873
    %v875 = vpop.f32.mrf.mxu0
    %v876 = vadd.f32 0.0, %v875
    %v877 = vpop.f32.mrf.mxu0
    %v878 = vadd.f32 0.0, %v877
    %v879 = vpop.f32.mrf.mxu0
    %v880 = vadd.f32 0.0, %v879
    %881 = vdwg.mxu0
    %882 = vmatprep.subr.bf16.mxu0 %v806
    %883 = vmatpush1.bf16.msra.mxu0 %v805
    %884 = vmatprep.subr.bf16.mxu0 %v802
    %885 = vmatpush1.bf16.msra.mxu0 %v801
    %886 = vmatprep.subr.bf16.mxu0 %v798
    %887 = vmatpush1.bf16.msra.mxu0 %v797
    %888 = vmatprep.subr.bf16.mxu0 %v794
    %889 = vmatpush1.bf16.msra.mxu0 %v793
    %890 = vmatprep.subr.bf16.mxu0 %v790
    %891 = vmatpush1.bf16.msra.mxu0 %v789
    %892 = vmatprep.subr.bf16.mxu0 %v786
    %893 = vmatpush1.bf16.msra.mxu0 %v785
    %894 = vmatprep.subr.bf16.mxu0 %v782
    %895 = vmatpush1.bf16.msra.mxu0 %v781
    %896 = vmatprep.subr.bf16.mxu0 %v778
    %897 = vmatpush1.bf16.msra.mxu0 %v777
    %898 = vmatprep.subr.bf16.mxu0 0
    %899 = vmatpush2.bf16.msra.mxu0 0
    %900 = vmatprep.subr.bf16.mxu0 0
    %901 = vmatpush2.bf16.msra.mxu0 0
    %902 = vmatprep.subr.bf16.mxu0 0
    %903 = vmatpush2.bf16.msra.mxu0 0
    %904 = vmatprep.subr.bf16.mxu0 0
    %905 = vmatpush2.bf16.msra.mxu0 0
    %906 = vmatprep.subr.bf16.mxu0 0
    %907 = vmatpush2.bf16.msra.mxu0 0
    %908 = vmatprep.subr.bf16.mxu0 0
    %909 = vmatpush2.bf16.msra.mxu0 0
    %910 = vmatprep.subr.bf16.mxu0 0
    %911 = vmatpush2.bf16.msra.mxu0 0
    %912 = vmatprep.subr.bf16.mxu0 0
    %913 = vmatpush2.bf16.msra.mxu0 0
    %914 = vmatprep.mubr.bf16.mxu0 0
    %915 = vmatmul.mubr.bf16.gmra.mxu0 %v646
    %v916 = vpop.f32.mrf.mxu0
    %v917 = vadd.f32 0.0, %v916
    %v918 = vpop.f32.mrf.mxu0
    %v919 = vadd.f32 0.0, %v918
    %v920 = vpop.f32.mrf.mxu0
    %v921 = vadd.f32 0.0, %v920
    %v922 = vpop.f32.mrf.mxu0
    %v923 = vadd.f32 0.0, %v922
    %924 = vdwg.mxu0
    %v925 = vpack.c.bf16 %v878, %v874
    %v926 = vpack.c.bf16 %v880, %v876
    %v927 = vpack.c.bf16 %v921, %v917
    %v928 = vpack.c.bf16 %v923, %v919
    %v929 = vld [vmem:[%s7] sm:$0xff]
    %v930 = vld [vmem:[%s7 + $0x8] sm:$0xff]
    %v931 = vld [vmem:[%s7 + $0x10] sm:$0xff]
    %v932 = vld [vmem:[%s7 + $0x18] sm:$0xff]
    %v933 = vld [vmem:[%s7 + $0x20] sm:$0xff]
    %v934 = vld [vmem:[%s7 + $0x28] sm:$0xff]
    %v935 = vld [vmem:[%s7 + $0x30] sm:$0xff]
    %v936 = vld [vmem:[%s7 + $0x38] sm:$0xff]
    %v937 = vld [vmem:[%s7 + $0x40] sm:$0xff]
    %v938 = vld [vmem:[%s7 + $0x48] sm:$0xff]
    %v939 = vld [vmem:[%s7 + $0x50] sm:$0xff]
    %v940 = vld [vmem:[%s7 + $0x58] sm:$0xff]
    %v941 = vld [vmem:[%s7 + $0x60] sm:$0xff]
    %v942 = vld [vmem:[%s7 + $0x68] sm:$0xff]
    %v943 = vld [vmem:[%s7 + $0x70] sm:$0xff]
    %v944 = vld [vmem:[%s7 + $0x78] sm:$0xff]
    %v945 = vld [vmem:[%s7 + $0x80] sm:$0xff]
    %v946 = vld [vmem:[%s7 + $0x88] sm:$0xff]
    %v947 = vld [vmem:[%s7 + $0x90] sm:$0xff]
    %v948 = vld [vmem:[%s7 + $0x98] sm:$0xff]
    %v949 = vld [vmem:[%s7 + $0xa0] sm:$0xff]
    %v950 = vld [vmem:[%s7 + $0xa8] sm:$0xff]
    %v951 = vld [vmem:[%s7 + $0xb0] sm:$0xff]
    %v952 = vld [vmem:[%s7 + $0xb8] sm:$0xff]
    %v953 = vld [vmem:[%s7 + $0xc0] sm:$0xff]
    %v954 = vld [vmem:[%s7 + $0xc8] sm:$0xff]
    %v955 = vld [vmem:[%s7 + $0xd0] sm:$0xff]
    %v956 = vld [vmem:[%s7 + $0xd8] sm:$0xff]
    %v957 = vld [vmem:[%s7 + $0xe0] sm:$0xff]
    %v958 = vld [vmem:[%s7 + $0xe8] sm:$0xff]
    %v959 = vld [vmem:[%s7 + $0xf0] sm:$0xff]
    %v960 = vld [vmem:[%s7 + $0xf8] sm:$0xff]
    %v961 = vld [vmem:[%s7 + $0x100] sm:$0xff]
    %v962 = vld [vmem:[%s7 + $0x108] sm:$0xff]
    %v963 = vld [vmem:[%s7 + $0x110] sm:$0xff]
    %v964 = vld [vmem:[%s7 + $0x118] sm:$0xff]
    %v965 = vld [vmem:[%s7 + $0x120] sm:$0xff]
    %v966 = vld [vmem:[%s7 + $0x128] sm:$0xff]
    %v967 = vld [vmem:[%s7 + $0x130] sm:$0xff]
    %v968 = vld [vmem:[%s7 + $0x138] sm:$0xff]
    %v969 = vld [vmem:[%s7 + $0x140] sm:$0xff]
    %v970 = vld [vmem:[%s7 + $0x148] sm:$0xff]
    %v971 = vld [vmem:[%s7 + $0x150] sm:$0xff]
    %v972 = vld [vmem:[%s7 + $0x158] sm:$0xff]
    %v973 = vld [vmem:[%s7 + $0x160] sm:$0xff]
    %v974 = vld [vmem:[%s7 + $0x168] sm:$0xff]
    %v975 = vld [vmem:[%s7 + $0x170] sm:$0xff]
    %v976 = vld [vmem:[%s7 + $0x178] sm:$0xff]
    %v977 = vld [vmem:[%s7 + $0x180] sm:$0xff]
    %v978 = vld [vmem:[%s7 + $0x188] sm:$0xff]
    %v979 = vld [vmem:[%s7 + $0x190] sm:$0xff]
    %v980 = vld [vmem:[%s7 + $0x198] sm:$0xff]
    %v981 = vld [vmem:[%s7 + $0x1a0] sm:$0xff]
    %v982 = vld [vmem:[%s7 + $0x1a8] sm:$0xff]
    %v983 = vld [vmem:[%s7 + $0x1b0] sm:$0xff]
    %v984 = vld [vmem:[%s7 + $0x1b8] sm:$0xff]
    %v985 = vld [vmem:[%s7 + $0x1c0] sm:$0xff]
    %v986 = vld [vmem:[%s7 + $0x1c8] sm:$0xff]
    %v987 = vld [vmem:[%s7 + $0x1d0] sm:$0xff]
    %v988 = vld [vmem:[%s7 + $0x1d8] sm:$0xff]
    %v989 = vld [vmem:[%s7 + $0x1e0] sm:$0xff]
    %v990 = vld [vmem:[%s7 + $0x1e8] sm:$0xff]
    %v991 = vld [vmem:[%s7 + $0x1f0] sm:$0xff]
    %v992 = vld [vmem:[%s7 + $0x1f8] sm:$0xff]
    %v993 = vld [vmem:[%s7 + $0x200] sm:$0xff]
    %v994 = vld [vmem:[%s7 + $0x208] sm:$0xff]
    %v995 = vld [vmem:[%s7 + $0x210] sm:$0xff]
    %v996 = vld [vmem:[%s7 + $0x218] sm:$0xff]
    %v997 = vld [vmem:[%s7 + $0x220] sm:$0xff]
    %v998 = vld [vmem:[%s7 + $0x228] sm:$0xff]
    %v999 = vld [vmem:[%s7 + $0x230] sm:$0xff]
    %v1000 = vld [vmem:[%s7 + $0x238] sm:$0xff]
    %v1001 = vld [vmem:[%s7 + $0x240] sm:$0xff]
    %v1002 = vld [vmem:[%s7 + $0x248] sm:$0xff]
    %v1003 = vld [vmem:[%s7 + $0x250] sm:$0xff]
    %v1004 = vld [vmem:[%s7 + $0x258] sm:$0xff]
    %v1005 = vld [vmem:[%s7 + $0x260] sm:$0xff]
    %v1006 = vld [vmem:[%s7 + $0x268] sm:$0xff]
    %v1007 = vld [vmem:[%s7 + $0x270] sm:$0xff]
    %v1008 = vld [vmem:[%s7 + $0x278] sm:$0xff]
    %v1009 = vld [vmem:[%s7 + $0x280] sm:$0xff]
    %v1010 = vld [vmem:[%s7 + $0x288] sm:$0xff]
    %v1011 = vld [vmem:[%s7 + $0x290] sm:$0xff]
    %v1012 = vld [vmem:[%s7 + $0x298] sm:$0xff]
    %v1013 = vld [vmem:[%s7 + $0x2a0] sm:$0xff]
    %v1014 = vld [vmem:[%s7 + $0x2a8] sm:$0xff]
    %v1015 = vld [vmem:[%s7 + $0x2b0] sm:$0xff]
    %v1016 = vld [vmem:[%s7 + $0x2b8] sm:$0xff]
    %v1017 = vld [vmem:[%s7 + $0x2c0] sm:$0xff]
    %v1018 = vld [vmem:[%s7 + $0x2c8] sm:$0xff]
    %v1019 = vld [vmem:[%s7 + $0x2d0] sm:$0xff]
    %v1020 = vld [vmem:[%s7 + $0x2d8] sm:$0xff]
    %v1021 = vld [vmem:[%s7 + $0x2e0] sm:$0xff]
    %v1022 = vld [vmem:[%s7 + $0x2e8] sm:$0xff]
    %v1023 = vld [vmem:[%s7 + $0x2f0] sm:$0xff]
    %v1024 = vld [vmem:[%s7 + $0x2f8] sm:$0xff]
    %v1025 = vld [vmem:[%s7 + $0x300] sm:$0xff]
    %v1026 = vld [vmem:[%s7 + $0x308] sm:$0xff]
    %v1027 = vld [vmem:[%s7 + $0x310] sm:$0xff]
    %v1028 = vld [vmem:[%s7 + $0x318] sm:$0xff]
    %v1029 = vld [vmem:[%s7 + $0x320] sm:$0xff]
    %v1030 = vld [vmem:[%s7 + $0x328] sm:$0xff]
    %v1031 = vld [vmem:[%s7 + $0x330] sm:$0xff]
    %v1032 = vld [vmem:[%s7 + $0x338] sm:$0xff]
    %v1033 = vld [vmem:[%s7 + $0x340] sm:$0xff]
    %v1034 = vld [vmem:[%s7 + $0x348] sm:$0xff]
    %v1035 = vld [vmem:[%s7 + $0x350] sm:$0xff]
    %v1036 = vld [vmem:[%s7 + $0x358] sm:$0xff]
    %v1037 = vld [vmem:[%s7 + $0x360] sm:$0xff]
    %v1038 = vld [vmem:[%s7 + $0x368] sm:$0xff]
    %v1039 = vld [vmem:[%s7 + $0x370] sm:$0xff]
    %v1040 = vld [vmem:[%s7 + $0x378] sm:$0xff]
    %v1041 = vld [vmem:[%s7 + $0x380] sm:$0xff]
    %v1042 = vld [vmem:[%s7 + $0x388] sm:$0xff]
    %v1043 = vld [vmem:[%s7 + $0x390] sm:$0xff]
    %v1044 = vld [vmem:[%s7 + $0x398] sm:$0xff]
    %v1045 = vld [vmem:[%s7 + $0x3a0] sm:$0xff]
    %v1046 = vld [vmem:[%s7 + $0x3a8] sm:$0xff]
    %v1047 = vld [vmem:[%s7 + $0x3b0] sm:$0xff]
    %v1048 = vld [vmem:[%s7 + $0x3b8] sm:$0xff]
    %v1049 = vld [vmem:[%s7 + $0x3c0] sm:$0xff]
    %v1050 = vld [vmem:[%s7 + $0x3c8] sm:$0xff]
    %v1051 = vld [vmem:[%s7 + $0x3d0] sm:$0xff]
    %v1052 = vld [vmem:[%s7 + $0x3d8] sm:$0xff]
    %v1053 = vld [vmem:[%s7 + $0x3e0] sm:$0xff]
    %v1054 = vld [vmem:[%s7 + $0x3e8] sm:$0xff]
    %v1055 = vld [vmem:[%s7 + $0x3f0] sm:$0xff]
    %v1056 = vld [vmem:[%s7 + $0x3f8] sm:$0xff]
    %v1057 = vld [vmem:[#allocation9] sm:$0xf]
    %v1059 = vlaneseq
    %v1060 = vshrl.u32 %v1059, 7
    %v1061 = vsub.s32 0, %v1060
    %v1062 = vrot.slane %v1057, %v1061
    %v1063 = vlaneseq
    %v1064 = vshrl.u32 %v1063, 7
    %v1065 = vsub.s32 1, %v1064
    %v1066 = vrot.slane %v1057, %v1065
    %v1067 = vlaneseq
    %v1068 = vshrl.u32 %v1067, 7
    %v1069 = vsub.s32 2, %v1068
    %v1070 = vrot.slane %v1057, %v1069
    %v1071 = vlaneseq
    %v1072 = vshrl.u32 %v1071, 7
    %v1073 = vsub.s32 3, %v1072
    %v1074 = vrot.slane %v1057, %v1073
    %v1207 = vunpack.c.l.b16 %v929
    %v1208 = vunpack.c.h.b16 %v929
    %v1209 = vunpack.c.l.b16 %v930
    %v1210 = vunpack.c.h.b16 %v930
    %v1211 = vunpack.c.l.b16 %v931
    %v1212 = vunpack.c.h.b16 %v931
    %v1213 = vunpack.c.l.b16 %v932
    %v1214 = vunpack.c.h.b16 %v932
    %v1215 = vunpack.c.l.b16 %v933
    %v1216 = vunpack.c.h.b16 %v933
    %v1217 = vunpack.c.l.b16 %v934
    %v1218 = vunpack.c.h.b16 %v934
    %v1219 = vunpack.c.l.b16 %v935
    %v1220 = vunpack.c.h.b16 %v935
    %v1221 = vunpack.c.l.b16 %v936
    %v1222 = vunpack.c.h.b16 %v936
    %v1223 = vunpack.c.l.b16 %v937
    %v1224 = vunpack.c.h.b16 %v937
    %v1225 = vunpack.c.l.b16 %v938
    %v1226 = vunpack.c.h.b16 %v938
    %v1227 = vunpack.c.l.b16 %v939
    %v1228 = vunpack.c.h.b16 %v939
    %v1229 = vunpack.c.l.b16 %v940
    %v1230 = vunpack.c.h.b16 %v940
    %v1231 = vunpack.c.l.b16 %v941
    %v1232 = vunpack.c.h.b16 %v941
    %v1233 = vunpack.c.l.b16 %v942
    %v1234 = vunpack.c.h.b16 %v942
    %v1235 = vunpack.c.l.b16 %v943
    %v1236 = vunpack.c.h.b16 %v943
    %v1237 = vunpack.c.l.b16 %v944
    %v1238 = vunpack.c.h.b16 %v944
    %v1239 = vunpack.c.l.b16 %v945
    %v1240 = vunpack.c.h.b16 %v945
    %v1241 = vunpack.c.l.b16 %v946
    %v1242 = vunpack.c.h.b16 %v946
    %v1243 = vunpack.c.l.b16 %v947
    %v1244 = vunpack.c.h.b16 %v947
    %v1245 = vunpack.c.l.b16 %v948
    %v1246 = vunpack.c.h.b16 %v948
    %v1247 = vunpack.c.l.b16 %v949
    %v1248 = vunpack.c.h.b16 %v949
    %v1249 = vunpack.c.l.b16 %v950
    %v1250 = vunpack.c.h.b16 %v950
    %v1251 = vunpack.c.l.b16 %v951
    %v1252 = vunpack.c.h.b16 %v951
    %v1253 = vunpack.c.l.b16 %v952
    %v1254 = vunpack.c.h.b16 %v952
    %v1255 = vunpack.c.l.b16 %v953
    %v1256 = vunpack.c.h.b16 %v953
    %v1257 = vunpack.c.l.b16 %v954
    %v1258 = vunpack.c.h.b16 %v954
    %v1259 = vunpack.c.l.b16 %v955
    %v1260 = vunpack.c.h.b16 %v955
    %v1261 = vunpack.c.l.b16 %v956
    %v1262 = vunpack.c.h.b16 %v956
    %v1263 = vunpack.c.l.b16 %v957
    %v1264 = vunpack.c.h.b16 %v957
    %v1265 = vunpack.c.l.b16 %v958
    %v1266 = vunpack.c.h.b16 %v958
    %v1267 = vunpack.c.l.b16 %v959
    %v1268 = vunpack.c.h.b16 %v959
    %v1269 = vunpack.c.l.b16 %v960
    %v1270 = vunpack.c.h.b16 %v960
    %v1271 = vunpack.c.l.b16 %v961
    %v1272 = vunpack.c.h.b16 %v961
    %v1273 = vunpack.c.l.b16 %v962
    %v1274 = vunpack.c.h.b16 %v962
    %v1275 = vunpack.c.l.b16 %v963
    %v1276 = vunpack.c.h.b16 %v963
    %v1277 = vunpack.c.l.b16 %v964
    %v1278 = vunpack.c.h.b16 %v964
    %v1279 = vunpack.c.l.b16 %v965
    %v1280 = vunpack.c.h.b16 %v965
    %v1281 = vunpack.c.l.b16 %v966
    %v1282 = vunpack.c.h.b16 %v966
    %v1283 = vunpack.c.l.b16 %v967
    %v1284 = vunpack.c.h.b16 %v967
    %v1285 = vunpack.c.l.b16 %v968
    %v1286 = vunpack.c.h.b16 %v968
    %v1287 = vunpack.c.l.b16 %v969
    %v1288 = vunpack.c.h.b16 %v969
    %v1289 = vunpack.c.l.b16 %v970
    %v1290 = vunpack.c.h.b16 %v970
    %v1291 = vunpack.c.l.b16 %v971
    %v1292 = vunpack.c.h.b16 %v971
    %v1293 = vunpack.c.l.b16 %v972
    %v1294 = vunpack.c.h.b16 %v972
    %v1295 = vunpack.c.l.b16 %v973
    %v1296 = vunpack.c.h.b16 %v973
    %v1297 = vunpack.c.l.b16 %v974
    %v1298 = vunpack.c.h.b16 %v974
    %v1299 = vunpack.c.l.b16 %v975
    %v1300 = vunpack.c.h.b16 %v975
    %v1301 = vunpack.c.l.b16 %v976
    %v1302 = vunpack.c.h.b16 %v976
    %v1303 = vunpack.c.l.b16 %v977
    %v1304 = vunpack.c.h.b16 %v977
    %v1305 = vunpack.c.l.b16 %v978
    %v1306 = vunpack.c.h.b16 %v978
    %v1307 = vunpack.c.l.b16 %v979
    %v1308 = vunpack.c.h.b16 %v979
    %v1309 = vunpack.c.l.b16 %v980
    %v1310 = vunpack.c.h.b16 %v980
    %v1311 = vunpack.c.l.b16 %v981
    %v1312 = vunpack.c.h.b16 %v981
    %v1313 = vunpack.c.l.b16 %v982
    %v1314 = vunpack.c.h.b16 %v982
    %v1315 = vunpack.c.l.b16 %v983
    %v1316 = vunpack.c.h.b16 %v983
    %v1317 = vunpack.c.l.b16 %v984
    %v1318 = vunpack.c.h.b16 %v984
    %v1319 = vunpack.c.l.b16 %v985
    %v1320 = vunpack.c.h.b16 %v985
    %v1321 = vunpack.c.l.b16 %v986
    %v1322 = vunpack.c.h.b16 %v986
    %v1323 = vunpack.c.l.b16 %v987
    %v1324 = vunpack.c.h.b16 %v987
    %v1325 = vunpack.c.l.b16 %v988
    %v1326 = vunpack.c.h.b16 %v988
    %v1327 = vunpack.c.l.b16 %v989
    %v1328 = vunpack.c.h.b16 %v989
    %v1329 = vunpack.c.l.b16 %v990
    %v1330 = vunpack.c.h.b16 %v990
    %v1331 = vunpack.c.l.b16 %v991
    %v1332 = vunpack.c.h.b16 %v991
    %v1333 = vunpack.c.l.b16 %v992
    %v1334 = vunpack.c.h.b16 %v992
    %v1335 = vunpack.c.l.b16 %v993
    %v1336 = vunpack.c.h.b16 %v993
    %v1337 = vunpack.c.l.b16 %v994
    %v1338 = vunpack.c.h.b16 %v994
    %v1339 = vunpack.c.l.b16 %v995
    %v1340 = vunpack.c.h.b16 %v995
    %v1341 = vunpack.c.l.b16 %v996
    %v1342 = vunpack.c.h.b16 %v996
    %v1343 = vunpack.c.l.b16 %v997
    %v1344 = vunpack.c.h.b16 %v997
    %v1345 = vunpack.c.l.b16 %v998
    %v1346 = vunpack.c.h.b16 %v998
    %v1347 = vunpack.c.l.b16 %v999
    %v1348 = vunpack.c.h.b16 %v999
    %v1349 = vunpack.c.l.b16 %v1000
    %v1350 = vunpack.c.h.b16 %v1000
    %v1351 = vunpack.c.l.b16 %v1001
    %v1352 = vunpack.c.h.b16 %v1001
    %v1353 = vunpack.c.l.b16 %v1002
    %v1354 = vunpack.c.h.b16 %v1002
    %v1355 = vunpack.c.l.b16 %v1003
    %v1356 = vunpack.c.h.b16 %v1003
    %v1357 = vunpack.c.l.b16 %v1004
    %v1358 = vunpack.c.h.b16 %v1004
    %v1359 = vunpack.c.l.b16 %v1005
    %v1360 = vunpack.c.h.b16 %v1005
    %v1361 = vunpack.c.l.b16 %v1006
    %v1362 = vunpack.c.h.b16 %v1006
    %v1363 = vunpack.c.l.b16 %v1007
    %v1364 = vunpack.c.h.b16 %v1007
    %v1365 = vunpack.c.l.b16 %v1008
    %v1366 = vunpack.c.h.b16 %v1008
    %v1367 = vunpack.c.l.b16 %v1009
    %v1368 = vunpack.c.h.b16 %v1009
    %v1369 = vunpack.c.l.b16 %v1010
    %v1370 = vunpack.c.h.b16 %v1010
    %v1371 = vunpack.c.l.b16 %v1011
    %v1372 = vunpack.c.h.b16 %v1011
    %v1373 = vunpack.c.l.b16 %v1012
    %v1374 = vunpack.c.h.b16 %v1012
    %v1375 = vunpack.c.l.b16 %v1013
    %v1376 = vunpack.c.h.b16 %v1013
    %v1377 = vunpack.c.l.b16 %v1014
    %v1378 = vunpack.c.h.b16 %v1014
    %v1379 = vunpack.c.l.b16 %v1015
    %v1380 = vunpack.c.h.b16 %v1015
    %v1381 = vunpack.c.l.b16 %v1016
    %v1382 = vunpack.c.h.b16 %v1016
    %v1383 = vunpack.c.l.b16 %v1017
    %v1384 = vunpack.c.h.b16 %v1017
    %v1385 = vunpack.c.l.b16 %v1018
    %v1386 = vunpack.c.h.b16 %v1018
    %v1387 = vunpack.c.l.b16 %v1019
    %v1388 = vunpack.c.h.b16 %v1019
    %v1389 = vunpack.c.l.b16 %v1020
    %v1390 = vunpack.c.h.b16 %v1020
    %v1391 = vunpack.c.l.b16 %v1021
    %v1392 = vunpack.c.h.b16 %v1021
    %v1393 = vunpack.c.l.b16 %v1022
    %v1394 = vunpack.c.h.b16 %v1022
    %v1395 = vunpack.c.l.b16 %v1023
    %v1396 = vunpack.c.h.b16 %v1023
    %v1397 = vunpack.c.l.b16 %v1024
    %v1398 = vunpack.c.h.b16 %v1024
    %v1399 = vunpack.c.l.b16 %v1025
    %v1400 = vunpack.c.h.b16 %v1025
    %v1401 = vunpack.c.l.b16 %v1026
    %v1402 = vunpack.c.h.b16 %v1026
    %v1403 = vunpack.c.l.b16 %v1027
    %v1404 = vunpack.c.h.b16 %v1027
    %v1405 = vunpack.c.l.b16 %v1028
    %v1406 = vunpack.c.h.b16 %v1028
    %v1407 = vunpack.c.l.b16 %v1029
    %v1408 = vunpack.c.h.b16 %v1029
    %v1409 = vunpack.c.l.b16 %v1030
    %v1410 = vunpack.c.h.b16 %v1030
    %v1411 = vunpack.c.l.b16 %v1031
    %v1412 = vunpack.c.h.b16 %v1031
    %v1413 = vunpack.c.l.b16 %v1032
    %v1414 = vunpack.c.h.b16 %v1032
    %v1415 = vunpack.c.l.b16 %v1033
    %v1416 = vunpack.c.h.b16 %v1033
    %v1417 = vunpack.c.l.b16 %v1034
    %v1418 = vunpack.c.h.b16 %v1034
    %v1419 = vunpack.c.l.b16 %v1035
    %v1420 = vunpack.c.h.b16 %v1035
    %v1421 = vunpack.c.l.b16 %v1036
    %v1422 = vunpack.c.h.b16 %v1036
    %v1423 = vunpack.c.l.b16 %v1037
    %v1424 = vunpack.c.h.b16 %v1037
    %v1425 = vunpack.c.l.b16 %v1038
    %v1426 = vunpack.c.h.b16 %v1038
    %v1427 = vunpack.c.l.b16 %v1039
    %v1428 = vunpack.c.h.b16 %v1039
    %v1429 = vunpack.c.l.b16 %v1040
    %v1430 = vunpack.c.h.b16 %v1040
    %v1431 = vunpack.c.l.b16 %v1041
    %v1432 = vunpack.c.h.b16 %v1041
    %v1433 = vunpack.c.l.b16 %v1042
    %v1434 = vunpack.c.h.b16 %v1042
    %v1435 = vunpack.c.l.b16 %v1043
    %v1436 = vunpack.c.h.b16 %v1043
    %v1437 = vunpack.c.l.b16 %v1044
    %v1438 = vunpack.c.h.b16 %v1044
    %v1439 = vunpack.c.l.b16 %v1045
    %v1440 = vunpack.c.h.b16 %v1045
    %v1441 = vunpack.c.l.b16 %v1046
    %v1442 = vunpack.c.h.b16 %v1046
    %v1443 = vunpack.c.l.b16 %v1047
    %v1444 = vunpack.c.h.b16 %v1047
    %v1445 = vunpack.c.l.b16 %v1048
    %v1446 = vunpack.c.h.b16 %v1048
    %v1447 = vunpack.c.l.b16 %v1049
    %v1448 = vunpack.c.h.b16 %v1049
    %v1449 = vunpack.c.l.b16 %v1050
    %v1450 = vunpack.c.h.b16 %v1050
    %v1451 = vunpack.c.l.b16 %v1051
    %v1452 = vunpack.c.h.b16 %v1051
    %v1453 = vunpack.c.l.b16 %v1052
    %v1454 = vunpack.c.h.b16 %v1052
    %v1455 = vunpack.c.l.b16 %v1053
    %v1456 = vunpack.c.h.b16 %v1053
    %v1457 = vunpack.c.l.b16 %v1054
    %v1458 = vunpack.c.h.b16 %v1054
    %v1459 = vunpack.c.l.b16 %v1055
    %v1460 = vunpack.c.h.b16 %v1055
    %v1461 = vunpack.c.l.b16 %v1056
    %v1462 = vunpack.c.h.b16 %v1056
    %v1463 = vpack.c.b16 %v1211, %v1207
    %v1464 = vpack.c.b16 %v1212, %v1208
    %v1465 = vpack.c.b16 %v1213, %v1209
    %v1466 = vpack.c.b16 %v1214, %v1210
    %v1467 = vpack.c.b16 %v1219, %v1215
    %v1468 = vpack.c.b16 %v1220, %v1216
    %v1469 = vpack.c.b16 %v1221, %v1217
    %v1470 = vpack.c.b16 %v1222, %v1218
    %v1471 = vpack.c.b16 %v1227, %v1223
    %v1472 = vpack.c.b16 %v1228, %v1224
    %v1473 = vpack.c.b16 %v1229, %v1225
    %v1474 = vpack.c.b16 %v1230, %v1226
    %v1475 = vpack.c.b16 %v1235, %v1231
    %v1476 = vpack.c.b16 %v1236, %v1232
    %v1477 = vpack.c.b16 %v1237, %v1233
    %v1478 = vpack.c.b16 %v1238, %v1234
    %v1479 = vpack.c.b16 %v1243, %v1239
    %v1480 = vpack.c.b16 %v1244, %v1240
    %v1481 = vpack.c.b16 %v1245, %v1241
    %v1482 = vpack.c.b16 %v1246, %v1242
    %v1483 = vpack.c.b16 %v1251, %v1247
    %v1484 = vpack.c.b16 %v1252, %v1248
    %v1485 = vpack.c.b16 %v1253, %v1249
    %v1486 = vpack.c.b16 %v1254, %v1250
    %v1487 = vpack.c.b16 %v1259, %v1255
    %v1488 = vpack.c.b16 %v1260, %v1256
    %v1489 = vpack.c.b16 %v1261, %v1257
    %v1490 = vpack.c.b16 %v1262, %v1258
    %v1491 = vpack.c.b16 %v1267, %v1263
    %v1492 = vpack.c.b16 %v1268, %v1264
    %v1493 = vpack.c.b16 %v1269, %v1265
    %v1494 = vpack.c.b16 %v1270, %v1266
    %v1495 = vpack.c.b16 %v1275, %v1271
    %v1496 = vpack.c.b16 %v1276, %v1272
    %v1497 = vpack.c.b16 %v1277, %v1273
    %v1498 = vpack.c.b16 %v1278, %v1274
    %v1499 = vpack.c.b16 %v1283, %v1279
    %v1500 = vpack.c.b16 %v1284, %v1280
    %v1501 = vpack.c.b16 %v1285, %v1281
    %v1502 = vpack.c.b16 %v1286, %v1282
    %v1503 = vpack.c.b16 %v1291, %v1287
    %v1504 = vpack.c.b16 %v1292, %v1288
    %v1505 = vpack.c.b16 %v1293, %v1289
    %v1506 = vpack.c.b16 %v1294, %v1290
    %v1507 = vpack.c.b16 %v1299, %v1295
    %v1508 = vpack.c.b16 %v1300, %v1296
    %v1509 = vpack.c.b16 %v1301, %v1297
    %v1510 = vpack.c.b16 %v1302, %v1298
    %v1511 = vpack.c.b16 %v1307, %v1303
    %v1512 = vpack.c.b16 %v1308, %v1304
    %v1513 = vpack.c.b16 %v1309, %v1305
    %v1514 = vpack.c.b16 %v1310, %v1306
    %v1515 = vpack.c.b16 %v1315, %v1311
    %v1516 = vpack.c.b16 %v1316, %v1312
    %v1517 = vpack.c.b16 %v1317, %v1313
    %v1518 = vpack.c.b16 %v1318, %v1314
    %v1519 = vpack.c.b16 %v1323, %v1319
    %v1520 = vpack.c.b16 %v1324, %v1320
    %v1521 = vpack.c.b16 %v1325, %v1321
    %v1522 = vpack.c.b16 %v1326, %v1322
    %v1523 = vpack.c.b16 %v1331, %v1327
    %v1524 = vpack.c.b16 %v1332, %v1328
    %v1525 = vpack.c.b16 %v1333, %v1329
    %v1526 = vpack.c.b16 %v1334, %v1330
    %v1527 = vpack.c.b16 %v1339, %v1335
    %v1528 = vpack.c.b16 %v1340, %v1336
    %v1529 = vpack.c.b16 %v1341, %v1337
    %v1530 = vpack.c.b16 %v1342, %v1338
    %v1531 = vpack.c.b16 %v1347, %v1343
    %v1532 = vpack.c.b16 %v1348, %v1344
    %v1533 = vpack.c.b16 %v1349, %v1345
    %v1534 = vpack.c.b16 %v1350, %v1346
    %v1535 = vpack.c.b16 %v1355, %v1351
    %v1536 = vpack.c.b16 %v1356, %v1352
    %v1537 = vpack.c.b16 %v1357, %v1353
    %v1538 = vpack.c.b16 %v1358, %v1354
    %v1539 = vpack.c.b16 %v1363, %v1359
    %v1540 = vpack.c.b16 %v1364, %v1360
    %v1541 = vpack.c.b16 %v1365, %v1361
    %v1542 = vpack.c.b16 %v1366, %v1362
    %v1543 = vpack.c.b16 %v1371, %v1367
    %v1544 = vpack.c.b16 %v1372, %v1368
    %v1545 = vpack.c.b16 %v1373, %v1369
    %v1546 = vpack.c.b16 %v1374, %v1370
    %v1547 = vpack.c.b16 %v1379, %v1375
    %v1548 = vpack.c.b16 %v1380, %v1376
    %v1549 = vpack.c.b16 %v1381, %v1377
    %v1550 = vpack.c.b16 %v1382, %v1378
    %v1551 = vpack.c.b16 %v1387, %v1383
    %v1552 = vpack.c.b16 %v1388, %v1384
    %v1553 = vpack.c.b16 %v1389, %v1385
    %v1554 = vpack.c.b16 %v1390, %v1386
    %v1555 = vpack.c.b16 %v1395, %v1391
    %v1556 = vpack.c.b16 %v1396, %v1392
    %v1557 = vpack.c.b16 %v1397, %v1393
    %v1558 = vpack.c.b16 %v1398, %v1394
    %v1559 = vpack.c.b16 %v1403, %v1399
    %v1560 = vpack.c.b16 %v1404, %v1400
    %v1561 = vpack.c.b16 %v1405, %v1401
    %v1562 = vpack.c.b16 %v1406, %v1402
    %v1563 = vpack.c.b16 %v1411, %v1407
    %v1564 = vpack.c.b16 %v1412, %v1408
    %v1565 = vpack.c.b16 %v1413, %v1409
    %v1566 = vpack.c.b16 %v1414, %v1410
    %v1567 = vpack.c.b16 %v1419, %v1415
    %v1568 = vpack.c.b16 %v1420, %v1416
    %v1569 = vpack.c.b16 %v1421, %v1417
    %v1570 = vpack.c.b16 %v1422, %v1418
    %v1571 = vpack.c.b16 %v1427, %v1423
    %v1572 = vpack.c.b16 %v1428, %v1424
    %v1573 = vpack.c.b16 %v1429, %v1425
    %v1574 = vpack.c.b16 %v1430, %v1426
    %v1575 = vpack.c.b16 %v1435, %v1431
    %v1576 = vpack.c.b16 %v1436, %v1432
    %v1577 = vpack.c.b16 %v1437, %v1433
    %v1578 = vpack.c.b16 %v1438, %v1434
    %v1579 = vpack.c.b16 %v1443, %v1439
    %v1580 = vpack.c.b16 %v1444, %v1440
    %v1581 = vpack.c.b16 %v1445, %v1441
    %v1582 = vpack.c.b16 %v1446, %v1442
    %v1583 = vpack.c.b16 %v1451, %v1447
    %v1584 = vpack.c.b16 %v1452, %v1448
    %v1585 = vpack.c.b16 %v1453, %v1449
    %v1586 = vpack.c.b16 %v1454, %v1450
    %v1587 = vpack.c.b16 %v1459, %v1455
    %v1588 = vpack.c.b16 %v1460, %v1456
    %v1589 = vpack.c.b16 %v1461, %v1457
    %v1590 = vpack.c.b16 %v1462, %v1458
    %1719 = vmatprep.subr.bf16.mxu0 %v1492
    %1720 = vmatpush1.bf16.msra.mxu0 %v1491
    %1721 = vmatprep.subr.bf16.mxu0 %v1488
    %1722 = vmatpush1.bf16.msra.mxu0 %v1487
    %1723 = vmatprep.subr.bf16.mxu0 %v1484
    %1724 = vmatpush1.bf16.msra.mxu0 %v1483
    %1725 = vmatprep.subr.bf16.mxu0 %v1480
    %1726 = vmatpush1.bf16.msra.mxu0 %v1479
    %1727 = vmatprep.subr.bf16.mxu0 %v1476
    %1728 = vmatpush1.bf16.msra.mxu0 %v1475
    %1729 = vmatprep.subr.bf16.mxu0 %v1472
    %1730 = vmatpush1.bf16.msra.mxu0 %v1471
    %1731 = vmatprep.subr.bf16.mxu0 %v1468
    %1732 = vmatpush1.bf16.msra.mxu0 %v1467
    %1733 = vmatprep.subr.bf16.mxu0 %v1464
    %1734 = vmatpush1.bf16.msra.mxu0 %v1463
    %1735 = vmatprep.subr.bf16.mxu0 %v1524
    %1736 = vmatpush2.bf16.msra.mxu0 %v1523
    %1737 = vmatprep.subr.bf16.mxu0 %v1520
    %1738 = vmatpush2.bf16.msra.mxu0 %v1519
    %1739 = vmatprep.subr.bf16.mxu0 %v1516
    %1740 = vmatpush2.bf16.msra.mxu0 %v1515
    %1741 = vmatprep.subr.bf16.mxu0 %v1512
    %1742 = vmatpush2.bf16.msra.mxu0 %v1511
    %1743 = vmatprep.subr.bf16.mxu0 %v1508
    %1744 = vmatpush2.bf16.msra.mxu0 %v1507
    %1745 = vmatprep.subr.bf16.mxu0 %v1504
    %1746 = vmatpush2.bf16.msra.mxu0 %v1503
    %1747 = vmatprep.subr.bf16.mxu0 %v1500
    %1748 = vmatpush2.bf16.msra.mxu0 %v1499
    %1749 = vmatprep.subr.bf16.mxu0 %v1496
    %1750 = vmatpush2.bf16.msra.mxu0 %v1495
    %1751 = vmatprep.mubr.bf16.mxu0 %v926
    %1752 = vmatmul.mubr.bf16.gmra.mxu0 %v925
    %v1753 = vpop.f32.mrf.mxu0
    %v1754 = vadd.f32 %v1062, %v1753
    %v1755 = vpop.f32.mrf.mxu0
    %v1756 = vadd.f32 %v1066, %v1755
    %v1757 = vpop.f32.mrf.mxu0
    %v1758 = vadd.f32 %v1062, %v1757
    %v1759 = vpop.f32.mrf.mxu0
    %v1760 = vadd.f32 %v1066, %v1759
    %1761 = vdwg.mxu0
    %1762 = vmatprep.subr.bf16.mxu0 %v1556
    %1763 = vmatpush1.bf16.msra.mxu0 %v1555
    %1764 = vmatprep.subr.bf16.mxu0 %v1552
    %1765 = vmatpush1.bf16.msra.mxu0 %v1551
    %1766 = vmatprep.subr.bf16.mxu0 %v1548
    %1767 = vmatpush1.bf16.msra.mxu0 %v1547
    %1768 = vmatprep.subr.bf16.mxu0 %v1544
    %1769 = vmatpush1.bf16.msra.mxu0 %v1543
    %1770 = vmatprep.subr.bf16.mxu0 %v1540
    %1771 = vmatpush1.bf16.msra.mxu0 %v1539
    %1772 = vmatprep.subr.bf16.mxu0 %v1536
    %1773 = vmatpush1.bf16.msra.mxu0 %v1535
    %1774 = vmatprep.subr.bf16.mxu0 %v1532
    %1775 = vmatpush1.bf16.msra.mxu0 %v1531
    %1776 = vmatprep.subr.bf16.mxu0 %v1528
    %1777 = vmatpush1.bf16.msra.mxu0 %v1527
    %1778 = vmatprep.subr.bf16.mxu0 %v1588
    %1779 = vmatpush2.bf16.msra.mxu0 %v1587
    %1780 = vmatprep.subr.bf16.mxu0 %v1584
    %1781 = vmatpush2.bf16.msra.mxu0 %v1583
    %1782 = vmatprep.subr.bf16.mxu0 %v1580
    %1783 = vmatpush2.bf16.msra.mxu0 %v1579
    %1784 = vmatprep.subr.bf16.mxu0 %v1576
    %1785 = vmatpush2.bf16.msra.mxu0 %v1575
    %1786 = vmatprep.subr.bf16.mxu0 %v1572
    %1787 = vmatpush2.bf16.msra.mxu0 %v1571
    %1788 = vmatprep.subr.bf16.mxu0 %v1568
    %1789 = vmatpush2.bf16.msra.mxu0 %v1567
    %1790 = vmatprep.subr.bf16.mxu0 %v1564
    %1791 = vmatpush2.bf16.msra.mxu0 %v1563
    %1792 = vmatprep.subr.bf16.mxu0 %v1560
    %1793 = vmatpush2.bf16.msra.mxu0 %v1559
    %1794 = vmatprep.mubr.bf16.mxu0 %v928
    %1795 = vmatmul.mubr.bf16.gmra.mxu0 %v927
    %v1796 = vpop.f32.mrf.mxu0
    %v1797 = vadd.f32 %v1754, %v1796
    %v1798 = vpop.f32.mrf.mxu0
    %v1799 = vadd.f32 %v1756, %v1798
    %v1800 = vpop.f32.mrf.mxu0
    %v1801 = vadd.f32 %v1758, %v1800
    %v1802 = vpop.f32.mrf.mxu0
    %v1803 = vadd.f32 %v1760, %v1802
    %1804 = vdwg.mxu0
    %1805 = vmatprep.subr.bf16.mxu0 %v1494
    %1806 = vmatpush1.bf16.msra.mxu0 %v1493
    %1807 = vmatprep.subr.bf16.mxu0 %v1490
    %1808 = vmatpush1.bf16.msra.mxu0 %v1489
    %1809 = vmatprep.subr.bf16.mxu0 %v1486
    %1810 = vmatpush1.bf16.msra.mxu0 %v1485
    %1811 = vmatprep.subr.bf16.mxu0 %v1482
    %1812 = vmatpush1.bf16.msra.mxu0 %v1481
    %1813 = vmatprep.subr.bf16.mxu0 %v1478
    %1814 = vmatpush1.bf16.msra.mxu0 %v1477
    %1815 = vmatprep.subr.bf16.mxu0 %v1474
    %1816 = vmatpush1.bf16.msra.mxu0 %v1473
    %1817 = vmatprep.subr.bf16.mxu0 %v1470
    %1818 = vmatpush1.bf16.msra.mxu0 %v1469
    %1819 = vmatprep.subr.bf16.mxu0 %v1466
    %1820 = vmatpush1.bf16.msra.mxu0 %v1465
    %1821 = vmatprep.subr.bf16.mxu0 %v1526
    %1822 = vmatpush2.bf16.msra.mxu0 %v1525
    %1823 = vmatprep.subr.bf16.mxu0 %v1522
    %1824 = vmatpush2.bf16.msra.mxu0 %v1521
    %1825 = vmatprep.subr.bf16.mxu0 %v1518
    %1826 = vmatpush2.bf16.msra.mxu0 %v1517
    %1827 = vmatprep.subr.bf16.mxu0 %v1514
    %1828 = vmatpush2.bf16.msra.mxu0 %v1513
    %1829 = vmatprep.subr.bf16.mxu0 %v1510
    %1830 = vmatpush2.bf16.msra.mxu0 %v1509
    %1831 = vmatprep.subr.bf16.mxu0 %v1506
    %1832 = vmatpush2.bf16.msra.mxu0 %v1505
    %1833 = vmatprep.subr.bf16.mxu0 %v1502
    %1834 = vmatpush2.bf16.msra.mxu0 %v1501
    %1835 = vmatprep.subr.bf16.mxu0 %v1498
    %1836 = vmatpush2.bf16.msra.mxu0 %v1497
    %1837 = vmatprep.mubr.bf16.mxu0 %v926
    %1838 = vmatmul.mubr.bf16.gmra.mxu0 %v925
    %v1839 = vpop.f32.mrf.mxu0
    %v1840 = vadd.f32 %v1070, %v1839
    %v1841 = vpop.f32.mrf.mxu0
    %v1842 = vadd.f32 %v1074, %v1841
    %v1843 = vpop.f32.mrf.mxu0
    %v1844 = vadd.f32 %v1070, %v1843
    %v1845 = vpop.f32.mrf.mxu0
    %v1846 = vadd.f32 %v1074, %v1845
    %1847 = vdwg.mxu0
    %1848 = vmatprep.subr.bf16.mxu0 %v1558
    %1849 = vmatpush1.bf16.msra.mxu0 %v1557
    %1850 = vmatprep.subr.bf16.mxu0 %v1554
    %1851 = vmatpush1.bf16.msra.mxu0 %v1553
    %1852 = vmatprep.subr.bf16.mxu0 %v1550
    %1853 = vmatpush1.bf16.msra.mxu0 %v1549
    %1854 = vmatprep.subr.bf16.mxu0 %v1546
    %1855 = vmatpush1.bf16.msra.mxu0 %v1545
    %1856 = vmatprep.subr.bf16.mxu0 %v1542
    %1857 = vmatpush1.bf16.msra.mxu0 %v1541
    %1858 = vmatprep.subr.bf16.mxu0 %v1538
    %1859 = vmatpush1.bf16.msra.mxu0 %v1537
    %1860 = vmatprep.subr.bf16.mxu0 %v1534
    %1861 = vmatpush1.bf16.msra.mxu0 %v1533
    %1862 = vmatprep.subr.bf16.mxu0 %v1530
    %1863 = vmatpush1.bf16.msra.mxu0 %v1529
    %1864 = vmatprep.subr.bf16.mxu0 %v1590
    %1865 = vmatpush2.bf16.msra.mxu0 %v1589
    %1866 = vmatprep.subr.bf16.mxu0 %v1586
    %1867 = vmatpush2.bf16.msra.mxu0 %v1585
    %1868 = vmatprep.subr.bf16.mxu0 %v1582
    %1869 = vmatpush2.bf16.msra.mxu0 %v1581
    %1870 = vmatprep.subr.bf16.mxu0 %v1578
    %1871 = vmatpush2.bf16.msra.mxu0 %v1577
    %1872 = vmatprep.subr.bf16.mxu0 %v1574
    %1873 = vmatpush2.bf16.msra.mxu0 %v1573
    %1874 = vmatprep.subr.bf16.mxu0 %v1570
    %1875 = vmatpush2.bf16.msra.mxu0 %v1569
    %1876 = vmatprep.subr.bf16.mxu0 %v1566
    %1877 = vmatpush2.bf16.msra.mxu0 %v1565
    %1878 = vmatprep.subr.bf16.mxu0 %v1562
    %1879 = vmatpush2.bf16.msra.mxu0 %v1561
    %1880 = vmatprep.mubr.bf16.mxu0 %v928
    %1881 = vmatmul.mubr.bf16.gmra.mxu0 %v927
    %v1882 = vpop.f32.mrf.mxu0
    %v1883 = vadd.f32 %v1840, %v1882
    %v1884 = vpop.f32.mrf.mxu0
    %v1885 = vadd.f32 %v1842, %v1884
    %v1886 = vpop.f32.mrf.mxu0
    %v1887 = vadd.f32 %v1844, %v1886
    %v1888 = vpop.f32.mrf.mxu0
    %v1889 = vadd.f32 %v1846, %v1888
    %1890 = vdwg.mxu0
    %v1891 = vtanh.pop %v1797
    %v1892 = vtanh.pop %v1799
    %v1893 = vtanh.pop %v1883
    %v1894 = vtanh.pop %v1885
    %v1895 = vtanh.pop %v1801
    %v1896 = vtanh.pop %v1803
    %v1897 = vtanh.pop %v1887
    %v1898 = vtanh.pop %v1889
    %v1899 = vrot.slane %v1891, 4
    %v1900 = vadd.f32 %v1891, %v1899
    %v1901 = vrot.slane %v1900, 2
    %v1902 = vadd.f32 %v1900, %v1901
    %v1903 = vrot.slane %v1902, 1
    %v1904 = vadd.f32 %v1902, %v1903
    %v1905 = vrot.slane %v1892, 4
    %v1906 = vadd.f32 %v1892, %v1905
    %v1907 = vrot.slane %v1906, 2
    %v1908 = vadd.f32 %v1906, %v1907
    %v1909 = vrot.slane %v1908, 1
    %v1910 = vadd.f32 %v1908, %v1909
    %v1911 = vrot.slane %v1893, 4
    %v1912 = vadd.f32 %v1893, %v1911
    %v1913 = vrot.slane %v1912, 2
    %v1914 = vadd.f32 %v1912, %v1913
    %v1915 = vrot.slane %v1914, 1
    %v1916 = vadd.f32 %v1914, %v1915
    %v1917 = vrot.slane %v1894, 4
    %v1918 = vadd.f32 %v1894, %v1917
    %v1919 = vrot.slane %v1918, 2
    %v1920 = vadd.f32 %v1918, %v1919
    %v1921 = vrot.slane %v1920, 1
    %v1922 = vadd.f32 %v1920, %v1921
    %v1923 = vrot.slane %v1895, 4
    %v1924 = vadd.f32 %v1895, %v1923
    %v1925 = vrot.slane %v1924, 2
    %v1926 = vadd.f32 %v1924, %v1925
    %v1927 = vrot.slane %v1926, 1
    %v1928 = vadd.f32 %v1926, %v1927
    %v1929 = vrot.slane %v1896, 4
    %v1930 = vadd.f32 %v1896, %v1929
    %v1931 = vrot.slane %v1930, 2
    %v1932 = vadd.f32 %v1930, %v1931
    %v1933 = vrot.slane %v1932, 1
    %v1934 = vadd.f32 %v1932, %v1933
    %v1935 = vrot.slane %v1897, 4
    %v1936 = vadd.f32 %v1897, %v1935
    %v1937 = vrot.slane %v1936, 2
    %v1938 = vadd.f32 %v1936, %v1937
    %v1939 = vrot.slane %v1938, 1
    %v1940 = vadd.f32 %v1938, %v1939
    %v1941 = vrot.slane %v1898, 4
    %v1942 = vadd.f32 %v1898, %v1941
    %v1943 = vrot.slane %v1942, 2
    %v1944 = vadd.f32 %v1942, %v1943
    %v1945 = vrot.slane %v1944, 1
    %v1946 = vadd.f32 %v1944, %v1945
    %v1947 = vrcp.pop 8.0
    %v1948 = vmul.f32 %v1904, %v1947
    %v1949 = vmul.f32 %v1910, %v1947
    %v1950 = vmul.f32 %v1916, %v1947
    %v1951 = vmul.f32 %v1922, %v1947
    %v1952 = vmul.f32 %v1928, %v1947
    %v1953 = vmul.f32 %v1934, %v1947
    %v1954 = vmul.f32 %v1940, %v1947
    %v1955 = vmul.f32 %v1946, %v1947
    %v1956 = vpack.c.bf16 %v1948, %v1948
    %v1957 = vpack.c.bf16 %v1949, %v1949
    %v1958 = vpack.c.bf16 %v1950, %v1950
    %v1959 = vpack.c.bf16 %v1951, %v1951
    %v1960 = vpack.c.bf16 %v1952, %v1952
    %v1961 = vpack.c.bf16 %v1953, %v1953
    %v1962 = vpack.c.bf16 %v1954, %v1954
    %v1963 = vpack.c.bf16 %v1955, %v1955
    %v1964 = vld [vmem:[#allocation10] sm:$0xff]
    %v1965 = vld [vmem:[#allocation10 + $0x8] sm:$0xff]
    %v1966 = vld [vmem:[#allocation10 + $0x10] sm:$0xff]
    %v1967 = vld [vmem:[#allocation10 + $0x18] sm:$0xff]
    %v1968 = vld [vmem:[#allocation10 + $0x20] sm:$0xff]
    %v1969 = vld [vmem:[#allocation10 + $0x28] sm:$0xff]
    %v1970 = vld [vmem:[#allocation10 + $0x30] sm:$0xff]
    %v1971 = vld [vmem:[#allocation10 + $0x38] sm:$0xff]
    %v1972 = vld [vmem:[#allocation10 + $0x40] sm:$0xff]
    %v1973 = vld [vmem:[#allocation10 + $0x48] sm:$0xff]
    %v1974 = vld [vmem:[#allocation10 + $0x50] sm:$0xff]
    %v1975 = vld [vmem:[#allocation10 + $0x58] sm:$0xff]
    %v1976 = vld [vmem:[#allocation10 + $0x60] sm:$0xff]
    %v1977 = vld [vmem:[#allocation10 + $0x68] sm:$0xff]
    %v1978 = vld [vmem:[#allocation10 + $0x70] sm:$0xff]
    %v1979 = vld [vmem:[#allocation10 + $0x78] sm:$0xff]
    %v1980 = vld [vmem:[#allocation10 + $0x80] sm:$0xff]
    %v1981 = vld [vmem:[#allocation10 + $0x88] sm:$0xff]
    %v1982 = vld [vmem:[#allocation10 + $0x90] sm:$0xff]
    %v1983 = vld [vmem:[#allocation10 + $0x98] sm:$0xff]
    %v1984 = vld [vmem:[#allocation10 + $0xa0] sm:$0xff]
    %v1985 = vld [vmem:[#allocation10 + $0xa8] sm:$0xff]
    %v1986 = vld [vmem:[#allocation10 + $0xb0] sm:$0xff]
    %v1987 = vld [vmem:[#allocation10 + $0xb8] sm:$0xff]
    %v1988 = vld [vmem:[#allocation10 + $0xc0] sm:$0xff]
    %v1989 = vld [vmem:[#allocation10 + $0xc8] sm:$0xff]
    %v1990 = vld [vmem:[#allocation10 + $0xd0] sm:$0xff]
    %v1991 = vld [vmem:[#allocation10 + $0xd8] sm:$0xff]
    %v1992 = vld [vmem:[#allocation10 + $0xe0] sm:$0xff]
    %v1993 = vld [vmem:[#allocation10 + $0xe8] sm:$0xff]
    %v1994 = vld [vmem:[#allocation10 + $0xf0] sm:$0xff]
    %v1995 = vld [vmem:[#allocation10 + $0xf8] sm:$0xff]
    %v1996 = vld [vmem:[#allocation10 + $0x100] sm:$0xff]
    %v1997 = vld [vmem:[#allocation10 + $0x108] sm:$0xff]
    %v1998 = vld [vmem:[#allocation10 + $0x110] sm:$0xff]
    %v1999 = vld [vmem:[#allocation10 + $0x118] sm:$0xff]
    %v2000 = vld [vmem:[#allocation10 + $0x120] sm:$0xff]
    %v2001 = vld [vmem:[#allocation10 + $0x128] sm:$0xff]
    %v2002 = vld [vmem:[#allocation10 + $0x130] sm:$0xff]
    %v2003 = vld [vmem:[#allocation10 + $0x138] sm:$0xff]
    %v2004 = vld [vmem:[#allocation10 + $0x140] sm:$0xff]
    %v2005 = vld [vmem:[#allocation10 + $0x148] sm:$0xff]
    %v2006 = vld [vmem:[#allocation10 + $0x150] sm:$0xff]
    %v2007 = vld [vmem:[#allocation10 + $0x158] sm:$0xff]
    %v2008 = vld [vmem:[#allocation10 + $0x160] sm:$0xff]
    %v2009 = vld [vmem:[#allocation10 + $0x168] sm:$0xff]
    %v2010 = vld [vmem:[#allocation10 + $0x170] sm:$0xff]
    %v2011 = vld [vmem:[#allocation10 + $0x178] sm:$0xff]
    %v2012 = vld [vmem:[#allocation10 + $0x180] sm:$0xff]
    %v2013 = vld [vmem:[#allocation10 + $0x188] sm:$0xff]
    %v2014 = vld [vmem:[#allocation10 + $0x190] sm:$0xff]
    %v2015 = vld [vmem:[#allocation10 + $0x198] sm:$0xff]
    %v2016 = vld [vmem:[#allocation10 + $0x1a0] sm:$0xff]
    %v2017 = vld [vmem:[#allocation10 + $0x1a8] sm:$0xff]
    %v2018 = vld [vmem:[#allocation10 + $0x1b0] sm:$0xff]
    %v2019 = vld [vmem:[#allocation10 + $0x1b8] sm:$0xff]
    %v2020 = vld [vmem:[#allocation10 + $0x1c0] sm:$0xff]
    %v2021 = vld [vmem:[#allocation10 + $0x1c8] sm:$0xff]
    %v2022 = vld [vmem:[#allocation10 + $0x1d0] sm:$0xff]
    %v2023 = vld [vmem:[#allocation10 + $0x1d8] sm:$0xff]
    %v2024 = vld [vmem:[#allocation10 + $0x1e0] sm:$0xff]
    %v2025 = vld [vmem:[#allocation10 + $0x1e8] sm:$0xff]
    %v2026 = vld [vmem:[#allocation10 + $0x1f0] sm:$0xff]
    %v2027 = vld [vmem:[#allocation10 + $0x1f8] sm:$0xff]
    %v2028 = vld [vmem:[#allocation10 + $0x200] sm:$0xff]
    %v2029 = vld [vmem:[#allocation10 + $0x208] sm:$0xff]
    %v2030 = vld [vmem:[#allocation10 + $0x210] sm:$0xff]
    %v2031 = vld [vmem:[#allocation10 + $0x218] sm:$0xff]
    %v2032 = vld [vmem:[#allocation10 + $0x220] sm:$0xff]
    %v2033 = vld [vmem:[#allocation10 + $0x228] sm:$0xff]
    %v2034 = vld [vmem:[#allocation10 + $0x230] sm:$0xff]
    %v2035 = vld [vmem:[#allocation10 + $0x238] sm:$0xff]
    %v2036 = vld [vmem:[#allocation10 + $0x240] sm:$0xff]
    %v2037 = vld [vmem:[#allocation10 + $0x248] sm:$0xff]
    %v2038 = vld [vmem:[#allocation10 + $0x250] sm:$0xff]
    %v2039 = vld [vmem:[#allocation10 + $0x258] sm:$0xff]
    %v2040 = vld [vmem:[#allocation10 + $0x260] sm:$0xff]
    %v2041 = vld [vmem:[#allocation10 + $0x268] sm:$0xff]
    %v2042 = vld [vmem:[#allocation10 + $0x270] sm:$0xff]
    %v2043 = vld [vmem:[#allocation10 + $0x278] sm:$0xff]
    %v2044 = vld [vmem:[#allocation10 + $0x280] sm:$0xff]
    %v2045 = vld [vmem:[#allocation10 + $0x288] sm:$0xff]
    %v2046 = vld [vmem:[#allocation10 + $0x290] sm:$0xff]
    %v2047 = vld [vmem:[#allocation10 + $0x298] sm:$0xff]
    %v2048 = vld [vmem:[#allocation10 + $0x2a0] sm:$0xff]
    %v2049 = vld [vmem:[#allocation10 + $0x2a8] sm:$0xff]
    %v2050 = vld [vmem:[#allocation10 + $0x2b0] sm:$0xff]
    %v2051 = vld [vmem:[#allocation10 + $0x2b8] sm:$0xff]
    %v2052 = vld [vmem:[#allocation10 + $0x2c0] sm:$0xff]
    %v2053 = vld [vmem:[#allocation10 + $0x2c8] sm:$0xff]
    %v2054 = vld [vmem:[#allocation10 + $0x2d0] sm:$0xff]
    %v2055 = vld [vmem:[#allocation10 + $0x2d8] sm:$0xff]
    %v2056 = vld [vmem:[#allocation10 + $0x2e0] sm:$0xff]
    %v2057 = vld [vmem:[#allocation10 + $0x2e8] sm:$0xff]
    %v2058 = vld [vmem:[#allocation10 + $0x2f0] sm:$0xff]
    %v2059 = vld [vmem:[#allocation10 + $0x2f8] sm:$0xff]
    %v2060 = vld [vmem:[#allocation10 + $0x300] sm:$0xff]
    %v2061 = vld [vmem:[#allocation10 + $0x308] sm:$0xff]
    %v2062 = vld [vmem:[#allocation10 + $0x310] sm:$0xff]
    %v2063 = vld [vmem:[#allocation10 + $0x318] sm:$0xff]
    %v2064 = vld [vmem:[#allocation10 + $0x320] sm:$0xff]
    %v2065 = vld [vmem:[#allocation10 + $0x328] sm:$0xff]
    %v2066 = vld [vmem:[#allocation10 + $0x330] sm:$0xff]
    %v2067 = vld [vmem:[#allocation10 + $0x338] sm:$0xff]
    %v2068 = vld [vmem:[#allocation10 + $0x340] sm:$0xff]
    %v2069 = vld [vmem:[#allocation10 + $0x348] sm:$0xff]
    %v2070 = vld [vmem:[#allocation10 + $0x350] sm:$0xff]
    %v2071 = vld [vmem:[#allocation10 + $0x358] sm:$0xff]
    %v2072 = vld [vmem:[#allocation10 + $0x360] sm:$0xff]
    %v2073 = vld [vmem:[#allocation10 + $0x368] sm:$0xff]
    %v2074 = vld [vmem:[#allocation10 + $0x370] sm:$0xff]
    %v2075 = vld [vmem:[#allocation10 + $0x378] sm:$0xff]
    %v2076 = vld [vmem:[#allocation10 + $0x380] sm:$0xff]
    %v2077 = vld [vmem:[#allocation10 + $0x388] sm:$0xff]
    %v2078 = vld [vmem:[#allocation10 + $0x390] sm:$0xff]
    %v2079 = vld [vmem:[#allocation10 + $0x398] sm:$0xff]
    %v2080 = vld [vmem:[#allocation10 + $0x3a0] sm:$0xff]
    %v2081 = vld [vmem:[#allocation10 + $0x3a8] sm:$0xff]
    %v2082 = vld [vmem:[#allocation10 + $0x3b0] sm:$0xff]
    %v2083 = vld [vmem:[#allocation10 + $0x3b8] sm:$0xff]
    %v2084 = vld [vmem:[#allocation10 + $0x3c0] sm:$0xff]
    %v2085 = vld [vmem:[#allocation10 + $0x3c8] sm:$0xff]
    %v2086 = vld [vmem:[#allocation10 + $0x3d0] sm:$0xff]
    %v2087 = vld [vmem:[#allocation10 + $0x3d8] sm:$0xff]
    %v2088 = vld [vmem:[#allocation10 + $0x3e0] sm:$0xff]
    %v2089 = vld [vmem:[#allocation10 + $0x3e8] sm:$0xff]
    %v2090 = vld [vmem:[#allocation10 + $0x3f0] sm:$0xff]
    %v2091 = vld [vmem:[#allocation10 + $0x3f8] sm:$0xff]
    %v2092 = vld [vmem:[#allocation10 + $0x400] sm:$0xff]
    %v2093 = vld [vmem:[#allocation10 + $0x408] sm:$0xff]
    %v2094 = vld [vmem:[#allocation10 + $0x410] sm:$0xff]
    %v2095 = vld [vmem:[#allocation10 + $0x418] sm:$0xff]
    %v2096 = vld [vmem:[#allocation10 + $0x420] sm:$0xff]
    %v2097 = vld [vmem:[#allocation10 + $0x428] sm:$0xff]
    %v2098 = vld [vmem:[#allocation10 + $0x430] sm:$0xff]
    %v2099 = vld [vmem:[#allocation10 + $0x438] sm:$0xff]
    %v2100 = vld [vmem:[#allocation10 + $0x440] sm:$0xff]
    %v2101 = vld [vmem:[#allocation10 + $0x448] sm:$0xff]
    %v2102 = vld [vmem:[#allocation10 + $0x450] sm:$0xff]
    %v2103 = vld [vmem:[#allocation10 + $0x458] sm:$0xff]
    %v2104 = vld [vmem:[#allocation10 + $0x460] sm:$0xff]
    %v2105 = vld [vmem:[#allocation10 + $0x468] sm:$0xff]
    %v2106 = vld [vmem:[#allocation10 + $0x470] sm:$0xff]
    %v2107 = vld [vmem:[#allocation10 + $0x478] sm:$0xff]
    %v2108 = vld [vmem:[#allocation10 + $0x480] sm:$0xff]
    %v2109 = vld [vmem:[#allocation10 + $0x488] sm:$0xff]
    %v2110 = vld [vmem:[#allocation10 + $0x490] sm:$0xff]
    %v2111 = vld [vmem:[#allocation10 + $0x498] sm:$0xff]
    %v2112 = vld [vmem:[#allocation10 + $0x4a0] sm:$0xff]
    %v2113 = vld [vmem:[#allocation10 + $0x4a8] sm:$0xff]
    %v2114 = vld [vmem:[#allocation10 + $0x4b0] sm:$0xff]
    %v2115 = vld [vmem:[#allocation10 + $0x4b8] sm:$0xff]
    %v2116 = vld [vmem:[#allocation10 + $0x4c0] sm:$0xff]
    %v2117 = vld [vmem:[#allocation10 + $0x4c8] sm:$0xff]
    %v2118 = vld [vmem:[#allocation10 + $0x4d0] sm:$0xff]
    %v2119 = vld [vmem:[#allocation10 + $0x4d8] sm:$0xff]
    %v2120 = vld [vmem:[#allocation10 + $0x4e0] sm:$0xff]
    %v2121 = vld [vmem:[#allocation10 + $0x4e8] sm:$0xff]
    %v2122 = vld [vmem:[#allocation10 + $0x4f0] sm:$0xff]
    %v2123 = vld [vmem:[#allocation10 + $0x4f8] sm:$0xff]
    %v2124 = vld [vmem:[#allocation10 + $0x500] sm:$0xff]
    %v2125 = vld [vmem:[#allocation10 + $0x508] sm:$0xff]
    %v2126 = vld [vmem:[#allocation10 + $0x510] sm:$0xff]
    %v2127 = vld [vmem:[#allocation10 + $0x518] sm:$0xff]
    %v2128 = vld [vmem:[#allocation10 + $0x520] sm:$0xff]
    %v2129 = vld [vmem:[#allocation10 + $0x528] sm:$0xff]
    %v2130 = vld [vmem:[#allocation10 + $0x530] sm:$0xff]
    %v2131 = vld [vmem:[#allocation10 + $0x538] sm:$0xff]
    %v2132 = vld [vmem:[#allocation10 + $0x540] sm:$0xff]
    %v2133 = vld [vmem:[#allocation10 + $0x548] sm:$0xff]
    %v2134 = vld [vmem:[#allocation10 + $0x550] sm:$0xff]
    %v2135 = vld [vmem:[#allocation10 + $0x558] sm:$0xff]
    %v2136 = vld [vmem:[#allocation10 + $0x560] sm:$0xff]
    %v2137 = vld [vmem:[#allocation10 + $0x568] sm:$0xff]
    %v2138 = vld [vmem:[#allocation10 + $0x570] sm:$0xff]
    %v2139 = vld [vmem:[#allocation10 + $0x578] sm:$0xff]
    %v2140 = vld [vmem:[#allocation10 + $0x580] sm:$0xff]
    %v2141 = vld [vmem:[#allocation10 + $0x588] sm:$0xff]
    %v2142 = vld [vmem:[#allocation10 + $0x590] sm:$0xff]
    %v2143 = vld [vmem:[#allocation10 + $0x598] sm:$0xff]
    %v2144 = vld [vmem:[#allocation10 + $0x5a0] sm:$0xff]
    %v2145 = vld [vmem:[#allocation10 + $0x5a8] sm:$0xff]
    %v2146 = vld [vmem:[#allocation10 + $0x5b0] sm:$0xff]
    %v2147 = vld [vmem:[#allocation10 + $0x5b8] sm:$0xff]
    %v2148 = vld [vmem:[#allocation10 + $0x5c0] sm:$0xff]
    %v2149 = vld [vmem:[#allocation10 + $0x5c8] sm:$0xff]
    %v2150 = vld [vmem:[#allocation10 + $0x5d0] sm:$0xff]
    %v2151 = vld [vmem:[#allocation10 + $0x5d8] sm:$0xff]
    %v2152 = vld [vmem:[#allocation10 + $0x5e0] sm:$0xff]
    %v2153 = vld [vmem:[#allocation10 + $0x5e8] sm:$0xff]
    %v2154 = vld [vmem:[#allocation10 + $0x5f0] sm:$0xff]
    %v2155 = vld [vmem:[#allocation10 + $0x5f8] sm:$0xff]
    %v2156 = vld [vmem:[#allocation10 + $0x600] sm:$0xff]
    %v2157 = vld [vmem:[#allocation10 + $0x608] sm:$0xff]
    %v2158 = vld [vmem:[#allocation10 + $0x610] sm:$0xff]
    %v2159 = vld [vmem:[#allocation10 + $0x618] sm:$0xff]
    %v2160 = vld [vmem:[#allocation10 + $0x620] sm:$0xff]
    %v2161 = vld [vmem:[#allocation10 + $0x628] sm:$0xff]
    %v2162 = vld [vmem:[#allocation10 + $0x630] sm:$0xff]
    %v2163 = vld [vmem:[#allocation10 + $0x638] sm:$0xff]
    %v2164 = vld [vmem:[#allocation10 + $0x640] sm:$0xff]
    %v2165 = vld [vmem:[#allocation10 + $0x648] sm:$0xff]
    %v2166 = vld [vmem:[#allocation10 + $0x650] sm:$0xff]
    %v2167 = vld [vmem:[#allocation10 + $0x658] sm:$0xff]
    %v2168 = vld [vmem:[#allocation10 + $0x660] sm:$0xff]
    %v2169 = vld [vmem:[#allocation10 + $0x668] sm:$0xff]
    %v2170 = vld [vmem:[#allocation10 + $0x670] sm:$0xff]
    %v2171 = vld [vmem:[#allocation10 + $0x678] sm:$0xff]
    %v2172 = vld [vmem:[#allocation10 + $0x680] sm:$0xff]
    %v2173 = vld [vmem:[#allocation10 + $0x688] sm:$0xff]
    %v2174 = vld [vmem:[#allocation10 + $0x690] sm:$0xff]
    %v2175 = vld [vmem:[#allocation10 + $0x698] sm:$0xff]
    %v2176 = vld [vmem:[#allocation10 + $0x6a0] sm:$0xff]
    %v2177 = vld [vmem:[#allocation10 + $0x6a8] sm:$0xff]
    %v2178 = vld [vmem:[#allocation10 + $0x6b0] sm:$0xff]
    %v2179 = vld [vmem:[#allocation10 + $0x6b8] sm:$0xff]
    %v2180 = vld [vmem:[#allocation10 + $0x6c0] sm:$0xff]
    %v2181 = vld [vmem:[#allocation10 + $0x6c8] sm:$0xff]
    %v2182 = vld [vmem:[#allocation10 + $0x6d0] sm:$0xff]
    %v2183 = vld [vmem:[#allocation10 + $0x6d8] sm:$0xff]
    %v2184 = vld [vmem:[#allocation10 + $0x6e0] sm:$0xff]
    %v2185 = vld [vmem:[#allocation10 + $0x6e8] sm:$0xff]
    %v2186 = vld [vmem:[#allocation10 + $0x6f0] sm:$0xff]
    %v2187 = vld [vmem:[#allocation10 + $0x6f8] sm:$0xff]
    %v2188 = vld [vmem:[#allocation10 + $0x700] sm:$0xff]
    %v2189 = vld [vmem:[#allocation10 + $0x708] sm:$0xff]
    %v2190 = vld [vmem:[#allocation10 + $0x710] sm:$0xff]
    %v2191 = vld [vmem:[#allocation10 + $0x718] sm:$0xff]
    %v2192 = vld [vmem:[#allocation10 + $0x720] sm:$0xff]
    %v2193 = vld [vmem:[#allocation10 + $0x728] sm:$0xff]
    %v2194 = vld [vmem:[#allocation10 + $0x730] sm:$0xff]
    %v2195 = vld [vmem:[#allocation10 + $0x738] sm:$0xff]
    %v2196 = vld [vmem:[#allocation10 + $0x740] sm:$0xff]
    %v2197 = vld [vmem:[#allocation10 + $0x748] sm:$0xff]
    %v2198 = vld [vmem:[#allocation10 + $0x750] sm:$0xff]
    %v2199 = vld [vmem:[#allocation10 + $0x758] sm:$0xff]
    %v2200 = vld [vmem:[#allocation10 + $0x760] sm:$0xff]
    %v2201 = vld [vmem:[#allocation10 + $0x768] sm:$0xff]
    %v2202 = vld [vmem:[#allocation10 + $0x770] sm:$0xff]
    %v2203 = vld [vmem:[#allocation10 + $0x778] sm:$0xff]
    %v2204 = vld [vmem:[#allocation10 + $0x780] sm:$0xff]
    %v2205 = vld [vmem:[#allocation10 + $0x788] sm:$0xff]
    %v2206 = vld [vmem:[#allocation10 + $0x790] sm:$0xff]
    %v2207 = vld [vmem:[#allocation10 + $0x798] sm:$0xff]
    %v2208 = vld [vmem:[#allocation10 + $0x7a0] sm:$0xff]
    %v2209 = vld [vmem:[#allocation10 + $0x7a8] sm:$0xff]
    %v2210 = vld [vmem:[#allocation10 + $0x7b0] sm:$0xff]
    %v2211 = vld [vmem:[#allocation10 + $0x7b8] sm:$0xff]
    %v2212 = vld [vmem:[#allocation10 + $0x7c0] sm:$0xff]
    %v2213 = vld [vmem:[#allocation10 + $0x7c8] sm:$0xff]
    %v2214 = vld [vmem:[#allocation10 + $0x7d0] sm:$0xff]
    %v2215 = vld [vmem:[#allocation10 + $0x7d8] sm:$0xff]
    %v2216 = vld [vmem:[#allocation10 + $0x7e0] sm:$0xff]
    %v2217 = vld [vmem:[#allocation10 + $0x7e8] sm:$0xff]
    %v2218 = vld [vmem:[#allocation10 + $0x7f0] sm:$0xff]
    %v2219 = vld [vmem:[#allocation10 + $0x7f8] sm:$0xff]
    %v2220 = vld [vmem:[#allocation10 + $0x800] sm:$0xff]
    %v2221 = vld [vmem:[#allocation10 + $0x808] sm:$0xff]
    %v2222 = vld [vmem:[#allocation10 + $0x810] sm:$0xff]
    %v2223 = vld [vmem:[#allocation10 + $0x818] sm:$0xff]
    %v2224 = vld [vmem:[#allocation10 + $0x820] sm:$0xff]
    %v2225 = vld [vmem:[#allocation10 + $0x828] sm:$0xff]
    %v2226 = vld [vmem:[#allocation10 + $0x830] sm:$0xff]
    %v2227 = vld [vmem:[#allocation10 + $0x838] sm:$0xff]
    %v2228 = vld [vmem:[#allocation10 + $0x840] sm:$0xff]
    %v2229 = vld [vmem:[#allocation10 + $0x848] sm:$0xff]
    %v2230 = vld [vmem:[#allocation10 + $0x850] sm:$0xff]
    %v2231 = vld [vmem:[#allocation10 + $0x858] sm:$0xff]
    %v2232 = vld [vmem:[#allocation10 + $0x860] sm:$0xff]
    %v2233 = vld [vmem:[#allocation10 + $0x868] sm:$0xff]
    %v2234 = vld [vmem:[#allocation10 + $0x870] sm:$0xff]
    %v2235 = vld [vmem:[#allocation10 + $0x878] sm:$0xff]
    %v2236 = vld [vmem:[#allocation10 + $0x880] sm:$0xff]
    %v2237 = vld [vmem:[#allocation10 + $0x888] sm:$0xff]
    %v2238 = vld [vmem:[#allocation10 + $0x890] sm:$0xff]
    %v2239 = vld [vmem:[#allocation10 + $0x898] sm:$0xff]
    %v2240 = vld [vmem:[#allocation10 + $0x8a0] sm:$0xff]
    %v2241 = vld [vmem:[#allocation10 + $0x8a8] sm:$0xff]
    %v2242 = vld [vmem:[#allocation10 + $0x8b0] sm:$0xff]
    %v2243 = vld [vmem:[#allocation10 + $0x8b8] sm:$0xff]
    %v2244 = vld [vmem:[#allocation10 + $0x8c0] sm:$0xff]
    %v2245 = vld [vmem:[#allocation10 + $0x8c8] sm:$0xff]
    %v2246 = vld [vmem:[#allocation10 + $0x8d0] sm:$0xff]
    %v2247 = vld [vmem:[#allocation10 + $0x8d8] sm:$0xff]
    %v2248 = vld [vmem:[#allocation10 + $0x8e0] sm:$0xff]
    %v2249 = vld [vmem:[#allocation10 + $0x8e8] sm:$0xff]
    %v2250 = vld [vmem:[#allocation10 + $0x8f0] sm:$0xff]
    %v2251 = vld [vmem:[#allocation10 + $0x8f8] sm:$0xff]
    %v2252 = vld [vmem:[#allocation10 + $0x900] sm:$0xff]
    %v2253 = vld [vmem:[#allocation10 + $0x908] sm:$0xff]
    %v2254 = vld [vmem:[#allocation10 + $0x910] sm:$0xff]
    %v2255 = vld [vmem:[#allocation10 + $0x918] sm:$0xff]
    %v2256 = vld [vmem:[#allocation10 + $0x920] sm:$0xff]
    %v2257 = vld [vmem:[#allocation10 + $0x928] sm:$0xff]
    %v2258 = vld [vmem:[#allocation10 + $0x930] sm:$0xff]
    %v2259 = vld [vmem:[#allocation10 + $0x938] sm:$0xff]
    %v2260 = vld [vmem:[#allocation10 + $0x940] sm:$0xff]
    %v2261 = vld [vmem:[#allocation10 + $0x948] sm:$0xff]
    %v2262 = vld [vmem:[#allocation10 + $0x950] sm:$0xff]
    %v2263 = vld [vmem:[#allocation10 + $0x958] sm:$0xff]
    %v2264 = vld [vmem:[#allocation10 + $0x960] sm:$0xff]
    %v2265 = vld [vmem:[#allocation10 + $0x968] sm:$0xff]
    %v2266 = vld [vmem:[#allocation10 + $0x970] sm:$0xff]
    %v2267 = vld [vmem:[#allocation10 + $0x978] sm:$0xff]
    %v2268 = vld [vmem:[#allocation10 + $0x980] sm:$0xff]
    %v2269 = vld [vmem:[#allocation10 + $0x988] sm:$0xff]
    %v2270 = vld [vmem:[#allocation10 + $0x990] sm:$0xff]
    %v2271 = vld [vmem:[#allocation10 + $0x998] sm:$0xff]
    %v2272 = vld [vmem:[#allocation10 + $0x9a0] sm:$0xff]
    %v2273 = vld [vmem:[#allocation10 + $0x9a8] sm:$0xff]
    %v2274 = vld [vmem:[#allocation10 + $0x9b0] sm:$0xff]
    %v2275 = vld [vmem:[#allocation10 + $0x9b8] sm:$0xff]
    %v2276 = vld [vmem:[#allocation10 + $0x9c0] sm:$0xff]
    %v2277 = vld [vmem:[#allocation10 + $0x9c8] sm:$0xff]
    %v2278 = vld [vmem:[#allocation10 + $0x9d0] sm:$0xff]
    %v2279 = vld [vmem:[#allocation10 + $0x9d8] sm:$0xff]
    %v2280 = vld [vmem:[#allocation10 + $0x9e0] sm:$0xff]
    %v2281 = vld [vmem:[#allocation10 + $0x9e8] sm:$0xff]
    %v2282 = vld [vmem:[#allocation10 + $0x9f0] sm:$0xff]
    %v2283 = vld [vmem:[#allocation10 + $0x9f8] sm:$0xff]
    %v2284 = vld [vmem:[#allocation10 + $0xa00] sm:$0xff]
    %v2285 = vld [vmem:[#allocation10 + $0xa08] sm:$0xff]
    %v2286 = vld [vmem:[#allocation10 + $0xa10] sm:$0xff]
    %v2287 = vld [vmem:[#allocation10 + $0xa18] sm:$0xff]
    %v2288 = vld [vmem:[#allocation10 + $0xa20] sm:$0xff]
    %v2289 = vld [vmem:[#allocation10 + $0xa28] sm:$0xff]
    %v2290 = vld [vmem:[#allocation10 + $0xa30] sm:$0xff]
    %v2291 = vld [vmem:[#allocation10 + $0xa38] sm:$0xff]
    %v2292 = vld [vmem:[#allocation10 + $0xa40] sm:$0xff]
    %v2293 = vld [vmem:[#allocation10 + $0xa48] sm:$0xff]
    %v2294 = vld [vmem:[#allocation10 + $0xa50] sm:$0xff]
    %v2295 = vld [vmem:[#allocation10 + $0xa58] sm:$0xff]
    %v2296 = vld [vmem:[#allocation10 + $0xa60] sm:$0xff]
    %v2297 = vld [vmem:[#allocation10 + $0xa68] sm:$0xff]
    %v2298 = vld [vmem:[#allocation10 + $0xa70] sm:$0xff]
    %v2299 = vld [vmem:[#allocation10 + $0xa78] sm:$0xff]
    %v2300 = vld [vmem:[#allocation10 + $0xa80] sm:$0xff]
    %v2301 = vld [vmem:[#allocation10 + $0xa88] sm:$0xff]
    %v2302 = vld [vmem:[#allocation10 + $0xa90] sm:$0xff]
    %v2303 = vld [vmem:[#allocation10 + $0xa98] sm:$0xff]
    %v2304 = vld [vmem:[#allocation10 + $0xaa0] sm:$0xff]
    %v2305 = vld [vmem:[#allocation10 + $0xaa8] sm:$0xff]
    %v2306 = vld [vmem:[#allocation10 + $0xab0] sm:$0xff]
    %v2307 = vld [vmem:[#allocation10 + $0xab8] sm:$0xff]
    %v2308 = vld [vmem:[#allocation10 + $0xac0] sm:$0xff]
    %v2309 = vld [vmem:[#allocation10 + $0xac8] sm:$0xff]
    %v2310 = vld [vmem:[#allocation10 + $0xad0] sm:$0xff]
    %v2311 = vld [vmem:[#allocation10 + $0xad8] sm:$0xff]
    %v2312 = vld [vmem:[#allocation10 + $0xae0] sm:$0xff]
    %v2313 = vld [vmem:[#allocation10 + $0xae8] sm:$0xff]
    %v2314 = vld [vmem:[#allocation10 + $0xaf0] sm:$0xff]
    %v2315 = vld [vmem:[#allocation10 + $0xaf8] sm:$0xff]
    %v2316 = vld [vmem:[#allocation10 + $0xb00] sm:$0xff]
    %v2317 = vld [vmem:[#allocation10 + $0xb08] sm:$0xff]
    %v2318 = vld [vmem:[#allocation10 + $0xb10] sm:$0xff]
    %v2319 = vld [vmem:[#allocation10 + $0xb18] sm:$0xff]
    %v2320 = vld [vmem:[#allocation10 + $0xb20] sm:$0xff]
    %v2321 = vld [vmem:[#allocation10 + $0xb28] sm:$0xff]
    %v2322 = vld [vmem:[#allocation10 + $0xb30] sm:$0xff]
    %v2323 = vld [vmem:[#allocation10 + $0xb38] sm:$0xff]
    %v2324 = vld [vmem:[#allocation10 + $0xb40] sm:$0xff]
    %v2325 = vld [vmem:[#allocation10 + $0xb48] sm:$0xff]
    %v2326 = vld [vmem:[#allocation10 + $0xb50] sm:$0xff]
    %v2327 = vld [vmem:[#allocation10 + $0xb58] sm:$0xff]
    %v2328 = vld [vmem:[#allocation10 + $0xb60] sm:$0xff]
    %v2329 = vld [vmem:[#allocation10 + $0xb68] sm:$0xff]
    %v2330 = vld [vmem:[#allocation10 + $0xb70] sm:$0xff]
    %v2331 = vld [vmem:[#allocation10 + $0xb78] sm:$0xff]
    %v2332 = vld [vmem:[#allocation10 + $0xb80] sm:$0xff]
    %v2333 = vld [vmem:[#allocation10 + $0xb88] sm:$0xff]
    %v2334 = vld [vmem:[#allocation10 + $0xb90] sm:$0xff]
    %v2335 = vld [vmem:[#allocation10 + $0xb98] sm:$0xff]
    %v2336 = vld [vmem:[#allocation10 + $0xba0] sm:$0xff]
    %v2337 = vld [vmem:[#allocation10 + $0xba8] sm:$0xff]
    %v2338 = vld [vmem:[#allocation10 + $0xbb0] sm:$0xff]
    %v2339 = vld [vmem:[#allocation10 + $0xbb8] sm:$0xff]
    %v2340 = vld [vmem:[#allocation10 + $0xbc0] sm:$0xff]
    %v2341 = vld [vmem:[#allocation10 + $0xbc8] sm:$0xff]
    %v2342 = vld [vmem:[#allocation10 + $0xbd0] sm:$0xff]
    %v2343 = vld [vmem:[#allocation10 + $0xbd8] sm:$0xff]
    %v2344 = vld [vmem:[#allocation10 + $0xbe0] sm:$0xff]
    %v2345 = vld [vmem:[#allocation10 + $0xbe8] sm:$0xff]
    %v2346 = vld [vmem:[#allocation10 + $0xbf0] sm:$0xff]
    %v2347 = vld [vmem:[#allocation10 + $0xbf8] sm:$0xff]
    %v2348 = vld [vmem:[#allocation12] sm:$0xff]
    %v2349 = vld [vmem:[#allocation12 + $0x8] sm:$0xf]
    %v2352 = vlaneseq
    %v2353 = vshrl.u32 %v2352, 7
    %v2354 = vsub.s32 0, %v2353
    %v2355 = vrot.slane %v2348, %v2354
    %v2356 = vlaneseq
    %v2357 = vshrl.u32 %v2356, 7
    %v2358 = vsub.s32 1, %v2357
    %v2359 = vrot.slane %v2348, %v2358
    %v2360 = vlaneseq
    %v2361 = vshrl.u32 %v2360, 7
    %v2362 = vsub.s32 2, %v2361
    %v2363 = vrot.slane %v2348, %v2362
    %v2364 = vlaneseq
    %v2365 = vshrl.u32 %v2364, 7
    %v2366 = vsub.s32 3, %v2365
    %v2367 = vrot.slane %v2348, %v2366
    %v2368 = vlaneseq
    %v2369 = vshrl.u32 %v2368, 7
    %v2370 = vsub.s32 4, %v2369
    %v2371 = vrot.slane %v2348, %v2370
    %v2372 = vlaneseq
    %v2373 = vshrl.u32 %v2372, 7
    %v2374 = vsub.s32 5, %v2373
    %v2375 = vrot.slane %v2348, %v2374
    %v2376 = vlaneseq
    %v2377 = vshrl.u32 %v2376, 7
    %v2378 = vsub.s32 6, %v2377
    %v2379 = vrot.slane %v2348, %v2378
    %v2380 = vlaneseq
    %v2381 = vshrl.u32 %v2380, 7
    %v2382 = vsub.s32 7, %v2381
    %v2383 = vrot.slane %v2348, %v2382
    %v2384 = vlaneseq
    %v2385 = vshrl.u32 %v2384, 7
    %v2386 = vsub.s32 0, %v2385
    %v2387 = vrot.slane %v2349, %v2386
    %v2388 = vlaneseq
    %v2389 = vshrl.u32 %v2388, 7
    %v2390 = vsub.s32 1, %v2389
    %v2391 = vrot.slane %v2349, %v2390
    %v2392 = vlaneseq
    %v2393 = vshrl.u32 %v2392, 7
    %v2394 = vsub.s32 2, %v2393
    %v2395 = vrot.slane %v2349, %v2394
    %v2396 = vlaneseq
    %v2397 = vshrl.u32 %v2396, 7
    %v2398 = vsub.s32 3, %v2397
    %v2399 = vrot.slane %v2349, %v2398
    %v2420 = vunpack.c.l.b16 %v1956
    %v2421 = vunpack.c.l.b16 %v1957
    %v2422 = vunpack.c.l.b16 %v1958
    %v2423 = vunpack.c.l.b16 %v1959
    %v2424 = vunpack.c.l.b16 %v1960
    %v2425 = vunpack.c.l.b16 %v1961
    %v2426 = vunpack.c.l.b16 %v1962
    %v2427 = vunpack.c.l.b16 %v1963
    %vm2428 = vcmask 1041409
    %v2429 = vsel %vm2428, %v2424, %v2420
    %v2430 = vsel %vm2428, %v2425, %v2421
    %v2431 = vsel %vm2428, %v2426, %v2422
    %v2432 = vsel %vm2428, %v2427, %v2423
    %v2433 = vpack.c.b16 %v2429, %v2429
    %v2434 = vpack.c.b16 %v2430, %v2430
    %v2435 = vpack.c.b16 %v2431, %v2431
    %v2436 = vpack.c.b16 %v2432, %v2432
    %v2825 = vunpack.c.l.b16 %v1964
    %v2826 = vunpack.c.h.b16 %v1964
    %v2827 = vunpack.c.l.b16 %v1965
    %v2828 = vunpack.c.h.b16 %v1965
    %v2829 = vunpack.c.l.b16 %v1966
    %v2830 = vunpack.c.h.b16 %v1966
    %v2831 = vunpack.c.l.b16 %v1967
    %v2832 = vunpack.c.h.b16 %v1967
    %v2833 = vunpack.c.l.b16 %v1968
    %v2834 = vunpack.c.h.b16 %v1968
    %v2835 = vunpack.c.l.b16 %v1969
    %v2836 = vunpack.c.h.b16 %v1969
    %v2837 = vunpack.c.l.b16 %v1970
    %v2838 = vunpack.c.h.b16 %v1970
    %v2839 = vunpack.c.l.b16 %v1971
    %v2840 = vunpack.c.h.b16 %v1971
    %v2841 = vunpack.c.l.b16 %v1972
    %v2842 = vunpack.c.h.b16 %v1972
    %v2843 = vunpack.c.l.b16 %v1973
    %v2844 = vunpack.c.h.b16 %v1973
    %v2845 = vunpack.c.l.b16 %v1974
    %v2846 = vunpack.c.h.b16 %v1974
    %v2847 = vunpack.c.l.b16 %v1975
    %v2848 = vunpack.c.h.b16 %v1975
    %v2849 = vunpack.c.l.b16 %v1976
    %v2850 = vunpack.c.h.b16 %v1976
    %v2851 = vunpack.c.l.b16 %v1977
    %v2852 = vunpack.c.h.b16 %v1977
    %v2853 = vunpack.c.l.b16 %v1978
    %v2854 = vunpack.c.h.b16 %v1978
    %v2855 = vunpack.c.l.b16 %v1979
    %v2856 = vunpack.c.h.b16 %v1979
    %v2857 = vunpack.c.l.b16 %v1980
    %v2858 = vunpack.c.h.b16 %v1980
    %v2859 = vunpack.c.l.b16 %v1981
    %v2860 = vunpack.c.h.b16 %v1981
    %v2861 = vunpack.c.l.b16 %v1982
    %v2862 = vunpack.c.h.b16 %v1982
    %v2863 = vunpack.c.l.b16 %v1983
    %v2864 = vunpack.c.h.b16 %v1983
    %v2865 = vunpack.c.l.b16 %v1984
    %v2866 = vunpack.c.h.b16 %v1984
    %v2867 = vunpack.c.l.b16 %v1985
    %v2868 = vunpack.c.h.b16 %v1985
    %v2869 = vunpack.c.l.b16 %v1986
    %v2870 = vunpack.c.h.b16 %v1986
    %v2871 = vunpack.c.l.b16 %v1987
    %v2872 = vunpack.c.h.b16 %v1987
    %v2873 = vunpack.c.l.b16 %v1988
    %v2874 = vunpack.c.h.b16 %v1988
    %v2875 = vunpack.c.l.b16 %v1989
    %v2876 = vunpack.c.h.b16 %v1989
    %v2877 = vunpack.c.l.b16 %v1990
    %v2878 = vunpack.c.h.b16 %v1990
    %v2879 = vunpack.c.l.b16 %v1991
    %v2880 = vunpack.c.h.b16 %v1991
    %v2881 = vunpack.c.l.b16 %v1992
    %v2882 = vunpack.c.h.b16 %v1992
    %v2883 = vunpack.c.l.b16 %v1993
    %v2884 = vunpack.c.h.b16 %v1993
    %v2885 = vunpack.c.l.b16 %v1994
    %v2886 = vunpack.c.h.b16 %v1994
    %v2887 = vunpack.c.l.b16 %v1995
    %v2888 = vunpack.c.h.b16 %v1995
    %v2889 = vunpack.c.l.b16 %v1996
    %v2890 = vunpack.c.h.b16 %v1996
    %v2891 = vunpack.c.l.b16 %v1997
    %v2892 = vunpack.c.h.b16 %v1997
    %v2893 = vunpack.c.l.b16 %v1998
    %v2894 = vunpack.c.h.b16 %v1998
    %v2895 = vunpack.c.l.b16 %v1999
    %v2896 = vunpack.c.h.b16 %v1999
    %v2897 = vunpack.c.l.b16 %v2000
    %v2898 = vunpack.c.h.b16 %v2000
    %v2899 = vunpack.c.l.b16 %v2001
    %v2900 = vunpack.c.h.b16 %v2001
    %v2901 = vunpack.c.l.b16 %v2002
    %v2902 = vunpack.c.h.b16 %v2002
    %v2903 = vunpack.c.l.b16 %v2003
    %v2904 = vunpack.c.h.b16 %v2003
    %v2905 = vunpack.c.l.b16 %v2004
    %v2906 = vunpack.c.h.b16 %v2004
    %v2907 = vunpack.c.l.b16 %v2005
    %v2908 = vunpack.c.h.b16 %v2005
    %v2909 = vunpack.c.l.b16 %v2006
    %v2910 = vunpack.c.h.b16 %v2006
    %v2911 = vunpack.c.l.b16 %v2007
    %v2912 = vunpack.c.h.b16 %v2007
    %v2913 = vunpack.c.l.b16 %v2008
    %v2914 = vunpack.c.h.b16 %v2008
    %v2915 = vunpack.c.l.b16 %v2009
    %v2916 = vunpack.c.h.b16 %v2009
    %v2917 = vunpack.c.l.b16 %v2010
    %v2918 = vunpack.c.h.b16 %v2010
    %v2919 = vunpack.c.l.b16 %v2011
    %v2920 = vunpack.c.h.b16 %v2011
    %v2921 = vunpack.c.l.b16 %v2012
    %v2922 = vunpack.c.h.b16 %v2012
    %v2923 = vunpack.c.l.b16 %v2013
    %v2924 = vunpack.c.h.b16 %v2013
    %v2925 = vunpack.c.l.b16 %v2014
    %v2926 = vunpack.c.h.b16 %v2014
    %v2927 = vunpack.c.l.b16 %v2015
    %v2928 = vunpack.c.h.b16 %v2015
    %v2929 = vunpack.c.l.b16 %v2016
    %v2930 = vunpack.c.h.b16 %v2016
    %v2931 = vunpack.c.l.b16 %v2017
    %v2932 = vunpack.c.h.b16 %v2017
    %v2933 = vunpack.c.l.b16 %v2018
    %v2934 = vunpack.c.h.b16 %v2018
    %v2935 = vunpack.c.l.b16 %v2019
    %v2936 = vunpack.c.h.b16 %v2019
    %v2937 = vunpack.c.l.b16 %v2020
    %v2938 = vunpack.c.h.b16 %v2020
    %v2939 = vunpack.c.l.b16 %v2021
    %v2940 = vunpack.c.h.b16 %v2021
    %v2941 = vunpack.c.l.b16 %v2022
    %v2942 = vunpack.c.h.b16 %v2022
    %v2943 = vunpack.c.l.b16 %v2023
    %v2944 = vunpack.c.h.b16 %v2023
    %v2945 = vunpack.c.l.b16 %v2024
    %v2946 = vunpack.c.h.b16 %v2024
    %v2947 = vunpack.c.l.b16 %v2025
    %v2948 = vunpack.c.h.b16 %v2025
    %v2949 = vunpack.c.l.b16 %v2026
    %v2950 = vunpack.c.h.b16 %v2026
    %v2951 = vunpack.c.l.b16 %v2027
    %v2952 = vunpack.c.h.b16 %v2027
    %v2953 = vunpack.c.l.b16 %v2028
    %v2954 = vunpack.c.h.b16 %v2028
    %v2955 = vunpack.c.l.b16 %v2029
    %v2956 = vunpack.c.h.b16 %v2029
    %v2957 = vunpack.c.l.b16 %v2030
    %v2958 = vunpack.c.h.b16 %v2030
    %v2959 = vunpack.c.l.b16 %v2031
    %v2960 = vunpack.c.h.b16 %v2031
    %v2961 = vunpack.c.l.b16 %v2032
    %v2962 = vunpack.c.h.b16 %v2032
    %v2963 = vunpack.c.l.b16 %v2033
    %v2964 = vunpack.c.h.b16 %v2033
    %v2965 = vunpack.c.l.b16 %v2034
    %v2966 = vunpack.c.h.b16 %v2034
    %v2967 = vunpack.c.l.b16 %v2035
    %v2968 = vunpack.c.h.b16 %v2035
    %v2969 = vunpack.c.l.b16 %v2036
    %v2970 = vunpack.c.h.b16 %v2036
    %v2971 = vunpack.c.l.b16 %v2037
    %v2972 = vunpack.c.h.b16 %v2037
    %v2973 = vunpack.c.l.b16 %v2038
    %v2974 = vunpack.c.h.b16 %v2038
    %v2975 = vunpack.c.l.b16 %v2039
    %v2976 = vunpack.c.h.b16 %v2039
    %v2977 = vunpack.c.l.b16 %v2040
    %v2978 = vunpack.c.h.b16 %v2040
    %v2979 = vunpack.c.l.b16 %v2041
    %v2980 = vunpack.c.h.b16 %v2041
    %v2981 = vunpack.c.l.b16 %v2042
    %v2982 = vunpack.c.h.b16 %v2042
    %v2983 = vunpack.c.l.b16 %v2043
    %v2984 = vunpack.c.h.b16 %v2043
    %v2985 = vunpack.c.l.b16 %v2044
    %v2986 = vunpack.c.h.b16 %v2044
    %v2987 = vunpack.c.l.b16 %v2045
    %v2988 = vunpack.c.h.b16 %v2045
    %v2989 = vunpack.c.l.b16 %v2046
    %v2990 = vunpack.c.h.b16 %v2046
    %v2991 = vunpack.c.l.b16 %v2047
    %v2992 = vunpack.c.h.b16 %v2047
    %v2993 = vunpack.c.l.b16 %v2048
    %v2994 = vunpack.c.h.b16 %v2048
    %v2995 = vunpack.c.l.b16 %v2049
    %v2996 = vunpack.c.h.b16 %v2049
    %v2997 = vunpack.c.l.b16 %v2050
    %v2998 = vunpack.c.h.b16 %v2050
    %v2999 = vunpack.c.l.b16 %v2051
    %v3000 = vunpack.c.h.b16 %v2051
    %v3001 = vunpack.c.l.b16 %v2052
    %v3002 = vunpack.c.h.b16 %v2052
    %v3003 = vunpack.c.l.b16 %v2053
    %v3004 = vunpack.c.h.b16 %v2053
    %v3005 = vunpack.c.l.b16 %v2054
    %v3006 = vunpack.c.h.b16 %v2054
    %v3007 = vunpack.c.l.b16 %v2055
    %v3008 = vunpack.c.h.b16 %v2055
    %v3009 = vunpack.c.l.b16 %v2056
    %v3010 = vunpack.c.h.b16 %v2056
    %v3011 = vunpack.c.l.b16 %v2057
    %v3012 = vunpack.c.h.b16 %v2057
    %v3013 = vunpack.c.l.b16 %v2058
    %v3014 = vunpack.c.h.b16 %v2058
    %v3015 = vunpack.c.l.b16 %v2059
    %v3016 = vunpack.c.h.b16 %v2059
    %v3017 = vunpack.c.l.b16 %v2060
    %v3018 = vunpack.c.h.b16 %v2060
    %v3019 = vunpack.c.l.b16 %v2061
    %v3020 = vunpack.c.h.b16 %v2061
    %v3021 = vunpack.c.l.b16 %v2062
    %v3022 = vunpack.c.h.b16 %v2062
    %v3023 = vunpack.c.l.b16 %v2063
    %v3024 = vunpack.c.h.b16 %v2063
    %v3025 = vunpack.c.l.b16 %v2064
    %v3026 = vunpack.c.h.b16 %v2064
    %v3027 = vunpack.c.l.b16 %v2065
    %v3028 = vunpack.c.h.b16 %v2065
    %v3029 = vunpack.c.l.b16 %v2066
    %v3030 = vunpack.c.h.b16 %v2066
    %v3031 = vunpack.c.l.b16 %v2067
    %v3032 = vunpack.c.h.b16 %v2067
    %v3033 = vunpack.c.l.b16 %v2068
    %v3034 = vunpack.c.h.b16 %v2068
    %v3035 = vunpack.c.l.b16 %v2069
    %v3036 = vunpack.c.h.b16 %v2069
    %v3037 = vunpack.c.l.b16 %v2070
    %v3038 = vunpack.c.h.b16 %v2070
    %v3039 = vunpack.c.l.b16 %v2071
    %v3040 = vunpack.c.h.b16 %v2071
    %v3041 = vunpack.c.l.b16 %v2072
    %v3042 = vunpack.c.h.b16 %v2072
    %v3043 = vunpack.c.l.b16 %v2073
    %v3044 = vunpack.c.h.b16 %v2073
    %v3045 = vunpack.c.l.b16 %v2074
    %v3046 = vunpack.c.h.b16 %v2074
    %v3047 = vunpack.c.l.b16 %v2075
    %v3048 = vunpack.c.h.b16 %v2075
    %v3049 = vunpack.c.l.b16 %v2076
    %v3050 = vunpack.c.h.b16 %v2076
    %v3051 = vunpack.c.l.b16 %v2077
    %v3052 = vunpack.c.h.b16 %v2077
    %v3053 = vunpack.c.l.b16 %v2078
    %v3054 = vunpack.c.h.b16 %v2078
    %v3055 = vunpack.c.l.b16 %v2079
    %v3056 = vunpack.c.h.b16 %v2079
    %v3057 = vunpack.c.l.b16 %v2080
    %v3058 = vunpack.c.h.b16 %v2080
    %v3059 = vunpack.c.l.b16 %v2081
    %v3060 = vunpack.c.h.b16 %v2081
    %v3061 = vunpack.c.l.b16 %v2082
    %v3062 = vunpack.c.h.b16 %v2082
    %v3063 = vunpack.c.l.b16 %v2083
    %v3064 = vunpack.c.h.b16 %v2083
    %v3065 = vunpack.c.l.b16 %v2084
    %v3066 = vunpack.c.h.b16 %v2084
    %v3067 = vunpack.c.l.b16 %v2085
    %v3068 = vunpack.c.h.b16 %v2085
    %v3069 = vunpack.c.l.b16 %v2086
    %v3070 = vunpack.c.h.b16 %v2086
    %v3071 = vunpack.c.l.b16 %v2087
    %v3072 = vunpack.c.h.b16 %v2087
    %v3073 = vunpack.c.l.b16 %v2088
    %v3074 = vunpack.c.h.b16 %v2088
    %v3075 = vunpack.c.l.b16 %v2089
    %v3076 = vunpack.c.h.b16 %v2089
    %v3077 = vunpack.c.l.b16 %v2090
    %v3078 = vunpack.c.h.b16 %v2090
    %v3079 = vunpack.c.l.b16 %v2091
    %v3080 = vunpack.c.h.b16 %v2091
    %v3081 = vunpack.c.l.b16 %v2092
    %v3082 = vunpack.c.h.b16 %v2092
    %v3083 = vunpack.c.l.b16 %v2093
    %v3084 = vunpack.c.h.b16 %v2093
    %v3085 = vunpack.c.l.b16 %v2094
    %v3086 = vunpack.c.h.b16 %v2094
    %v3087 = vunpack.c.l.b16 %v2095
    %v3088 = vunpack.c.h.b16 %v2095
    %v3089 = vunpack.c.l.b16 %v2096
    %v3090 = vunpack.c.h.b16 %v2096
    %v3091 = vunpack.c.l.b16 %v2097
    %v3092 = vunpack.c.h.b16 %v2097
    %v3093 = vunpack.c.l.b16 %v2098
    %v3094 = vunpack.c.h.b16 %v2098
    %v3095 = vunpack.c.l.b16 %v2099
    %v3096 = vunpack.c.h.b16 %v2099
    %v3097 = vunpack.c.l.b16 %v2100
    %v3098 = vunpack.c.h.b16 %v2100
    %v3099 = vunpack.c.l.b16 %v2101
    %v3100 = vunpack.c.h.b16 %v2101
    %v3101 = vunpack.c.l.b16 %v2102
    %v3102 = vunpack.c.h.b16 %v2102
    %v3103 = vunpack.c.l.b16 %v2103
    %v3104 = vunpack.c.h.b16 %v2103
    %v3105 = vunpack.c.l.b16 %v2104
    %v3106 = vunpack.c.h.b16 %v2104
    %v3107 = vunpack.c.l.b16 %v2105
    %v3108 = vunpack.c.h.b16 %v2105
    %v3109 = vunpack.c.l.b16 %v2106
    %v3110 = vunpack.c.h.b16 %v2106
    %v3111 = vunpack.c.l.b16 %v2107
    %v3112 = vunpack.c.h.b16 %v2107
    %v3113 = vunpack.c.l.b16 %v2108
    %v3114 = vunpack.c.h.b16 %v2108
    %v3115 = vunpack.c.l.b16 %v2109
    %v3116 = vunpack.c.h.b16 %v2109
    %v3117 = vunpack.c.l.b16 %v2110
    %v3118 = vunpack.c.h.b16 %v2110
    %v3119 = vunpack.c.l.b16 %v2111
    %v3120 = vunpack.c.h.b16 %v2111
    %v3121 = vunpack.c.l.b16 %v2112
    %v3122 = vunpack.c.h.b16 %v2112
    %v3123 = vunpack.c.l.b16 %v2113
    %v3124 = vunpack.c.h.b16 %v2113
    %v3125 = vunpack.c.l.b16 %v2114
    %v3126 = vunpack.c.h.b16 %v2114
    %v3127 = vunpack.c.l.b16 %v2115
    %v3128 = vunpack.c.h.b16 %v2115
    %v3129 = vunpack.c.l.b16 %v2116
    %v3130 = vunpack.c.h.b16 %v2116
    %v3131 = vunpack.c.l.b16 %v2117
    %v3132 = vunpack.c.h.b16 %v2117
    %v3133 = vunpack.c.l.b16 %v2118
    %v3134 = vunpack.c.h.b16 %v2118
    %v3135 = vunpack.c.l.b16 %v2119
    %v3136 = vunpack.c.h.b16 %v2119
    %v3137 = vunpack.c.l.b16 %v2120
    %v3138 = vunpack.c.h.b16 %v2120
    %v3139 = vunpack.c.l.b16 %v2121
    %v3140 = vunpack.c.h.b16 %v2121
    %v3141 = vunpack.c.l.b16 %v2122
    %v3142 = vunpack.c.h.b16 %v2122
    %v3143 = vunpack.c.l.b16 %v2123
    %v3144 = vunpack.c.h.b16 %v2123
    %v3145 = vunpack.c.l.b16 %v2124
    %v3146 = vunpack.c.h.b16 %v2124
    %v3147 = vunpack.c.l.b16 %v2125
    %v3148 = vunpack.c.h.b16 %v2125
    %v3149 = vunpack.c.l.b16 %v2126
    %v3150 = vunpack.c.h.b16 %v2126
    %v3151 = vunpack.c.l.b16 %v2127
    %v3152 = vunpack.c.h.b16 %v2127
    %v3153 = vunpack.c.l.b16 %v2128
    %v3154 = vunpack.c.h.b16 %v2128
    %v3155 = vunpack.c.l.b16 %v2129
    %v3156 = vunpack.c.h.b16 %v2129
    %v3157 = vunpack.c.l.b16 %v2130
    %v3158 = vunpack.c.h.b16 %v2130
    %v3159 = vunpack.c.l.b16 %v2131
    %v3160 = vunpack.c.h.b16 %v2131
    %v3161 = vunpack.c.l.b16 %v2132
    %v3162 = vunpack.c.h.b16 %v2132
    %v3163 = vunpack.c.l.b16 %v2133
    %v3164 = vunpack.c.h.b16 %v2133
    %v3165 = vunpack.c.l.b16 %v2134
    %v3166 = vunpack.c.h.b16 %v2134
    %v3167 = vunpack.c.l.b16 %v2135
    %v3168 = vunpack.c.h.b16 %v2135
    %v3169 = vunpack.c.l.b16 %v2136
    %v3170 = vunpack.c.h.b16 %v2136
    %v3171 = vunpack.c.l.b16 %v2137
    %v3172 = vunpack.c.h.b16 %v2137
    %v3173 = vunpack.c.l.b16 %v2138
    %v3174 = vunpack.c.h.b16 %v2138
    %v3175 = vunpack.c.l.b16 %v2139
    %v3176 = vunpack.c.h.b16 %v2139
    %v3177 = vunpack.c.l.b16 %v2140
    %v3178 = vunpack.c.h.b16 %v2140
    %v3179 = vunpack.c.l.b16 %v2141
    %v3180 = vunpack.c.h.b16 %v2141
    %v3181 = vunpack.c.l.b16 %v2142
    %v3182 = vunpack.c.h.b16 %v2142
    %v3183 = vunpack.c.l.b16 %v2143
    %v3184 = vunpack.c.h.b16 %v2143
    %v3185 = vunpack.c.l.b16 %v2144
    %v3186 = vunpack.c.h.b16 %v2144
    %v3187 = vunpack.c.l.b16 %v2145
    %v3188 = vunpack.c.h.b16 %v2145
    %v3189 = vunpack.c.l.b16 %v2146
    %v3190 = vunpack.c.h.b16 %v2146
    %v3191 = vunpack.c.l.b16 %v2147
    %v3192 = vunpack.c.h.b16 %v2147
    %v3193 = vunpack.c.l.b16 %v2148
    %v3194 = vunpack.c.h.b16 %v2148
    %v3195 = vunpack.c.l.b16 %v2149
    %v3196 = vunpack.c.h.b16 %v2149
    %v3197 = vunpack.c.l.b16 %v2150
    %v3198 = vunpack.c.h.b16 %v2150
    %v3199 = vunpack.c.l.b16 %v2151
    %v3200 = vunpack.c.h.b16 %v2151
    %v3201 = vunpack.c.l.b16 %v2152
    %v3202 = vunpack.c.h.b16 %v2152
    %v3203 = vunpack.c.l.b16 %v2153
    %v3204 = vunpack.c.h.b16 %v2153
    %v3205 = vunpack.c.l.b16 %v2154
    %v3206 = vunpack.c.h.b16 %v2154
    %v3207 = vunpack.c.l.b16 %v2155
    %v3208 = vunpack.c.h.b16 %v2155
    %v3209 = vunpack.c.l.b16 %v2156
    %v3210 = vunpack.c.h.b16 %v2156
    %v3211 = vunpack.c.l.b16 %v2157
    %v3212 = vunpack.c.h.b16 %v2157
    %v3213 = vunpack.c.l.b16 %v2158
    %v3214 = vunpack.c.h.b16 %v2158
    %v3215 = vunpack.c.l.b16 %v2159
    %v3216 = vunpack.c.h.b16 %v2159
    %v3217 = vunpack.c.l.b16 %v2160
    %v3218 = vunpack.c.h.b16 %v2160
    %v3219 = vunpack.c.l.b16 %v2161
    %v3220 = vunpack.c.h.b16 %v2161
    %v3221 = vunpack.c.l.b16 %v2162
    %v3222 = vunpack.c.h.b16 %v2162
    %v3223 = vunpack.c.l.b16 %v2163
    %v3224 = vunpack.c.h.b16 %v2163
    %v3225 = vunpack.c.l.b16 %v2164
    %v3226 = vunpack.c.h.b16 %v2164
    %v3227 = vunpack.c.l.b16 %v2165
    %v3228 = vunpack.c.h.b16 %v2165
    %v3229 = vunpack.c.l.b16 %v2166
    %v3230 = vunpack.c.h.b16 %v2166
    %v3231 = vunpack.c.l.b16 %v2167
    %v3232 = vunpack.c.h.b16 %v2167
    %v3233 = vunpack.c.l.b16 %v2168
    %v3234 = vunpack.c.h.b16 %v2168
    %v3235 = vunpack.c.l.b16 %v2169
    %v3236 = vunpack.c.h.b16 %v2169
    %v3237 = vunpack.c.l.b16 %v2170
    %v3238 = vunpack.c.h.b16 %v2170
    %v3239 = vunpack.c.l.b16 %v2171
    %v3240 = vunpack.c.h.b16 %v2171
    %v3241 = vunpack.c.l.b16 %v2172
    %v3242 = vunpack.c.h.b16 %v2172
    %v3243 = vunpack.c.l.b16 %v2173
    %v3244 = vunpack.c.h.b16 %v2173
    %v3245 = vunpack.c.l.b16 %v2174
    %v3246 = vunpack.c.h.b16 %v2174
    %v3247 = vunpack.c.l.b16 %v2175
    %v3248 = vunpack.c.h.b16 %v2175
    %v3249 = vunpack.c.l.b16 %v2176
    %v3250 = vunpack.c.h.b16 %v2176
    %v3251 = vunpack.c.l.b16 %v2177
    %v3252 = vunpack.c.h.b16 %v2177
    %v3253 = vunpack.c.l.b16 %v2178
    %v3254 = vunpack.c.h.b16 %v2178
    %v3255 = vunpack.c.l.b16 %v2179
    %v3256 = vunpack.c.h.b16 %v2179
    %v3257 = vunpack.c.l.b16 %v2180
    %v3258 = vunpack.c.h.b16 %v2180
    %v3259 = vunpack.c.l.b16 %v2181
    %v3260 = vunpack.c.h.b16 %v2181
    %v3261 = vunpack.c.l.b16 %v2182
    %v3262 = vunpack.c.h.b16 %v2182
    %v3263 = vunpack.c.l.b16 %v2183
    %v3264 = vunpack.c.h.b16 %v2183
    %v3265 = vunpack.c.l.b16 %v2184
    %v3266 = vunpack.c.h.b16 %v2184
    %v3267 = vunpack.c.l.b16 %v2185
    %v3268 = vunpack.c.h.b16 %v2185
    %v3269 = vunpack.c.l.b16 %v2186
    %v3270 = vunpack.c.h.b16 %v2186
    %v3271 = vunpack.c.l.b16 %v2187
    %v3272 = vunpack.c.h.b16 %v2187
    %v3273 = vunpack.c.l.b16 %v2188
    %v3274 = vunpack.c.h.b16 %v2188
    %v3275 = vunpack.c.l.b16 %v2189
    %v3276 = vunpack.c.h.b16 %v2189
    %v3277 = vunpack.c.l.b16 %v2190
    %v3278 = vunpack.c.h.b16 %v2190
    %v3279 = vunpack.c.l.b16 %v2191
    %v3280 = vunpack.c.h.b16 %v2191
    %v3281 = vunpack.c.l.b16 %v2192
    %v3282 = vunpack.c.h.b16 %v2192
    %v3283 = vunpack.c.l.b16 %v2193
    %v3284 = vunpack.c.h.b16 %v2193
    %v3285 = vunpack.c.l.b16 %v2194
    %v3286 = vunpack.c.h.b16 %v2194
    %v3287 = vunpack.c.l.b16 %v2195
    %v3288 = vunpack.c.h.b16 %v2195
    %v3289 = vunpack.c.l.b16 %v2196
    %v3290 = vunpack.c.h.b16 %v2196
    %v3291 = vunpack.c.l.b16 %v2197
    %v3292 = vunpack.c.h.b16 %v2197
    %v3293 = vunpack.c.l.b16 %v2198
    %v3294 = vunpack.c.h.b16 %v2198
    %v3295 = vunpack.c.l.b16 %v2199
    %v3296 = vunpack.c.h.b16 %v2199
    %v3297 = vunpack.c.l.b16 %v2200
    %v3298 = vunpack.c.h.b16 %v2200
    %v3299 = vunpack.c.l.b16 %v2201
    %v3300 = vunpack.c.h.b16 %v2201
    %v3301 = vunpack.c.l.b16 %v2202
    %v3302 = vunpack.c.h.b16 %v2202
    %v3303 = vunpack.c.l.b16 %v2203
    %v3304 = vunpack.c.h.b16 %v2203
    %v3305 = vunpack.c.l.b16 %v2204
    %v3306 = vunpack.c.h.b16 %v2204
    %v3307 = vunpack.c.l.b16 %v2205
    %v3308 = vunpack.c.h.b16 %v2205
    %v3309 = vunpack.c.l.b16 %v2206
    %v3310 = vunpack.c.h.b16 %v2206
    %v3311 = vunpack.c.l.b16 %v2207
    %v3312 = vunpack.c.h.b16 %v2207
    %v3313 = vunpack.c.l.b16 %v2208
    %v3314 = vunpack.c.h.b16 %v2208
    %v3315 = vunpack.c.l.b16 %v2209
    %v3316 = vunpack.c.h.b16 %v2209
    %v3317 = vunpack.c.l.b16 %v2210
    %v3318 = vunpack.c.h.b16 %v2210
    %v3319 = vunpack.c.l.b16 %v2211
    %v3320 = vunpack.c.h.b16 %v2211
    %v3321 = vunpack.c.l.b16 %v2212
    %v3322 = vunpack.c.h.b16 %v2212
    %v3323 = vunpack.c.l.b16 %v2213
    %v3324 = vunpack.c.h.b16 %v2213
    %v3325 = vunpack.c.l.b16 %v2214
    %v3326 = vunpack.c.h.b16 %v2214
    %v3327 = vunpack.c.l.b16 %v2215
    %v3328 = vunpack.c.h.b16 %v2215
    %v3329 = vunpack.c.l.b16 %v2216
    %v3330 = vunpack.c.h.b16 %v2216
    %v3331 = vunpack.c.l.b16 %v2217
    %v3332 = vunpack.c.h.b16 %v2217
    %v3333 = vunpack.c.l.b16 %v2218
    %v3334 = vunpack.c.h.b16 %v2218
    %v3335 = vunpack.c.l.b16 %v2219
    %v3336 = vunpack.c.h.b16 %v2219
    %v3337 = vunpack.c.l.b16 %v2220
    %v3338 = vunpack.c.h.b16 %v2220
    %v3339 = vunpack.c.l.b16 %v2221
    %v3340 = vunpack.c.h.b16 %v2221
    %v3341 = vunpack.c.l.b16 %v2222
    %v3342 = vunpack.c.h.b16 %v2222
    %v3343 = vunpack.c.l.b16 %v2223
    %v3344 = vunpack.c.h.b16 %v2223
    %v3345 = vunpack.c.l.b16 %v2224
    %v3346 = vunpack.c.h.b16 %v2224
    %v3347 = vunpack.c.l.b16 %v2225
    %v3348 = vunpack.c.h.b16 %v2225
    %v3349 = vunpack.c.l.b16 %v2226
    %v3350 = vunpack.c.h.b16 %v2226
    %v3351 = vunpack.c.l.b16 %v2227
    %v3352 = vunpack.c.h.b16 %v2227
    %v3353 = vunpack.c.l.b16 %v2228
    %v3354 = vunpack.c.h.b16 %v2228
    %v3355 = vunpack.c.l.b16 %v2229
    %v3356 = vunpack.c.h.b16 %v2229
    %v3357 = vunpack.c.l.b16 %v2230
    %v3358 = vunpack.c.h.b16 %v2230
    %v3359 = vunpack.c.l.b16 %v2231
    %v3360 = vunpack.c.h.b16 %v2231
    %v3361 = vunpack.c.l.b16 %v2232
    %v3362 = vunpack.c.h.b16 %v2232
    %v3363 = vunpack.c.l.b16 %v2233
    %v3364 = vunpack.c.h.b16 %v2233
    %v3365 = vunpack.c.l.b16 %v2234
    %v3366 = vunpack.c.h.b16 %v2234
    %v3367 = vunpack.c.l.b16 %v2235
    %v3368 = vunpack.c.h.b16 %v2235
    %v3369 = vunpack.c.l.b16 %v2236
    %v3370 = vunpack.c.h.b16 %v2236
    %v3371 = vunpack.c.l.b16 %v2237
    %v3372 = vunpack.c.h.b16 %v2237
    %v3373 = vunpack.c.l.b16 %v2238
    %v3374 = vunpack.c.h.b16 %v2238
    %v3375 = vunpack.c.l.b16 %v2239
    %v3376 = vunpack.c.h.b16 %v2239
    %v3377 = vunpack.c.l.b16 %v2240
    %v3378 = vunpack.c.h.b16 %v2240
    %v3379 = vunpack.c.l.b16 %v2241
    %v3380 = vunpack.c.h.b16 %v2241
    %v3381 = vunpack.c.l.b16 %v2242
    %v3382 = vunpack.c.h.b16 %v2242
    %v3383 = vunpack.c.l.b16 %v2243
    %v3384 = vunpack.c.h.b16 %v2243
    %v3385 = vunpack.c.l.b16 %v2244
    %v3386 = vunpack.c.h.b16 %v2244
    %v3387 = vunpack.c.l.b16 %v2245
    %v3388 = vunpack.c.h.b16 %v2245
    %v3389 = vunpack.c.l.b16 %v2246
    %v3390 = vunpack.c.h.b16 %v2246
    %v3391 = vunpack.c.l.b16 %v2247
    %v3392 = vunpack.c.h.b16 %v2247
    %v3393 = vunpack.c.l.b16 %v2248
    %v3394 = vunpack.c.h.b16 %v2248
    %v3395 = vunpack.c.l.b16 %v2249
    %v3396 = vunpack.c.h.b16 %v2249
    %v3397 = vunpack.c.l.b16 %v2250
    %v3398 = vunpack.c.h.b16 %v2250
    %v3399 = vunpack.c.l.b16 %v2251
    %v3400 = vunpack.c.h.b16 %v2251
    %v3401 = vunpack.c.l.b16 %v2252
    %v3402 = vunpack.c.h.b16 %v2252
    %v3403 = vunpack.c.l.b16 %v2253
    %v3404 = vunpack.c.h.b16 %v2253
    %v3405 = vunpack.c.l.b16 %v2254
    %v3406 = vunpack.c.h.b16 %v2254
    %v3407 = vunpack.c.l.b16 %v2255
    %v3408 = vunpack.c.h.b16 %v2255
    %v3409 = vunpack.c.l.b16 %v2256
    %v3410 = vunpack.c.h.b16 %v2256
    %v3411 = vunpack.c.l.b16 %v2257
    %v3412 = vunpack.c.h.b16 %v2257
    %v3413 = vunpack.c.l.b16 %v2258
    %v3414 = vunpack.c.h.b16 %v2258
    %v3415 = vunpack.c.l.b16 %v2259
    %v3416 = vunpack.c.h.b16 %v2259
    %v3417 = vunpack.c.l.b16 %v2260
    %v3418 = vunpack.c.h.b16 %v2260
    %v3419 = vunpack.c.l.b16 %v2261
    %v3420 = vunpack.c.h.b16 %v2261
    %v3421 = vunpack.c.l.b16 %v2262
    %v3422 = vunpack.c.h.b16 %v2262
    %v3423 = vunpack.c.l.b16 %v2263
    %v3424 = vunpack.c.h.b16 %v2263
    %v3425 = vunpack.c.l.b16 %v2264
    %v3426 = vunpack.c.h.b16 %v2264
    %v3427 = vunpack.c.l.b16 %v2265
    %v3428 = vunpack.c.h.b16 %v2265
    %v3429 = vunpack.c.l.b16 %v2266
    %v3430 = vunpack.c.h.b16 %v2266
    %v3431 = vunpack.c.l.b16 %v2267
    %v3432 = vunpack.c.h.b16 %v2267
    %v3433 = vunpack.c.l.b16 %v2268
    %v3434 = vunpack.c.h.b16 %v2268
    %v3435 = vunpack.c.l.b16 %v2269
    %v3436 = vunpack.c.h.b16 %v2269
    %v3437 = vunpack.c.l.b16 %v2270
    %v3438 = vunpack.c.h.b16 %v2270
    %v3439 = vunpack.c.l.b16 %v2271
    %v3440 = vunpack.c.h.b16 %v2271
    %v3441 = vunpack.c.l.b16 %v2272
    %v3442 = vunpack.c.h.b16 %v2272
    %v3443 = vunpack.c.l.b16 %v2273
    %v3444 = vunpack.c.h.b16 %v2273
    %v3445 = vunpack.c.l.b16 %v2274
    %v3446 = vunpack.c.h.b16 %v2274
    %v3447 = vunpack.c.l.b16 %v2275
    %v3448 = vunpack.c.h.b16 %v2275
    %v3449 = vunpack.c.l.b16 %v2276
    %v3450 = vunpack.c.h.b16 %v2276
    %v3451 = vunpack.c.l.b16 %v2277
    %v3452 = vunpack.c.h.b16 %v2277
    %v3453 = vunpack.c.l.b16 %v2278
    %v3454 = vunpack.c.h.b16 %v2278
    %v3455 = vunpack.c.l.b16 %v2279
    %v3456 = vunpack.c.h.b16 %v2279
    %v3457 = vunpack.c.l.b16 %v2280
    %v3458 = vunpack.c.h.b16 %v2280
    %v3459 = vunpack.c.l.b16 %v2281
    %v3460 = vunpack.c.h.b16 %v2281
    %v3461 = vunpack.c.l.b16 %v2282
    %v3462 = vunpack.c.h.b16 %v2282
    %v3463 = vunpack.c.l.b16 %v2283
    %v3464 = vunpack.c.h.b16 %v2283
    %v3465 = vunpack.c.l.b16 %v2284
    %v3466 = vunpack.c.h.b16 %v2284
    %v3467 = vunpack.c.l.b16 %v2285
    %v3468 = vunpack.c.h.b16 %v2285
    %v3469 = vunpack.c.l.b16 %v2286
    %v3470 = vunpack.c.h.b16 %v2286
    %v3471 = vunpack.c.l.b16 %v2287
    %v3472 = vunpack.c.h.b16 %v2287
    %v3473 = vunpack.c.l.b16 %v2288
    %v3474 = vunpack.c.h.b16 %v2288
    %v3475 = vunpack.c.l.b16 %v2289
    %v3476 = vunpack.c.h.b16 %v2289
    %v3477 = vunpack.c.l.b16 %v2290
    %v3478 = vunpack.c.h.b16 %v2290
    %v3479 = vunpack.c.l.b16 %v2291
    %v3480 = vunpack.c.h.b16 %v2291
    %v3481 = vunpack.c.l.b16 %v2292
    %v3482 = vunpack.c.h.b16 %v2292
    %v3483 = vunpack.c.l.b16 %v2293
    %v3484 = vunpack.c.h.b16 %v2293
    %v3485 = vunpack.c.l.b16 %v2294
    %v3486 = vunpack.c.h.b16 %v2294
    %v3487 = vunpack.c.l.b16 %v2295
    %v3488 = vunpack.c.h.b16 %v2295
    %v3489 = vunpack.c.l.b16 %v2296
    %v3490 = vunpack.c.h.b16 %v2296
    %v3491 = vunpack.c.l.b16 %v2297
    %v3492 = vunpack.c.h.b16 %v2297
    %v3493 = vunpack.c.l.b16 %v2298
    %v3494 = vunpack.c.h.b16 %v2298
    %v3495 = vunpack.c.l.b16 %v2299
    %v3496 = vunpack.c.h.b16 %v2299
    %v3497 = vunpack.c.l.b16 %v2300
    %v3498 = vunpack.c.h.b16 %v2300
    %v3499 = vunpack.c.l.b16 %v2301
    %v3500 = vunpack.c.h.b16 %v2301
    %v3501 = vunpack.c.l.b16 %v2302
    %v3502 = vunpack.c.h.b16 %v2302
    %v3503 = vunpack.c.l.b16 %v2303
    %v3504 = vunpack.c.h.b16 %v2303
    %v3505 = vunpack.c.l.b16 %v2304
    %v3506 = vunpack.c.h.b16 %v2304
    %v3507 = vunpack.c.l.b16 %v2305
    %v3508 = vunpack.c.h.b16 %v2305
    %v3509 = vunpack.c.l.b16 %v2306
    %v3510 = vunpack.c.h.b16 %v2306
    %v3511 = vunpack.c.l.b16 %v2307
    %v3512 = vunpack.c.h.b16 %v2307
    %v3513 = vunpack.c.l.b16 %v2308
    %v3514 = vunpack.c.h.b16 %v2308
    %v3515 = vunpack.c.l.b16 %v2309
    %v3516 = vunpack.c.h.b16 %v2309
    %v3517 = vunpack.c.l.b16 %v2310
    %v3518 = vunpack.c.h.b16 %v2310
    %v3519 = vunpack.c.l.b16 %v2311
    %v3520 = vunpack.c.h.b16 %v2311
    %v3521 = vunpack.c.l.b16 %v2312
    %v3522 = vunpack.c.h.b16 %v2312
    %v3523 = vunpack.c.l.b16 %v2313
    %v3524 = vunpack.c.h.b16 %v2313
    %v3525 = vunpack.c.l.b16 %v2314
    %v3526 = vunpack.c.h.b16 %v2314
    %v3527 = vunpack.c.l.b16 %v2315
    %v3528 = vunpack.c.h.b16 %v2315
    %v3529 = vunpack.c.l.b16 %v2316
    %v3530 = vunpack.c.h.b16 %v2316
    %v3531 = vunpack.c.l.b16 %v2317
    %v3532 = vunpack.c.h.b16 %v2317
    %v3533 = vunpack.c.l.b16 %v2318
    %v3534 = vunpack.c.h.b16 %v2318
    %v3535 = vunpack.c.l.b16 %v2319
    %v3536 = vunpack.c.h.b16 %v2319
    %v3537 = vunpack.c.l.b16 %v2320
    %v3538 = vunpack.c.h.b16 %v2320
    %v3539 = vunpack.c.l.b16 %v2321
    %v3540 = vunpack.c.h.b16 %v2321
    %v3541 = vunpack.c.l.b16 %v2322
    %v3542 = vunpack.c.h.b16 %v2322
    %v3543 = vunpack.c.l.b16 %v2323
    %v3544 = vunpack.c.h.b16 %v2323
    %v3545 = vunpack.c.l.b16 %v2324
    %v3546 = vunpack.c.h.b16 %v2324
    %v3547 = vunpack.c.l.b16 %v2325
    %v3548 = vunpack.c.h.b16 %v2325
    %v3549 = vunpack.c.l.b16 %v2326
    %v3550 = vunpack.c.h.b16 %v2326
    %v3551 = vunpack.c.l.b16 %v2327
    %v3552 = vunpack.c.h.b16 %v2327
    %v3553 = vunpack.c.l.b16 %v2328
    %v3554 = vunpack.c.h.b16 %v2328
    %v3555 = vunpack.c.l.b16 %v2329
    %v3556 = vunpack.c.h.b16 %v2329
    %v3557 = vunpack.c.l.b16 %v2330
    %v3558 = vunpack.c.h.b16 %v2330
    %v3559 = vunpack.c.l.b16 %v2331
    %v3560 = vunpack.c.h.b16 %v2331
    %v3561 = vunpack.c.l.b16 %v2332
    %v3562 = vunpack.c.h.b16 %v2332
    %v3563 = vunpack.c.l.b16 %v2333
    %v3564 = vunpack.c.h.b16 %v2333
    %v3565 = vunpack.c.l.b16 %v2334
    %v3566 = vunpack.c.h.b16 %v2334
    %v3567 = vunpack.c.l.b16 %v2335
    %v3568 = vunpack.c.h.b16 %v2335
    %v3569 = vunpack.c.l.b16 %v2336
    %v3570 = vunpack.c.h.b16 %v2336
    %v3571 = vunpack.c.l.b16 %v2337
    %v3572 = vunpack.c.h.b16 %v2337
    %v3573 = vunpack.c.l.b16 %v2338
    %v3574 = vunpack.c.h.b16 %v2338
    %v3575 = vunpack.c.l.b16 %v2339
    %v3576 = vunpack.c.h.b16 %v2339
    %v3577 = vunpack.c.l.b16 %v2340
    %v3578 = vunpack.c.h.b16 %v2340
    %v3579 = vunpack.c.l.b16 %v2341
    %v3580 = vunpack.c.h.b16 %v2341
    %v3581 = vunpack.c.l.b16 %v2342
    %v3582 = vunpack.c.h.b16 %v2342
    %v3583 = vunpack.c.l.b16 %v2343
    %v3584 = vunpack.c.h.b16 %v2343
    %v3585 = vunpack.c.l.b16 %v2344
    %v3586 = vunpack.c.h.b16 %v2344
    %v3587 = vunpack.c.l.b16 %v2345
    %v3588 = vunpack.c.h.b16 %v2345
    %v3589 = vunpack.c.l.b16 %v2346
    %v3590 = vunpack.c.h.b16 %v2346
    %v3591 = vunpack.c.l.b16 %v2347
    %v3592 = vunpack.c.h.b16 %v2347
    %v3593 = vpack.c.b16 %v2837, %v2825
    %v3594 = vpack.c.b16 %v2838, %v2826
    %v3595 = vpack.c.b16 %v2839, %v2827
    %v3596 = vpack.c.b16 %v2840, %v2828
    %v3597 = vpack.c.b16 %v2841, %v2829
    %v3598 = vpack.c.b16 %v2842, %v2830
    %v3599 = vpack.c.b16 %v2843, %v2831
    %v3600 = vpack.c.b16 %v2844, %v2832
    %v3601 = vpack.c.b16 %v2845, %v2833
    %v3602 = vpack.c.b16 %v2846, %v2834
    %v3603 = vpack.c.b16 %v2847, %v2835
    %v3604 = vpack.c.b16 %v2848, %v2836
    %v3605 = vpack.c.b16 %v2861, %v2849
    %v3606 = vpack.c.b16 %v2862, %v2850
    %v3607 = vpack.c.b16 %v2863, %v2851
    %v3608 = vpack.c.b16 %v2864, %v2852
    %v3609 = vpack.c.b16 %v2865, %v2853
    %v3610 = vpack.c.b16 %v2866, %v2854
    %v3611 = vpack.c.b16 %v2867, %v2855
    %v3612 = vpack.c.b16 %v2868, %v2856
    %v3613 = vpack.c.b16 %v2869, %v2857
    %v3614 = vpack.c.b16 %v2870, %v2858
    %v3615 = vpack.c.b16 %v2871, %v2859
    %v3616 = vpack.c.b16 %v2872, %v2860
    %v3617 = vpack.c.b16 %v2885, %v2873
    %v3618 = vpack.c.b16 %v2886, %v2874
    %v3619 = vpack.c.b16 %v2887, %v2875
    %v3620 = vpack.c.b16 %v2888, %v2876
    %v3621 = vpack.c.b16 %v2889, %v2877
    %v3622 = vpack.c.b16 %v2890, %v2878
    %v3623 = vpack.c.b16 %v2891, %v2879
    %v3624 = vpack.c.b16 %v2892, %v2880
    %v3625 = vpack.c.b16 %v2893, %v2881
    %v3626 = vpack.c.b16 %v2894, %v2882
    %v3627 = vpack.c.b16 %v2895, %v2883
    %v3628 = vpack.c.b16 %v2896, %v2884
    %v3629 = vpack.c.b16 %v2909, %v2897
    %v3630 = vpack.c.b16 %v2910, %v2898
    %v3631 = vpack.c.b16 %v2911, %v2899
    %v3632 = vpack.c.b16 %v2912, %v2900
    %v3633 = vpack.c.b16 %v2913, %v2901
    %v3634 = vpack.c.b16 %v2914, %v2902
    %v3635 = vpack.c.b16 %v2915, %v2903
    %v3636 = vpack.c.b16 %v2916, %v2904
    %v3637 = vpack.c.b16 %v2917, %v2905
    %v3638 = vpack.c.b16 %v2918, %v2906
    %v3639 = vpack.c.b16 %v2919, %v2907
    %v3640 = vpack.c.b16 %v2920, %v2908
    %v3641 = vpack.c.b16 %v2933, %v2921
    %v3642 = vpack.c.b16 %v2934, %v2922
    %v3643 = vpack.c.b16 %v2935, %v2923
    %v3644 = vpack.c.b16 %v2936, %v2924
    %v3645 = vpack.c.b16 %v2937, %v2925
    %v3646 = vpack.c.b16 %v2938, %v2926
    %v3647 = vpack.c.b16 %v2939, %v2927
    %v3648 = vpack.c.b16 %v2940, %v2928
    %v3649 = vpack.c.b16 %v2941, %v2929
    %v3650 = vpack.c.b16 %v2942, %v2930
    %v3651 = vpack.c.b16 %v2943, %v2931
    %v3652 = vpack.c.b16 %v2944, %v2932
    %v3653 = vpack.c.b16 %v2957, %v2945
    %v3654 = vpack.c.b16 %v2958, %v2946
    %v3655 = vpack.c.b16 %v2959, %v2947
    %v3656 = vpack.c.b16 %v2960, %v2948
    %v3657 = vpack.c.b16 %v2961, %v2949
    %v3658 = vpack.c.b16 %v2962, %v2950
    %v3659 = vpack.c.b16 %v2963, %v2951
    %v3660 = vpack.c.b16 %v2964, %v2952
    %v3661 = vpack.c.b16 %v2965, %v2953
    %v3662 = vpack.c.b16 %v2966, %v2954
    %v3663 = vpack.c.b16 %v2967, %v2955
    %v3664 = vpack.c.b16 %v2968, %v2956
    %v3665 = vpack.c.b16 %v2981, %v2969
    %v3666 = vpack.c.b16 %v2982, %v2970
    %v3667 = vpack.c.b16 %v2983, %v2971
    %v3668 = vpack.c.b16 %v2984, %v2972
    %v3669 = vpack.c.b16 %v2985, %v2973
    %v3670 = vpack.c.b16 %v2986, %v2974
    %v3671 = vpack.c.b16 %v2987, %v2975
    %v3672 = vpack.c.b16 %v2988, %v2976
    %v3673 = vpack.c.b16 %v2989, %v2977
    %v3674 = vpack.c.b16 %v2990, %v2978
    %v3675 = vpack.c.b16 %v2991, %v2979
    %v3676 = vpack.c.b16 %v2992, %v2980
    %v3677 = vpack.c.b16 %v3005, %v2993
    %v3678 = vpack.c.b16 %v3006, %v2994
    %v3679 = vpack.c.b16 %v3007, %v2995
    %v3680 = vpack.c.b16 %v3008, %v2996
    %v3681 = vpack.c.b16 %v3009, %v2997
    %v3682 = vpack.c.b16 %v3010, %v2998
    %v3683 = vpack.c.b16 %v3011, %v2999
    %v3684 = vpack.c.b16 %v3012, %v3000
    %v3685 = vpack.c.b16 %v3013, %v3001
    %v3686 = vpack.c.b16 %v3014, %v3002
    %v3687 = vpack.c.b16 %v3015, %v3003
    %v3688 = vpack.c.b16 %v3016, %v3004
    %v3689 = vpack.c.b16 %v3029, %v3017
    %v3690 = vpack.c.b16 %v3030, %v3018
    %v3691 = vpack.c.b16 %v3031, %v3019
    %v3692 = vpack.c.b16 %v3032, %v3020
    %v3693 = vpack.c.b16 %v3033, %v3021
    %v3694 = vpack.c.b16 %v3034, %v3022
    %v3695 = vpack.c.b16 %v3035, %v3023
    %v3696 = vpack.c.b16 %v3036, %v3024
    %v3697 = vpack.c.b16 %v3037, %v3025
    %v3698 = vpack.c.b16 %v3038, %v3026
    %v3699 = vpack.c.b16 %v3039, %v3027
    %v3700 = vpack.c.b16 %v3040, %v3028
    %v3701 = vpack.c.b16 %v3053, %v3041
    %v3702 = vpack.c.b16 %v3054, %v3042
    %v3703 = vpack.c.b16 %v3055, %v3043
    %v3704 = vpack.c.b16 %v3056, %v3044
    %v3705 = vpack.c.b16 %v3057, %v3045
    %v3706 = vpack.c.b16 %v3058, %v3046
    %v3707 = vpack.c.b16 %v3059, %v3047
    %v3708 = vpack.c.b16 %v3060, %v3048
    %v3709 = vpack.c.b16 %v3061, %v3049
    %v3710 = vpack.c.b16 %v3062, %v3050
    %v3711 = vpack.c.b16 %v3063, %v3051
    %v3712 = vpack.c.b16 %v3064, %v3052
    %v3713 = vpack.c.b16 %v3077, %v3065
    %v3714 = vpack.c.b16 %v3078, %v3066
    %v3715 = vpack.c.b16 %v3079, %v3067
    %v3716 = vpack.c.b16 %v3080, %v3068
    %v3717 = vpack.c.b16 %v3081, %v3069
    %v3718 = vpack.c.b16 %v3082, %v3070
    %v3719 = vpack.c.b16 %v3083, %v3071
    %v3720 = vpack.c.b16 %v3084, %v3072
    %v3721 = vpack.c.b16 %v3085, %v3073
    %v3722 = vpack.c.b16 %v3086, %v3074
    %v3723 = vpack.c.b16 %v3087, %v3075
    %v3724 = vpack.c.b16 %v3088, %v3076
    %v3725 = vpack.c.b16 %v3101, %v3089
    %v3726 = vpack.c.b16 %v3102, %v3090
    %v3727 = vpack.c.b16 %v3103, %v3091
    %v3728 = vpack.c.b16 %v3104, %v3092
    %v3729 = vpack.c.b16 %v3105, %v3093
    %v3730 = vpack.c.b16 %v3106, %v3094
    %v3731 = vpack.c.b16 %v3107, %v3095
    %v3732 = vpack.c.b16 %v3108, %v3096
    %v3733 = vpack.c.b16 %v3109, %v3097
    %v3734 = vpack.c.b16 %v3110, %v3098
    %v3735 = vpack.c.b16 %v3111, %v3099
    %v3736 = vpack.c.b16 %v3112, %v3100
    %v3737 = vpack.c.b16 %v3125, %v3113
    %v3738 = vpack.c.b16 %v3126, %v3114
    %v3739 = vpack.c.b16 %v3127, %v3115
    %v3740 = vpack.c.b16 %v3128, %v3116
    %v3741 = vpack.c.b16 %v3129, %v3117
    %v3742 = vpack.c.b16 %v3130, %v3118
    %v3743 = vpack.c.b16 %v3131, %v3119
    %v3744 = vpack.c.b16 %v3132, %v3120
    %v3745 = vpack.c.b16 %v3133, %v3121
    %v3746 = vpack.c.b16 %v3134, %v3122
    %v3747 = vpack.c.b16 %v3135, %v3123
    %v3748 = vpack.c.b16 %v3136, %v3124
    %v3749 = vpack.c.b16 %v3149, %v3137
    %v3750 = vpack.c.b16 %v3150, %v3138
    %v3751 = vpack.c.b16 %v3151, %v3139
    %v3752 = vpack.c.b16 %v3152, %v3140
    %v3753 = vpack.c.b16 %v3153, %v3141
    %v3754 = vpack.c.b16 %v3154, %v3142
    %v3755 = vpack.c.b16 %v3155, %v3143
    %v3756 = vpack.c.b16 %v3156, %v3144
    %v3757 = vpack.c.b16 %v3157, %v3145
    %v3758 = vpack.c.b16 %v3158, %v3146
    %v3759 = vpack.c.b16 %v3159, %v3147
    %v3760 = vpack.c.b16 %v3160, %v3148
    %v3761 = vpack.c.b16 %v3173, %v3161
    %v3762 = vpack.c.b16 %v3174, %v3162
    %v3763 = vpack.c.b16 %v3175, %v3163
    %v3764 = vpack.c.b16 %v3176, %v3164
    %v3765 = vpack.c.b16 %v3177, %v3165
    %v3766 = vpack.c.b16 %v3178, %v3166
    %v3767 = vpack.c.b16 %v3179, %v3167
    %v3768 = vpack.c.b16 %v3180, %v3168
    %v3769 = vpack.c.b16 %v3181, %v3169
    %v3770 = vpack.c.b16 %v3182, %v3170
    %v3771 = vpack.c.b16 %v3183, %v3171
    %v3772 = vpack.c.b16 %v3184, %v3172
    %v3773 = vpack.c.b16 %v3197, %v3185
    %v3774 = vpack.c.b16 %v3198, %v3186
    %v3775 = vpack.c.b16 %v3199, %v3187
    %v3776 = vpack.c.b16 %v3200, %v3188
    %v3777 = vpack.c.b16 %v3201, %v3189
    %v3778 = vpack.c.b16 %v3202, %v3190
    %v3779 = vpack.c.b16 %v3203, %v3191
    %v3780 = vpack.c.b16 %v3204, %v3192
    %v3781 = vpack.c.b16 %v3205, %v3193
    %v3782 = vpack.c.b16 %v3206, %v3194
    %v3783 = vpack.c.b16 %v3207, %v3195
    %v3784 = vpack.c.b16 %v3208, %v3196
    %v3785 = vpack.c.b16 %v3221, %v3209
    %v3786 = vpack.c.b16 %v3222, %v3210
    %v3787 = vpack.c.b16 %v3223, %v3211
    %v3788 = vpack.c.b16 %v3224, %v3212
    %v3789 = vpack.c.b16 %v3225, %v3213
    %v3790 = vpack.c.b16 %v3226, %v3214
    %v3791 = vpack.c.b16 %v3227, %v3215
    %v3792 = vpack.c.b16 %v3228, %v3216
    %v3793 = vpack.c.b16 %v3229, %v3217
    %v3794 = vpack.c.b16 %v3230, %v3218
    %v3795 = vpack.c.b16 %v3231, %v3219
    %v3796 = vpack.c.b16 %v3232, %v3220
    %v3797 = vpack.c.b16 %v3245, %v3233
    %v3798 = vpack.c.b16 %v3246, %v3234
    %v3799 = vpack.c.b16 %v3247, %v3235
    %v3800 = vpack.c.b16 %v3248, %v3236
    %v3801 = vpack.c.b16 %v3249, %v3237
    %v3802 = vpack.c.b16 %v3250, %v3238
    %v3803 = vpack.c.b16 %v3251, %v3239
    %v3804 = vpack.c.b16 %v3252, %v3240
    %v3805 = vpack.c.b16 %v3253, %v3241
    %v3806 = vpack.c.b16 %v3254, %v3242
    %v3807 = vpack.c.b16 %v3255, %v3243
    %v3808 = vpack.c.b16 %v3256, %v3244
    %v3809 = vpack.c.b16 %v3269, %v3257
    %v3810 = vpack.c.b16 %v3270, %v3258
    %v3811 = vpack.c.b16 %v3271, %v3259
    %v3812 = vpack.c.b16 %v3272, %v3260
    %v3813 = vpack.c.b16 %v3273, %v3261
    %v3814 = vpack.c.b16 %v3274, %v3262
    %v3815 = vpack.c.b16 %v3275, %v3263
    %v3816 = vpack.c.b16 %v3276, %v3264
    %v3817 = vpack.c.b16 %v3277, %v3265
    %v3818 = vpack.c.b16 %v3278, %v3266
    %v3819 = vpack.c.b16 %v3279, %v3267
    %v3820 = vpack.c.b16 %v3280, %v3268
    %v3821 = vpack.c.b16 %v3293, %v3281
    %v3822 = vpack.c.b16 %v3294, %v3282
    %v3823 = vpack.c.b16 %v3295, %v3283
    %v3824 = vpack.c.b16 %v3296, %v3284
    %v3825 = vpack.c.b16 %v3297, %v3285
    %v3826 = vpack.c.b16 %v3298, %v3286
    %v3827 = vpack.c.b16 %v3299, %v3287
    %v3828 = vpack.c.b16 %v3300, %v3288
    %v3829 = vpack.c.b16 %v3301, %v3289
    %v3830 = vpack.c.b16 %v3302, %v3290
    %v3831 = vpack.c.b16 %v3303, %v3291
    %v3832 = vpack.c.b16 %v3304, %v3292
    %v3833 = vpack.c.b16 %v3317, %v3305
    %v3834 = vpack.c.b16 %v3318, %v3306
    %v3835 = vpack.c.b16 %v3319, %v3307
    %v3836 = vpack.c.b16 %v3320, %v3308
    %v3837 = vpack.c.b16 %v3321, %v3309
    %v3838 = vpack.c.b16 %v3322, %v3310
    %v3839 = vpack.c.b16 %v3323, %v3311
    %v3840 = vpack.c.b16 %v3324, %v3312
    %v3841 = vpack.c.b16 %v3325, %v3313
    %v3842 = vpack.c.b16 %v3326, %v3314
    %v3843 = vpack.c.b16 %v3327, %v3315
    %v3844 = vpack.c.b16 %v3328, %v3316
    %v3845 = vpack.c.b16 %v3341, %v3329
    %v3846 = vpack.c.b16 %v3342, %v3330
    %v3847 = vpack.c.b16 %v3343, %v3331
    %v3848 = vpack.c.b16 %v3344, %v3332
    %v3849 = vpack.c.b16 %v3345, %v3333
    %v3850 = vpack.c.b16 %v3346, %v3334
    %v3851 = vpack.c.b16 %v3347, %v3335
    %v3852 = vpack.c.b16 %v3348, %v3336
    %v3853 = vpack.c.b16 %v3349, %v3337
    %v3854 = vpack.c.b16 %v3350, %v3338
    %v3855 = vpack.c.b16 %v3351, %v3339
    %v3856 = vpack.c.b16 %v3352, %v3340
    %v3857 = vpack.c.b16 %v3365, %v3353
    %v3858 = vpack.c.b16 %v3366, %v3354
    %v3859 = vpack.c.b16 %v3367, %v3355
    %v3860 = vpack.c.b16 %v3368, %v3356
    %v3861 = vpack.c.b16 %v3369, %v3357
    %v3862 = vpack.c.b16 %v3370, %v3358
    %v3863 = vpack.c.b16 %v3371, %v3359
    %v3864 = vpack.c.b16 %v3372, %v3360
    %v3865 = vpack.c.b16 %v3373, %v3361
    %v3866 = vpack.c.b16 %v3374, %v3362
    %v3867 = vpack.c.b16 %v3375, %v3363
    %v3868 = vpack.c.b16 %v3376, %v3364
    %v3869 = vpack.c.b16 %v3389, %v3377
    %v3870 = vpack.c.b16 %v3390, %v3378
    %v3871 = vpack.c.b16 %v3391, %v3379
    %v3872 = vpack.c.b16 %v3392, %v3380
    %v3873 = vpack.c.b16 %v3393, %v3381
    %v3874 = vpack.c.b16 %v3394, %v3382
    %v3875 = vpack.c.b16 %v3395, %v3383
    %v3876 = vpack.c.b16 %v3396, %v3384
    %v3877 = vpack.c.b16 %v3397, %v3385
    %v3878 = vpack.c.b16 %v3398, %v3386
    %v3879 = vpack.c.b16 %v3399, %v3387
    %v3880 = vpack.c.b16 %v3400, %v3388
    %v3881 = vpack.c.b16 %v3413, %v3401
    %v3882 = vpack.c.b16 %v3414, %v3402
    %v3883 = vpack.c.b16 %v3415, %v3403
    %v3884 = vpack.c.b16 %v3416, %v3404
    %v3885 = vpack.c.b16 %v3417, %v3405
    %v3886 = vpack.c.b16 %v3418, %v3406
    %v3887 = vpack.c.b16 %v3419, %v3407
    %v3888 = vpack.c.b16 %v3420, %v3408
    %v3889 = vpack.c.b16 %v3421, %v3409
    %v3890 = vpack.c.b16 %v3422, %v3410
    %v3891 = vpack.c.b16 %v3423, %v3411
    %v3892 = vpack.c.b16 %v3424, %v3412
    %v3893 = vpack.c.b16 %v3437, %v3425
    %v3894 = vpack.c.b16 %v3438, %v3426
    %v3895 = vpack.c.b16 %v3439, %v3427
    %v3896 = vpack.c.b16 %v3440, %v3428
    %v3897 = vpack.c.b16 %v3441, %v3429
    %v3898 = vpack.c.b16 %v3442, %v3430
    %v3899 = vpack.c.b16 %v3443, %v3431
    %v3900 = vpack.c.b16 %v3444, %v3432
    %v3901 = vpack.c.b16 %v3445, %v3433
    %v3902 = vpack.c.b16 %v3446, %v3434
    %v3903 = vpack.c.b16 %v3447, %v3435
    %v3904 = vpack.c.b16 %v3448, %v3436
    %v3905 = vpack.c.b16 %v3461, %v3449
    %v3906 = vpack.c.b16 %v3462, %v3450
    %v3907 = vpack.c.b16 %v3463, %v3451
    %v3908 = vpack.c.b16 %v3464, %v3452
    %v3909 = vpack.c.b16 %v3465, %v3453
    %v3910 = vpack.c.b16 %v3466, %v3454
    %v3911 = vpack.c.b16 %v3467, %v3455
    %v3912 = vpack.c.b16 %v3468, %v3456
    %v3913 = vpack.c.b16 %v3469, %v3457
    %v3914 = vpack.c.b16 %v3470, %v3458
    %v3915 = vpack.c.b16 %v3471, %v3459
    %v3916 = vpack.c.b16 %v3472, %v3460
    %v3917 = vpack.c.b16 %v3485, %v3473
    %v3918 = vpack.c.b16 %v3486, %v3474
    %v3919 = vpack.c.b16 %v3487, %v3475
    %v3920 = vpack.c.b16 %v3488, %v3476
    %v3921 = vpack.c.b16 %v3489, %v3477
    %v3922 = vpack.c.b16 %v3490, %v3478
    %v3923 = vpack.c.b16 %v3491, %v3479
    %v3924 = vpack.c.b16 %v3492, %v3480
    %v3925 = vpack.c.b16 %v3493, %v3481
    %v3926 = vpack.c.b16 %v3494, %v3482
    %v3927 = vpack.c.b16 %v3495, %v3483
    %v3928 = vpack.c.b16 %v3496, %v3484
    %v3929 = vpack.c.b16 %v3509, %v3497
    %v3930 = vpack.c.b16 %v3510, %v3498
    %v3931 = vpack.c.b16 %v3511, %v3499
    %v3932 = vpack.c.b16 %v3512, %v3500
    %v3933 = vpack.c.b16 %v3513, %v3501
    %v3934 = vpack.c.b16 %v3514, %v3502
    %v3935 = vpack.c.b16 %v3515, %v3503
    %v3936 = vpack.c.b16 %v3516, %v3504
    %v3937 = vpack.c.b16 %v3517, %v3505
    %v3938 = vpack.c.b16 %v3518, %v3506
    %v3939 = vpack.c.b16 %v3519, %v3507
    %v3940 = vpack.c.b16 %v3520, %v3508
    %v3941 = vpack.c.b16 %v3533, %v3521
    %v3942 = vpack.c.b16 %v3534, %v3522
    %v3943 = vpack.c.b16 %v3535, %v3523
    %v3944 = vpack.c.b16 %v3536, %v3524
    %v3945 = vpack.c.b16 %v3537, %v3525
    %v3946 = vpack.c.b16 %v3538, %v3526
    %v3947 = vpack.c.b16 %v3539, %v3527
    %v3948 = vpack.c.b16 %v3540, %v3528
    %v3949 = vpack.c.b16 %v3541, %v3529
    %v3950 = vpack.c.b16 %v3542, %v3530
    %v3951 = vpack.c.b16 %v3543, %v3531
    %v3952 = vpack.c.b16 %v3544, %v3532
    %v3953 = vpack.c.b16 %v3557, %v3545
    %v3954 = vpack.c.b16 %v3558, %v3546
    %v3955 = vpack.c.b16 %v3559, %v3547
    %v3956 = vpack.c.b16 %v3560, %v3548
    %v3957 = vpack.c.b16 %v3561, %v3549
    %v3958 = vpack.c.b16 %v3562, %v3550
    %v3959 = vpack.c.b16 %v3563, %v3551
    %v3960 = vpack.c.b16 %v3564, %v3552
    %v3961 = vpack.c.b16 %v3565, %v3553
    %v3962 = vpack.c.b16 %v3566, %v3554
    %v3963 = vpack.c.b16 %v3567, %v3555
    %v3964 = vpack.c.b16 %v3568, %v3556
    %v3965 = vpack.c.b16 %v3581, %v3569
    %v3966 = vpack.c.b16 %v3582, %v3570
    %v3967 = vpack.c.b16 %v3583, %v3571
    %v3968 = vpack.c.b16 %v3584, %v3572
    %v3969 = vpack.c.b16 %v3585, %v3573
    %v3970 = vpack.c.b16 %v3586, %v3574
    %v3971 = vpack.c.b16 %v3587, %v3575
    %v3972 = vpack.c.b16 %v3588, %v3576
    %v3973 = vpack.c.b16 %v3589, %v3577
    %v3974 = vpack.c.b16 %v3590, %v3578
    %v3975 = vpack.c.b16 %v3591, %v3579
    %v3976 = vpack.c.b16 %v3592, %v3580
    %4361 = vmatprep.subr.bf16.mxu0 %v3678
    %4362 = vmatpush1.bf16.msra.mxu0 %v3677
    %4363 = vmatprep.subr.bf16.mxu0 %v3666
    %4364 = vmatpush1.bf16.msra.mxu0 %v3665
    %4365 = vmatprep.subr.bf16.mxu0 %v3654
    %4366 = vmatpush1.bf16.msra.mxu0 %v3653
    %4367 = vmatprep.subr.bf16.mxu0 %v3642
    %4368 = vmatpush1.bf16.msra.mxu0 %v3641
    %4369 = vmatprep.subr.bf16.mxu0 %v3630
    %4370 = vmatpush1.bf16.msra.mxu0 %v3629
    %4371 = vmatprep.subr.bf16.mxu0 %v3618
    %4372 = vmatpush1.bf16.msra.mxu0 %v3617
    %4373 = vmatprep.subr.bf16.mxu0 %v3606
    %4374 = vmatpush1.bf16.msra.mxu0 %v3605
    %4375 = vmatprep.subr.bf16.mxu0 %v3594
    %4376 = vmatpush1.bf16.msra.mxu0 %v3593
    %4377 = vmatprep.subr.bf16.mxu0 %v3774
    %4378 = vmatpush2.bf16.msra.mxu0 %v3773
    %4379 = vmatprep.subr.bf16.mxu0 %v3762
    %4380 = vmatpush2.bf16.msra.mxu0 %v3761
    %4381 = vmatprep.subr.bf16.mxu0 %v3750
    %4382 = vmatpush2.bf16.msra.mxu0 %v3749
    %4383 = vmatprep.subr.bf16.mxu0 %v3738
    %4384 = vmatpush2.bf16.msra.mxu0 %v3737
    %4385 = vmatprep.subr.bf16.mxu0 %v3726
    %4386 = vmatpush2.bf16.msra.mxu0 %v3725
    %4387 = vmatprep.subr.bf16.mxu0 %v3714
    %4388 = vmatpush2.bf16.msra.mxu0 %v3713
    %4389 = vmatprep.subr.bf16.mxu0 %v3702
    %4390 = vmatpush2.bf16.msra.mxu0 %v3701
    %4391 = vmatprep.subr.bf16.mxu0 %v3690
    %4392 = vmatpush2.bf16.msra.mxu0 %v3689
    %4393 = vmatprep.mubr.bf16.mxu0 %v2434
    %4394 = vmatmul.mubr.bf16.gmra.mxu0 %v2433
    %v4395 = vpop.f32.mrf.mxu0
    %v4396 = vadd.f32 %v2355, %v4395
    %v4397 = vpop.f32.mrf.mxu0
    %v4398 = vadd.f32 %v2359, %v4397
    %v4399 = vpop.f32.mrf.mxu0
    %v4400 = vpop.f32.mrf.mxu0
    %4401 = vdwg.mxu0
    %4402 = vmatprep.subr.bf16.mxu0 %v3870
    %4403 = vmatpush1.bf16.msra.mxu0 %v3869
    %4404 = vmatprep.subr.bf16.mxu0 %v3858
    %4405 = vmatpush1.bf16.msra.mxu0 %v3857
    %4406 = vmatprep.subr.bf16.mxu0 %v3846
    %4407 = vmatpush1.bf16.msra.mxu0 %v3845
    %4408 = vmatprep.subr.bf16.mxu0 %v3834
    %4409 = vmatpush1.bf16.msra.mxu0 %v3833
    %4410 = vmatprep.subr.bf16.mxu0 %v3822
    %4411 = vmatpush1.bf16.msra.mxu0 %v3821
    %4412 = vmatprep.subr.bf16.mxu0 %v3810
    %4413 = vmatpush1.bf16.msra.mxu0 %v3809
    %4414 = vmatprep.subr.bf16.mxu0 %v3798
    %4415 = vmatpush1.bf16.msra.mxu0 %v3797
    %4416 = vmatprep.subr.bf16.mxu0 %v3786
    %4417 = vmatpush1.bf16.msra.mxu0 %v3785
    %4418 = vmatprep.subr.bf16.mxu0 %v3966
    %4419 = vmatpush2.bf16.msra.mxu0 %v3965
    %4420 = vmatprep.subr.bf16.mxu0 %v3954
    %4421 = vmatpush2.bf16.msra.mxu0 %v3953
    %4422 = vmatprep.subr.bf16.mxu0 %v3942
    %4423 = vmatpush2.bf16.msra.mxu0 %v3941
    %4424 = vmatprep.subr.bf16.mxu0 %v3930
    %4425 = vmatpush2.bf16.msra.mxu0 %v3929
    %4426 = vmatprep.subr.bf16.mxu0 %v3918
    %4427 = vmatpush2.bf16.msra.mxu0 %v3917
    %4428 = vmatprep.subr.bf16.mxu0 %v3906
    %4429 = vmatpush2.bf16.msra.mxu0 %v3905
    %4430 = vmatprep.subr.bf16.mxu0 %v3894
    %4431 = vmatpush2.bf16.msra.mxu0 %v3893
    %4432 = vmatprep.subr.bf16.mxu0 %v3882
    %4433 = vmatpush2.bf16.msra.mxu0 %v3881
    %4434 = vmatprep.mubr.bf16.mxu0 %v2436
    %4435 = vmatmul.mubr.bf16.gmra.mxu0 %v2435
    %v4436 = vpop.f32.mrf.mxu0
    %v4437 = vadd.f32 %v4396, %v4436
    %v4438 = vpop.f32.mrf.mxu0
    %v4439 = vadd.f32 %v4398, %v4438
    %v4440 = vpop.f32.mrf.mxu0
    %v4441 = vpop.f32.mrf.mxu0
    %4442 = vdwg.mxu0
    %4443 = vmatprep.subr.bf16.mxu0 %v3680
    %4444 = vmatpush1.bf16.msra.mxu0 %v3679
    %4445 = vmatprep.subr.bf16.mxu0 %v3668
    %4446 = vmatpush1.bf16.msra.mxu0 %v3667
    %4447 = vmatprep.subr.bf16.mxu0 %v3656
    %4448 = vmatpush1.bf16.msra.mxu0 %v3655
    %4449 = vmatprep.subr.bf16.mxu0 %v3644
    %4450 = vmatpush1.bf16.msra.mxu0 %v3643
    %4451 = vmatprep.subr.bf16.mxu0 %v3632
    %4452 = vmatpush1.bf16.msra.mxu0 %v3631
    %4453 = vmatprep.subr.bf16.mxu0 %v3620
    %4454 = vmatpush1.bf16.msra.mxu0 %v3619
    %4455 = vmatprep.subr.bf16.mxu0 %v3608
    %4456 = vmatpush1.bf16.msra.mxu0 %v3607
    %4457 = vmatprep.subr.bf16.mxu0 %v3596
    %4458 = vmatpush1.bf16.msra.mxu0 %v3595
    %4459 = vmatprep.subr.bf16.mxu0 %v3776
    %4460 = vmatpush2.bf16.msra.mxu0 %v3775
    %4461 = vmatprep.subr.bf16.mxu0 %v3764
    %4462 = vmatpush2.bf16.msra.mxu0 %v3763
    %4463 = vmatprep.subr.bf16.mxu0 %v3752
    %4464 = vmatpush2.bf16.msra.mxu0 %v3751
    %4465 = vmatprep.subr.bf16.mxu0 %v3740
    %4466 = vmatpush2.bf16.msra.mxu0 %v3739
    %4467 = vmatprep.subr.bf16.mxu0 %v3728
    %4468 = vmatpush2.bf16.msra.mxu0 %v3727
    %4469 = vmatprep.subr.bf16.mxu0 %v3716
    %4470 = vmatpush2.bf16.msra.mxu0 %v3715
    %4471 = vmatprep.subr.bf16.mxu0 %v3704
    %4472 = vmatpush2.bf16.msra.mxu0 %v3703
    %4473 = vmatprep.subr.bf16.mxu0 %v3692
    %4474 = vmatpush2.bf16.msra.mxu0 %v3691
    %4475 = vmatprep.mubr.bf16.mxu0 %v2434
    %4476 = vmatmul.mubr.bf16.gmra.mxu0 %v2433
    %v4477 = vpop.f32.mrf.mxu0
    %v4478 = vadd.f32 %v2363, %v4477
    %v4479 = vpop.f32.mrf.mxu0
    %v4480 = vadd.f32 %v2367, %v4479
    %v4481 = vpop.f32.mrf.mxu0
    %v4482 = vpop.f32.mrf.mxu0
    %4483 = vdwg.mxu0
    %4484 = vmatprep.subr.bf16.mxu0 %v3872
    %4485 = vmatpush1.bf16.msra.mxu0 %v3871
    %4486 = vmatprep.subr.bf16.mxu0 %v3860
    %4487 = vmatpush1.bf16.msra.mxu0 %v3859
    %4488 = vmatprep.subr.bf16.mxu0 %v3848
    %4489 = vmatpush1.bf16.msra.mxu0 %v3847
    %4490 = vmatprep.subr.bf16.mxu0 %v3836
    %4491 = vmatpush1.bf16.msra.mxu0 %v3835
    %4492 = vmatprep.subr.bf16.mxu0 %v3824
    %4493 = vmatpush1.bf16.msra.mxu0 %v3823
    %4494 = vmatprep.subr.bf16.mxu0 %v3812
    %4495 = vmatpush1.bf16.msra.mxu0 %v3811
    %4496 = vmatprep.subr.bf16.mxu0 %v3800
    %4497 = vmatpush1.bf16.msra.mxu0 %v3799
    %4498 = vmatprep.subr.bf16.mxu0 %v3788
    %4499 = vmatpush1.bf16.msra.mxu0 %v3787
    %4500 = vmatprep.subr.bf16.mxu0 %v3968
    %4501 = vmatpush2.bf16.msra.mxu0 %v3967
    %4502 = vmatprep.subr.bf16.mxu0 %v3956
    %4503 = vmatpush2.bf16.msra.mxu0 %v3955
    %4504 = vmatprep.subr.bf16.mxu0 %v3944
    %4505 = vmatpush2.bf16.msra.mxu0 %v3943
    %4506 = vmatprep.subr.bf16.mxu0 %v3932
    %4507 = vmatpush2.bf16.msra.mxu0 %v3931
    %4508 = vmatprep.subr.bf16.mxu0 %v3920
    %4509 = vmatpush2.bf16.msra.mxu0 %v3919
    %4510 = vmatprep.subr.bf16.mxu0 %v3908
    %4511 = vmatpush2.bf16.msra.mxu0 %v3907
    %4512 = vmatprep.subr.bf16.mxu0 %v3896
    %4513 = vmatpush2.bf16.msra.mxu0 %v3895
    %4514 = vmatprep.subr.bf16.mxu0 %v3884
    %4515 = vmatpush2.bf16.msra.mxu0 %v3883
    %4516 = vmatprep.mubr.bf16.mxu0 %v2436
    %4517 = vmatmul.mubr.bf16.gmra.mxu0 %v2435
    %v4518 = vpop.f32.mrf.mxu0
    %v4519 = vadd.f32 %v4478, %v4518
    %v4520 = vpop.f32.mrf.mxu0
    %v4521 = vadd.f32 %v4480, %v4520
    %v4522 = vpop.f32.mrf.mxu0
    %v4523 = vpop.f32.mrf.mxu0
    %4524 = vdwg.mxu0
    %4525 = vmatprep.subr.bf16.mxu0 %v3682
    %4526 = vmatpush1.bf16.msra.mxu0 %v3681
    %4527 = vmatprep.subr.bf16.mxu0 %v3670
    %4528 = vmatpush1.bf16.msra.mxu0 %v3669
    %4529 = vmatprep.subr.bf16.mxu0 %v3658
    %4530 = vmatpush1.bf16.msra.mxu0 %v3657
    %4531 = vmatprep.subr.bf16.mxu0 %v3646
    %4532 = vmatpush1.bf16.msra.mxu0 %v3645
    %4533 = vmatprep.subr.bf16.mxu0 %v3634
    %4534 = vmatpush1.bf16.msra.mxu0 %v3633
    %4535 = vmatprep.subr.bf16.mxu0 %v3622
    %4536 = vmatpush1.bf16.msra.mxu0 %v3621
    %4537 = vmatprep.subr.bf16.mxu0 %v3610
    %4538 = vmatpush1.bf16.msra.mxu0 %v3609
    %4539 = vmatprep.subr.bf16.mxu0 %v3598
    %4540 = vmatpush1.bf16.msra.mxu0 %v3597
    %4541 = vmatprep.subr.bf16.mxu0 %v3778
    %4542 = vmatpush2.bf16.msra.mxu0 %v3777
    %4543 = vmatprep.subr.bf16.mxu0 %v3766
    %4544 = vmatpush2.bf16.msra.mxu0 %v3765
    %4545 = vmatprep.subr.bf16.mxu0 %v3754
    %4546 = vmatpush2.bf16.msra.mxu0 %v3753
    %4547 = vmatprep.subr.bf16.mxu0 %v3742
    %4548 = vmatpush2.bf16.msra.mxu0 %v3741
    %4549 = vmatprep.subr.bf16.mxu0 %v3730
    %4550 = vmatpush2.bf16.msra.mxu0 %v3729
    %4551 = vmatprep.subr.bf16.mxu0 %v3718
    %4552 = vmatpush2.bf16.msra.mxu0 %v3717
    %4553 = vmatprep.subr.bf16.mxu0 %v3706
    %4554 = vmatpush2.bf16.msra.mxu0 %v3705
    %4555 = vmatprep.subr.bf16.mxu0 %v3694
    %4556 = vmatpush2.bf16.msra.mxu0 %v3693
    %4557 = vmatprep.mubr.bf16.mxu0 %v2434
    %4558 = vmatmul.mubr.bf16.gmra.mxu0 %v2433
    %v4559 = vpop.f32.mrf.mxu0
    %v4560 = vadd.f32 %v2371, %v4559
    %v4561 = vpop.f32.mrf.mxu0
    %v4562 = vadd.f32 %v2375, %v4561
    %v4563 = vpop.f32.mrf.mxu0
    %v4564 = vpop.f32.mrf.mxu0
    %4565 = vdwg.mxu0
    %4566 = vmatprep.subr.bf16.mxu0 %v3874
    %4567 = vmatpush1.bf16.msra.mxu0 %v3873
    %4568 = vmatprep.subr.bf16.mxu0 %v3862
    %4569 = vmatpush1.bf16.msra.mxu0 %v3861
    %4570 = vmatprep.subr.bf16.mxu0 %v3850
    %4571 = vmatpush1.bf16.msra.mxu0 %v3849
    %4572 = vmatprep.subr.bf16.mxu0 %v3838
    %4573 = vmatpush1.bf16.msra.mxu0 %v3837
    %4574 = vmatprep.subr.bf16.mxu0 %v3826
    %4575 = vmatpush1.bf16.msra.mxu0 %v3825
    %4576 = vmatprep.subr.bf16.mxu0 %v3814
    %4577 = vmatpush1.bf16.msra.mxu0 %v3813
    %4578 = vmatprep.subr.bf16.mxu0 %v3802
    %4579 = vmatpush1.bf16.msra.mxu0 %v3801
    %4580 = vmatprep.subr.bf16.mxu0 %v3790
    %4581 = vmatpush1.bf16.msra.mxu0 %v3789
    %4582 = vmatprep.subr.bf16.mxu0 %v3970
    %4583 = vmatpush2.bf16.msra.mxu0 %v3969
    %4584 = vmatprep.subr.bf16.mxu0 %v3958
    %4585 = vmatpush2.bf16.msra.mxu0 %v3957
    %4586 = vmatprep.subr.bf16.mxu0 %v3946
    %4587 = vmatpush2.bf16.msra.mxu0 %v3945
    %4588 = vmatprep.subr.bf16.mxu0 %v3934
    %4589 = vmatpush2.bf16.msra.mxu0 %v3933
    %4590 = vmatprep.subr.bf16.mxu0 %v3922
    %4591 = vmatpush2.bf16.msra.mxu0 %v3921
    %4592 = vmatprep.subr.bf16.mxu0 %v3910
    %4593 = vmatpush2.bf16.msra.mxu0 %v3909
    %4594 = vmatprep.subr.bf16.mxu0 %v3898
    %4595 = vmatpush2.bf16.msra.mxu0 %v3897
    %4596 = vmatprep.subr.bf16.mxu0 %v3886
    %4597 = vmatpush2.bf16.msra.mxu0 %v3885
    %4598 = vmatprep.mubr.bf16.mxu0 %v2436
    %4599 = vmatmul.mubr.bf16.gmra.mxu0 %v2435
    %v4600 = vpop.f32.mrf.mxu0
    %v4601 = vadd.f32 %v4560, %v4600
    %v4602 = vpop.f32.mrf.mxu0
    %v4603 = vadd.f32 %v4562, %v4602
    %v4604 = vpop.f32.mrf.mxu0
    %v4605 = vpop.f32.mrf.mxu0
    %4606 = vdwg.mxu0
    %4607 = vmatprep.subr.bf16.mxu0 %v3684
    %4608 = vmatpush1.bf16.msra.mxu0 %v3683
    %4609 = vmatprep.subr.bf16.mxu0 %v3672
    %4610 = vmatpush1.bf16.msra.mxu0 %v3671
    %4611 = vmatprep.subr.bf16.mxu0 %v3660
    %4612 = vmatpush1.bf16.msra.mxu0 %v3659
    %4613 = vmatprep.subr.bf16.mxu0 %v3648
    %4614 = vmatpush1.bf16.msra.mxu0 %v3647
    %4615 = vmatprep.subr.bf16.mxu0 %v3636
    %4616 = vmatpush1.bf16.msra.mxu0 %v3635
    %4617 = vmatprep.subr.bf16.mxu0 %v3624
    %4618 = vmatpush1.bf16.msra.mxu0 %v3623
    %4619 = vmatprep.subr.bf16.mxu0 %v3612
    %4620 = vmatpush1.bf16.msra.mxu0 %v3611
    %4621 = vmatprep.subr.bf16.mxu0 %v3600
    %4622 = vmatpush1.bf16.msra.mxu0 %v3599
    %4623 = vmatprep.subr.bf16.mxu0 %v3780
    %4624 = vmatpush2.bf16.msra.mxu0 %v3779
    %4625 = vmatprep.subr.bf16.mxu0 %v3768
    %4626 = vmatpush2.bf16.msra.mxu0 %v3767
    %4627 = vmatprep.subr.bf16.mxu0 %v3756
    %4628 = vmatpush2.bf16.msra.mxu0 %v3755
    %4629 = vmatprep.subr.bf16.mxu0 %v3744
    %4630 = vmatpush2.bf16.msra.mxu0 %v3743
    %4631 = vmatprep.subr.bf16.mxu0 %v3732
    %4632 = vmatpush2.bf16.msra.mxu0 %v3731
    %4633 = vmatprep.subr.bf16.mxu0 %v3720
    %4634 = vmatpush2.bf16.msra.mxu0 %v3719
    %4635 = vmatprep.subr.bf16.mxu0 %v3708
    %4636 = vmatpush2.bf16.msra.mxu0 %v3707
    %4637 = vmatprep.subr.bf16.mxu0 %v3696
    %4638 = vmatpush2.bf16.msra.mxu0 %v3695
    %4639 = vmatprep.mubr.bf16.mxu0 %v2434
    %4640 = vmatmul.mubr.bf16.gmra.mxu0 %v2433
    %v4641 = vpop.f32.mrf.mxu0
    %v4642 = vadd.f32 %v2379, %v4641
    %v4643 = vpop.f32.mrf.mxu0
    %v4644 = vadd.f32 %v2383, %v4643
    %v4645 = vpop.f32.mrf.mxu0
    %v4646 = vpop.f32.mrf.mxu0
    %4647 = vdwg.mxu0
    %4648 = vmatprep.subr.bf16.mxu0 %v3876
    %4649 = vmatpush1.bf16.msra.mxu0 %v3875
    %4650 = vmatprep.subr.bf16.mxu0 %v3864
    %4651 = vmatpush1.bf16.msra.mxu0 %v3863
    %4652 = vmatprep.subr.bf16.mxu0 %v3852
    %4653 = vmatpush1.bf16.msra.mxu0 %v3851
    %4654 = vmatprep.subr.bf16.mxu0 %v3840
    %4655 = vmatpush1.bf16.msra.mxu0 %v3839
    %4656 = vmatprep.subr.bf16.mxu0 %v3828
    %4657 = vmatpush1.bf16.msra.mxu0 %v3827
    %4658 = vmatprep.subr.bf16.mxu0 %v3816
    %4659 = vmatpush1.bf16.msra.mxu0 %v3815
    %4660 = vmatprep.subr.bf16.mxu0 %v3804
    %4661 = vmatpush1.bf16.msra.mxu0 %v3803
    %4662 = vmatprep.subr.bf16.mxu0 %v3792
    %4663 = vmatpush1.bf16.msra.mxu0 %v3791
    %4664 = vmatprep.subr.bf16.mxu0 %v3972
    %4665 = vmatpush2.bf16.msra.mxu0 %v3971
    %4666 = vmatprep.subr.bf16.mxu0 %v3960
    %4667 = vmatpush2.bf16.msra.mxu0 %v3959
    %4668 = vmatprep.subr.bf16.mxu0 %v3948
    %4669 = vmatpush2.bf16.msra.mxu0 %v3947
    %4670 = vmatprep.subr.bf16.mxu0 %v3936
    %4671 = vmatpush2.bf16.msra.mxu0 %v3935
    %4672 = vmatprep.subr.bf16.mxu0 %v3924
    %4673 = vmatpush2.bf16.msra.mxu0 %v3923
    %4674 = vmatprep.subr.bf16.mxu0 %v3912
    %4675 = vmatpush2.bf16.msra.mxu0 %v3911
    %4676 = vmatprep.subr.bf16.mxu0 %v3900
    %4677 = vmatpush2.bf16.msra.mxu0 %v3899
    %4678 = vmatprep.subr.bf16.mxu0 %v3888
    %4679 = vmatpush2.bf16.msra.mxu0 %v3887
    %4680 = vmatprep.mubr.bf16.mxu0 %v2436
    %4681 = vmatmul.mubr.bf16.gmra.mxu0 %v2435
    %v4682 = vpop.f32.mrf.mxu0
    %v4683 = vadd.f32 %v4642, %v4682
    %v4684 = vpop.f32.mrf.mxu0
    %v4685 = vadd.f32 %v4644, %v4684
    %v4686 = vpop.f32.mrf.mxu0
    %v4687 = vpop.f32.mrf.mxu0
    %4688 = vdwg.mxu0
    %4689 = vmatprep.subr.bf16.mxu0 %v3686
    %4690 = vmatpush1.bf16.msra.mxu0 %v3685
    %4691 = vmatprep.subr.bf16.mxu0 %v3674
    %4692 = vmatpush1.bf16.msra.mxu0 %v3673
    %4693 = vmatprep.subr.bf16.mxu0 %v3662
    %4694 = vmatpush1.bf16.msra.mxu0 %v3661
    %4695 = vmatprep.subr.bf16.mxu0 %v3650
    %4696 = vmatpush1.bf16.msra.mxu0 %v3649
    %4697 = vmatprep.subr.bf16.mxu0 %v3638
    %4698 = vmatpush1.bf16.msra.mxu0 %v3637
    %4699 = vmatprep.subr.bf16.mxu0 %v3626
    %4700 = vmatpush1.bf16.msra.mxu0 %v3625
    %4701 = vmatprep.subr.bf16.mxu0 %v3614
    %4702 = vmatpush1.bf16.msra.mxu0 %v3613
    %4703 = vmatprep.subr.bf16.mxu0 %v3602
    %4704 = vmatpush1.bf16.msra.mxu0 %v3601
    %4705 = vmatprep.subr.bf16.mxu0 %v3782
    %4706 = vmatpush2.bf16.msra.mxu0 %v3781
    %4707 = vmatprep.subr.bf16.mxu0 %v3770
    %4708 = vmatpush2.bf16.msra.mxu0 %v3769
    %4709 = vmatprep.subr.bf16.mxu0 %v3758
    %4710 = vmatpush2.bf16.msra.mxu0 %v3757
    %4711 = vmatprep.subr.bf16.mxu0 %v3746
    %4712 = vmatpush2.bf16.msra.mxu0 %v3745
    %4713 = vmatprep.subr.bf16.mxu0 %v3734
    %4714 = vmatpush2.bf16.msra.mxu0 %v3733
    %4715 = vmatprep.subr.bf16.mxu0 %v3722
    %4716 = vmatpush2.bf16.msra.mxu0 %v3721
    %4717 = vmatprep.subr.bf16.mxu0 %v3710
    %4718 = vmatpush2.bf16.msra.mxu0 %v3709
    %4719 = vmatprep.subr.bf16.mxu0 %v3698
    %4720 = vmatpush2.bf16.msra.mxu0 %v3697
    %4721 = vmatprep.mubr.bf16.mxu0 %v2434
    %4722 = vmatmul.mubr.bf16.gmra.mxu0 %v2433
    %v4723 = vpop.f32.mrf.mxu0
    %v4724 = vadd.f32 %v2387, %v4723
    %v4725 = vpop.f32.mrf.mxu0
    %v4726 = vadd.f32 %v2391, %v4725
    %v4727 = vpop.f32.mrf.mxu0
    %v4728 = vpop.f32.mrf.mxu0
    %4729 = vdwg.mxu0
    %4730 = vmatprep.subr.bf16.mxu0 %v3878
    %4731 = vmatpush1.bf16.msra.mxu0 %v3877
    %4732 = vmatprep.subr.bf16.mxu0 %v3866
    %4733 = vmatpush1.bf16.msra.mxu0 %v3865
    %4734 = vmatprep.subr.bf16.mxu0 %v3854
    %4735 = vmatpush1.bf16.msra.mxu0 %v3853
    %4736 = vmatprep.subr.bf16.mxu0 %v3842
    %4737 = vmatpush1.bf16.msra.mxu0 %v3841
    %4738 = vmatprep.subr.bf16.mxu0 %v3830
    %4739 = vmatpush1.bf16.msra.mxu0 %v3829
    %4740 = vmatprep.subr.bf16.mxu0 %v3818
    %4741 = vmatpush1.bf16.msra.mxu0 %v3817
    %4742 = vmatprep.subr.bf16.mxu0 %v3806
    %4743 = vmatpush1.bf16.msra.mxu0 %v3805
    %4744 = vmatprep.subr.bf16.mxu0 %v3794
    %4745 = vmatpush1.bf16.msra.mxu0 %v3793
    %4746 = vmatprep.subr.bf16.mxu0 %v3974
    %4747 = vmatpush2.bf16.msra.mxu0 %v3973
    %4748 = vmatprep.subr.bf16.mxu0 %v3962
    %4749 = vmatpush2.bf16.msra.mxu0 %v3961
    %4750 = vmatprep.subr.bf16.mxu0 %v3950
    %4751 = vmatpush2.bf16.msra.mxu0 %v3949
    %4752 = vmatprep.subr.bf16.mxu0 %v3938
    %4753 = vmatpush2.bf16.msra.mxu0 %v3937
    %4754 = vmatprep.subr.bf16.mxu0 %v3926
    %4755 = vmatpush2.bf16.msra.mxu0 %v3925
    %4756 = vmatprep.subr.bf16.mxu0 %v3914
    %4757 = vmatpush2.bf16.msra.mxu0 %v3913
    %4758 = vmatprep.subr.bf16.mxu0 %v3902
    %4759 = vmatpush2.bf16.msra.mxu0 %v3901
    %4760 = vmatprep.subr.bf16.mxu0 %v3890
    %4761 = vmatpush2.bf16.msra.mxu0 %v3889
    %4762 = vmatprep.mubr.bf16.mxu0 %v2436
    %4763 = vmatmul.mubr.bf16.gmra.mxu0 %v2435
    %v4764 = vpop.f32.mrf.mxu0
    %v4765 = vadd.f32 %v4724, %v4764
    %v4766 = vpop.f32.mrf.mxu0
    %v4767 = vadd.f32 %v4726, %v4766
    %v4768 = vpop.f32.mrf.mxu0
    %v4769 = vpop.f32.mrf.mxu0
    %4770 = vdwg.mxu0
    %4771 = vmatprep.subr.bf16.mxu0 %v3688
    %4772 = vmatpush1.bf16.msra.mxu0 %v3687
    %4773 = vmatprep.subr.bf16.mxu0 %v3676
    %4774 = vmatpush1.bf16.msra.mxu0 %v3675
    %4775 = vmatprep.subr.bf16.mxu0 %v3664
    %4776 = vmatpush1.bf16.msra.mxu0 %v3663
    %4777 = vmatprep.subr.bf16.mxu0 %v3652
    %4778 = vmatpush1.bf16.msra.mxu0 %v3651
    %4779 = vmatprep.subr.bf16.mxu0 %v3640
    %4780 = vmatpush1.bf16.msra.mxu0 %v3639
    %4781 = vmatprep.subr.bf16.mxu0 %v3628
    %4782 = vmatpush1.bf16.msra.mxu0 %v3627
    %4783 = vmatprep.subr.bf16.mxu0 %v3616
    %4784 = vmatpush1.bf16.msra.mxu0 %v3615
    %4785 = vmatprep.subr.bf16.mxu0 %v3604
    %4786 = vmatpush1.bf16.msra.mxu0 %v3603
    %4787 = vmatprep.subr.bf16.mxu0 %v3784
    %4788 = vmatpush2.bf16.msra.mxu0 %v3783
    %4789 = vmatprep.subr.bf16.mxu0 %v3772
    %4790 = vmatpush2.bf16.msra.mxu0 %v3771
    %4791 = vmatprep.subr.bf16.mxu0 %v3760
    %4792 = vmatpush2.bf16.msra.mxu0 %v3759
    %4793 = vmatprep.subr.bf16.mxu0 %v3748
    %4794 = vmatpush2.bf16.msra.mxu0 %v3747
    %4795 = vmatprep.subr.bf16.mxu0 %v3736
    %4796 = vmatpush2.bf16.msra.mxu0 %v3735
    %4797 = vmatprep.subr.bf16.mxu0 %v3724
    %4798 = vmatpush2.bf16.msra.mxu0 %v3723
    %4799 = vmatprep.subr.bf16.mxu0 %v3712
    %4800 = vmatpush2.bf16.msra.mxu0 %v3711
    %4801 = vmatprep.subr.bf16.mxu0 %v3700
    %4802 = vmatpush2.bf16.msra.mxu0 %v3699
    %4803 = vmatprep.mubr.bf16.mxu0 %v2434
    %4804 = vmatmul.mubr.bf16.gmra.mxu0 %v2433
    %v4805 = vpop.f32.mrf.mxu0
    %v4806 = vadd.f32 %v2395, %v4805
    %v4807 = vpop.f32.mrf.mxu0
    %v4808 = vadd.f32 %v2399, %v4807
    %v4809 = vpop.f32.mrf.mxu0
    %v4810 = vpop.f32.mrf.mxu0
    %4811 = vdwg.mxu0
    %4812 = vmatprep.subr.bf16.mxu0 %v3880
    %4813 = vmatpush1.bf16.msra.mxu0 %v3879
    %4814 = vmatprep.subr.bf16.mxu0 %v3868
    %4815 = vmatpush1.bf16.msra.mxu0 %v3867
    %4816 = vmatprep.subr.bf16.mxu0 %v3856
    %4817 = vmatpush1.bf16.msra.mxu0 %v3855
    %4818 = vmatprep.subr.bf16.mxu0 %v3844
    %4819 = vmatpush1.bf16.msra.mxu0 %v3843
    %4820 = vmatprep.subr.bf16.mxu0 %v3832
    %4821 = vmatpush1.bf16.msra.mxu0 %v3831
    %4822 = vmatprep.subr.bf16.mxu0 %v3820
    %4823 = vmatpush1.bf16.msra.mxu0 %v3819
    %4824 = vmatprep.subr.bf16.mxu0 %v3808
    %4825 = vmatpush1.bf16.msra.mxu0 %v3807
    %4826 = vmatprep.subr.bf16.mxu0 %v3796
    %4827 = vmatpush1.bf16.msra.mxu0 %v3795
    %4828 = vmatprep.subr.bf16.mxu0 %v3976
    %4829 = vmatpush2.bf16.msra.mxu0 %v3975
    %4830 = vmatprep.subr.bf16.mxu0 %v3964
    %4831 = vmatpush2.bf16.msra.mxu0 %v3963
    %4832 = vmatprep.subr.bf16.mxu0 %v3952
    %4833 = vmatpush2.bf16.msra.mxu0 %v3951
    %4834 = vmatprep.subr.bf16.mxu0 %v3940
    %4835 = vmatpush2.bf16.msra.mxu0 %v3939
    %4836 = vmatprep.subr.bf16.mxu0 %v3928
    %4837 = vmatpush2.bf16.msra.mxu0 %v3927
    %4838 = vmatprep.subr.bf16.mxu0 %v3916
    %4839 = vmatpush2.bf16.msra.mxu0 %v3915
    %4840 = vmatprep.subr.bf16.mxu0 %v3904
    %4841 = vmatpush2.bf16.msra.mxu0 %v3903
    %4842 = vmatprep.subr.bf16.mxu0 %v3892
    %4843 = vmatpush2.bf16.msra.mxu0 %v3891
    %4844 = vmatprep.mubr.bf16.mxu0 %v2436
    %4845 = vmatmul.mubr.bf16.gmra.mxu0 %v2435
    %v4846 = vpop.f32.mrf.mxu0
    %v4847 = vadd.f32 %v4806, %v4846
    %v4848 = vpop.f32.mrf.mxu0
    %v4849 = vadd.f32 %v4808, %v4848
    %v4850 = vpop.f32.mrf.mxu0
    %v4851 = vpop.f32.mrf.mxu0
    %4852 = vdwg.mxu0
    %v4853 = vxor.u32 %v4601, 2147483648
    %v4854 = vxor.u32 %v4603, 2147483648
    %v4855 = vxor.u32 %v4683, 2147483648
    %v4856 = vxor.u32 %v4685, 2147483648
    %v4857 = vmul.f32 %v4853, 1.442695
    %v4858 = vpow.pop %v4857
    %v4859 = vmul.f32 %v4854, 1.442695
    %v4860 = vpow.pop %v4859
    %v4861 = vmul.f32 %v4855, 1.442695
    %v4862 = vpow.pop %v4861
    %v4863 = vmul.f32 %v4856, 1.442695
    %v4864 = vpow.pop %v4863
    %v4865 = vadd.f32 %v4858, 1.0
    %v4866 = vadd.f32 %v4860, 1.0
    %v4867 = vadd.f32 %v4862, 1.0
    %v4868 = vadd.f32 %v4864, 1.0
    %v4869 = vrcp.pop %v4865
    %v4870 = vmul.f32 1.0, %v4869
    %v4871 = vrcp.pop %v4866
    %v4872 = vmul.f32 1.0, %v4871
    %v4873 = vrcp.pop %v4867
    %v4874 = vmul.f32 1.0, %v4873
    %v4875 = vrcp.pop %v4868
    %v4876 = vmul.f32 1.0, %v4875
    %v4877 = vpack.c.bf16 %v326, %v322
    %v4878 = vpack.c.bf16 %v328, %v324
    %v4879 = vpack.c.bf16 %v336, %v332
    %v4880 = vpack.c.bf16 %v338, %v334
    %v4881 = vpack.c.bf16 %v346, %v342
    %v4882 = vpack.c.bf16 %v348, %v344
    %v4883 = vpack.c.bf16 %v356, %v352
    %v4884 = vpack.c.bf16 %v358, %v354
    %v4885 = vpack.c.bf16 %v366, %v362
    %v4886 = vpack.c.bf16 %v368, %v364
    %v4887 = vpack.c.bf16 %v376, %v372
    %v4888 = vpack.c.bf16 %v378, %v374
    %v4889 = vpack.c.bf16 %v386, %v382
    %v4890 = vpack.c.bf16 %v388, %v384
    %v4891 = vpack.c.bf16 %v396, %v392
    %v4892 = vpack.c.bf16 %v398, %v394
    %v4893 = vld [vmem:[%s5] sm:$0xff]
    %v4894 = vld [vmem:[%s5 + $0x8] sm:$0xff]
    %v4895 = vld [vmem:[%s5 + $0x10] sm:$0xff]
    %v4896 = vld [vmem:[%s5 + $0x18] sm:$0xff]
    %v4897 = vld [vmem:[%s5 + $0x20] sm:$0xff]
    %v4898 = vld [vmem:[%s5 + $0x28] sm:$0xff]
    %v4899 = vld [vmem:[%s5 + $0x30] sm:$0xff]
    %v4900 = vld [vmem:[%s5 + $0x38] sm:$0xff]
    %v4901 = vld [vmem:[%s5 + $0x40] sm:$0xff]
    %v4902 = vld [vmem:[%s5 + $0x48] sm:$0xff]
    %v4903 = vld [vmem:[%s5 + $0x50] sm:$0xff]
    %v4904 = vld [vmem:[%s5 + $0x58] sm:$0xff]
    %v4905 = vld [vmem:[%s5 + $0x60] sm:$0xff]
    %v4906 = vld [vmem:[%s5 + $0x68] sm:$0xff]
    %v4907 = vld [vmem:[%s5 + $0x70] sm:$0xff]
    %v4908 = vld [vmem:[%s5 + $0x78] sm:$0xff]
    %v4909 = vld [vmem:[%s5 + $0x80] sm:$0xff]
    %v4910 = vld [vmem:[%s5 + $0x88] sm:$0xff]
    %v4911 = vld [vmem:[%s5 + $0x90] sm:$0xff]
    %v4912 = vld [vmem:[%s5 + $0x98] sm:$0xff]
    %v4913 = vld [vmem:[%s5 + $0xa0] sm:$0xff]
    %v4914 = vld [vmem:[%s5 + $0xa8] sm:$0xff]
    %v4915 = vld [vmem:[%s5 + $0xb0] sm:$0xff]
    %v4916 = vld [vmem:[%s5 + $0xb8] sm:$0xff]
    %v4917 = vld [vmem:[%s5 + $0xc0] sm:$0xff]
    %v4918 = vld [vmem:[%s5 + $0xc8] sm:$0xff]
    %v4919 = vld [vmem:[%s5 + $0xd0] sm:$0xff]
    %v4920 = vld [vmem:[%s5 + $0xd8] sm:$0xff]
    %v4921 = vld [vmem:[%s5 + $0xe0] sm:$0xff]
    %v4922 = vld [vmem:[%s5 + $0xe8] sm:$0xff]
    %v4923 = vld [vmem:[%s5 + $0xf0] sm:$0xff]
    %v4924 = vld [vmem:[%s5 + $0xf8] sm:$0xff]
    %v4925 = vld [vmem:[%s5 + $0x100] sm:$0xff]
    %v4926 = vld [vmem:[%s5 + $0x108] sm:$0xff]
    %v4927 = vld [vmem:[%s5 + $0x110] sm:$0xff]
    %v4928 = vld [vmem:[%s5 + $0x118] sm:$0xff]
    %v4929 = vld [vmem:[%s5 + $0x120] sm:$0xff]
    %v4930 = vld [vmem:[%s5 + $0x128] sm:$0xff]
    %v4931 = vld [vmem:[%s5 + $0x130] sm:$0xff]
    %v4932 = vld [vmem:[%s5 + $0x138] sm:$0xff]
    %v4933 = vld [vmem:[%s5 + $0x140] sm:$0xff]
    %v4934 = vld [vmem:[%s5 + $0x148] sm:$0xff]
    %v4935 = vld [vmem:[%s5 + $0x150] sm:$0xff]
    %v4936 = vld [vmem:[%s5 + $0x158] sm:$0xff]
    %v4937 = vld [vmem:[%s5 + $0x160] sm:$0xff]
    %v4938 = vld [vmem:[%s5 + $0x168] sm:$0xff]
    %v4939 = vld [vmem:[%s5 + $0x170] sm:$0xff]
    %v4940 = vld [vmem:[%s5 + $0x178] sm:$0xff]
    %v4941 = vld [vmem:[%s5 + $0x180] sm:$0xff]
    %v4942 = vld [vmem:[%s5 + $0x188] sm:$0xff]
    %v4943 = vld [vmem:[%s5 + $0x190] sm:$0xff]
    %v4944 = vld [vmem:[%s5 + $0x198] sm:$0xff]
    %v4945 = vld [vmem:[%s5 + $0x1a0] sm:$0xff]
    %v4946 = vld [vmem:[%s5 + $0x1a8] sm:$0xff]
    %v4947 = vld [vmem:[%s5 + $0x1b0] sm:$0xff]
    %v4948 = vld [vmem:[%s5 + $0x1b8] sm:$0xff]
    %v4949 = vld [vmem:[%s5 + $0x1c0] sm:$0xff]
    %v4950 = vld [vmem:[%s5 + $0x1c8] sm:$0xff]
    %v4951 = vld [vmem:[%s5 + $0x1d0] sm:$0xff]
    %v4952 = vld [vmem:[%s5 + $0x1d8] sm:$0xff]
    %v4953 = vld [vmem:[%s5 + $0x1e0] sm:$0xff]
    %v4954 = vld [vmem:[%s5 + $0x1e8] sm:$0xff]
    %v4955 = vld [vmem:[%s5 + $0x1f0] sm:$0xff]
    %v4956 = vld [vmem:[%s5 + $0x1f8] sm:$0xff]
    %v4957 = vld [vmem:[#allocation7] sm:$0xf]
    %v4959 = vlaneseq
    %v4960 = vshrl.u32 %v4959, 7
    %v4961 = vsub.s32 0, %v4960
    %v4962 = vrot.slane %v4957, %v4961
    %v4963 = vlaneseq
    %v4964 = vshrl.u32 %v4963, 7
    %v4965 = vsub.s32 1, %v4964
    %v4966 = vrot.slane %v4957, %v4965
    %v4967 = vlaneseq
    %v4968 = vshrl.u32 %v4967, 7
    %v4969 = vsub.s32 2, %v4968
    %v4970 = vrot.slane %v4957, %v4969
    %v4971 = vlaneseq
    %v4972 = vshrl.u32 %v4971, 7
    %v4973 = vsub.s32 3, %v4972
    %v4974 = vrot.slane %v4957, %v4973
    %v5043 = vunpack.c.l.b16 %v4893
    %v5044 = vunpack.c.h.b16 %v4893
    %v5045 = vunpack.c.l.b16 %v4894
    %v5046 = vunpack.c.h.b16 %v4894
    %v5047 = vunpack.c.l.b16 %v4895
    %v5048 = vunpack.c.h.b16 %v4895
    %v5049 = vunpack.c.l.b16 %v4896
    %v5050 = vunpack.c.h.b16 %v4896
    %v5051 = vunpack.c.l.b16 %v4897
    %v5052 = vunpack.c.h.b16 %v4897
    %v5053 = vunpack.c.l.b16 %v4898
    %v5054 = vunpack.c.h.b16 %v4898
    %v5055 = vunpack.c.l.b16 %v4899
    %v5056 = vunpack.c.h.b16 %v4899
    %v5057 = vunpack.c.l.b16 %v4900
    %v5058 = vunpack.c.h.b16 %v4900
    %v5059 = vunpack.c.l.b16 %v4901
    %v5060 = vunpack.c.h.b16 %v4901
    %v5061 = vunpack.c.l.b16 %v4902
    %v5062 = vunpack.c.h.b16 %v4902
    %v5063 = vunpack.c.l.b16 %v4903
    %v5064 = vunpack.c.h.b16 %v4903
    %v5065 = vunpack.c.l.b16 %v4904
    %v5066 = vunpack.c.h.b16 %v4904
    %v5067 = vunpack.c.l.b16 %v4905
    %v5068 = vunpack.c.h.b16 %v4905
    %v5069 = vunpack.c.l.b16 %v4906
    %v5070 = vunpack.c.h.b16 %v4906
    %v5071 = vunpack.c.l.b16 %v4907
    %v5072 = vunpack.c.h.b16 %v4907
    %v5073 = vunpack.c.l.b16 %v4908
    %v5074 = vunpack.c.h.b16 %v4908
    %v5075 = vunpack.c.l.b16 %v4909
    %v5076 = vunpack.c.h.b16 %v4909
    %v5077 = vunpack.c.l.b16 %v4910
    %v5078 = vunpack.c.h.b16 %v4910
    %v5079 = vunpack.c.l.b16 %v4911
    %v5080 = vunpack.c.h.b16 %v4911
    %v5081 = vunpack.c.l.b16 %v4912
    %v5082 = vunpack.c.h.b16 %v4912
    %v5083 = vunpack.c.l.b16 %v4913
    %v5084 = vunpack.c.h.b16 %v4913
    %v5085 = vunpack.c.l.b16 %v4914
    %v5086 = vunpack.c.h.b16 %v4914
    %v5087 = vunpack.c.l.b16 %v4915
    %v5088 = vunpack.c.h.b16 %v4915
    %v5089 = vunpack.c.l.b16 %v4916
    %v5090 = vunpack.c.h.b16 %v4916
    %v5091 = vunpack.c.l.b16 %v4917
    %v5092 = vunpack.c.h.b16 %v4917
    %v5093 = vunpack.c.l.b16 %v4918
    %v5094 = vunpack.c.h.b16 %v4918
    %v5095 = vunpack.c.l.b16 %v4919
    %v5096 = vunpack.c.h.b16 %v4919
    %v5097 = vunpack.c.l.b16 %v4920
    %v5098 = vunpack.c.h.b16 %v4920
    %v5099 = vunpack.c.l.b16 %v4921
    %v5100 = vunpack.c.h.b16 %v4921
    %v5101 = vunpack.c.l.b16 %v4922
    %v5102 = vunpack.c.h.b16 %v4922
    %v5103 = vunpack.c.l.b16 %v4923
    %v5104 = vunpack.c.h.b16 %v4923
    %v5105 = vunpack.c.l.b16 %v4924
    %v5106 = vunpack.c.h.b16 %v4924
    %v5107 = vunpack.c.l.b16 %v4925
    %v5108 = vunpack.c.h.b16 %v4925
    %v5109 = vunpack.c.l.b16 %v4926
    %v5110 = vunpack.c.h.b16 %v4926
    %v5111 = vunpack.c.l.b16 %v4927
    %v5112 = vunpack.c.h.b16 %v4927
    %v5113 = vunpack.c.l.b16 %v4928
    %v5114 = vunpack.c.h.b16 %v4928
    %v5115 = vunpack.c.l.b16 %v4929
    %v5116 = vunpack.c.h.b16 %v4929
    %v5117 = vunpack.c.l.b16 %v4930
    %v5118 = vunpack.c.h.b16 %v4930
    %v5119 = vunpack.c.l.b16 %v4931
    %v5120 = vunpack.c.h.b16 %v4931
    %v5121 = vunpack.c.l.b16 %v4932
    %v5122 = vunpack.c.h.b16 %v4932
    %v5123 = vunpack.c.l.b16 %v4933
    %v5124 = vunpack.c.h.b16 %v4933
    %v5125 = vunpack.c.l.b16 %v4934
    %v5126 = vunpack.c.h.b16 %v4934
    %v5127 = vunpack.c.l.b16 %v4935
    %v5128 = vunpack.c.h.b16 %v4935
    %v5129 = vunpack.c.l.b16 %v4936
    %v5130 = vunpack.c.h.b16 %v4936
    %v5131 = vunpack.c.l.b16 %v4937
    %v5132 = vunpack.c.h.b16 %v4937
    %v5133 = vunpack.c.l.b16 %v4938
    %v5134 = vunpack.c.h.b16 %v4938
    %v5135 = vunpack.c.l.b16 %v4939
    %v5136 = vunpack.c.h.b16 %v4939
    %v5137 = vunpack.c.l.b16 %v4940
    %v5138 = vunpack.c.h.b16 %v4940
    %v5139 = vunpack.c.l.b16 %v4941
    %v5140 = vunpack.c.h.b16 %v4941
    %v5141 = vunpack.c.l.b16 %v4942
    %v5142 = vunpack.c.h.b16 %v4942
    %v5143 = vunpack.c.l.b16 %v4943
    %v5144 = vunpack.c.h.b16 %v4943
    %v5145 = vunpack.c.l.b16 %v4944
    %v5146 = vunpack.c.h.b16 %v4944
    %v5147 = vunpack.c.l.b16 %v4945
    %v5148 = vunpack.c.h.b16 %v4945
    %v5149 = vunpack.c.l.b16 %v4946
    %v5150 = vunpack.c.h.b16 %v4946
    %v5151 = vunpack.c.l.b16 %v4947
    %v5152 = vunpack.c.h.b16 %v4947
    %v5153 = vunpack.c.l.b16 %v4948
    %v5154 = vunpack.c.h.b16 %v4948
    %v5155 = vunpack.c.l.b16 %v4949
    %v5156 = vunpack.c.h.b16 %v4949
    %v5157 = vunpack.c.l.b16 %v4950
    %v5158 = vunpack.c.h.b16 %v4950
    %v5159 = vunpack.c.l.b16 %v4951
    %v5160 = vunpack.c.h.b16 %v4951
    %v5161 = vunpack.c.l.b16 %v4952
    %v5162 = vunpack.c.h.b16 %v4952
    %v5163 = vunpack.c.l.b16 %v4953
    %v5164 = vunpack.c.h.b16 %v4953
    %v5165 = vunpack.c.l.b16 %v4954
    %v5166 = vunpack.c.h.b16 %v4954
    %v5167 = vunpack.c.l.b16 %v4955
    %v5168 = vunpack.c.h.b16 %v4955
    %v5169 = vunpack.c.l.b16 %v4956
    %v5170 = vunpack.c.h.b16 %v4956
    %v5171 = vpack.c.b16 %v5047, %v5043
    %v5172 = vpack.c.b16 %v5048, %v5044
    %v5173 = vpack.c.b16 %v5049, %v5045
    %v5174 = vpack.c.b16 %v5050, %v5046
    %v5175 = vpack.c.b16 %v5055, %v5051
    %v5176 = vpack.c.b16 %v5056, %v5052
    %v5177 = vpack.c.b16 %v5057, %v5053
    %v5178 = vpack.c.b16 %v5058, %v5054
    %v5179 = vpack.c.b16 %v5063, %v5059
    %v5180 = vpack.c.b16 %v5064, %v5060
    %v5181 = vpack.c.b16 %v5065, %v5061
    %v5182 = vpack.c.b16 %v5066, %v5062
    %v5183 = vpack.c.b16 %v5071, %v5067
    %v5184 = vpack.c.b16 %v5072, %v5068
    %v5185 = vpack.c.b16 %v5073, %v5069
    %v5186 = vpack.c.b16 %v5074, %v5070
    %v5187 = vpack.c.b16 %v5079, %v5075
    %v5188 = vpack.c.b16 %v5080, %v5076
    %v5189 = vpack.c.b16 %v5081, %v5077
    %v5190 = vpack.c.b16 %v5082, %v5078
    %v5191 = vpack.c.b16 %v5087, %v5083
    %v5192 = vpack.c.b16 %v5088, %v5084
    %v5193 = vpack.c.b16 %v5089, %v5085
    %v5194 = vpack.c.b16 %v5090, %v5086
    %v5195 = vpack.c.b16 %v5095, %v5091
    %v5196 = vpack.c.b16 %v5096, %v5092
    %v5197 = vpack.c.b16 %v5097, %v5093
    %v5198 = vpack.c.b16 %v5098, %v5094
    %v5199 = vpack.c.b16 %v5103, %v5099
    %v5200 = vpack.c.b16 %v5104, %v5100
    %v5201 = vpack.c.b16 %v5105, %v5101
    %v5202 = vpack.c.b16 %v5106, %v5102
    %v5203 = vpack.c.b16 %v5111, %v5107
    %v5204 = vpack.c.b16 %v5112, %v5108
    %v5205 = vpack.c.b16 %v5113, %v5109
    %v5206 = vpack.c.b16 %v5114, %v5110
    %v5207 = vpack.c.b16 %v5119, %v5115
    %v5208 = vpack.c.b16 %v5120, %v5116
    %v5209 = vpack.c.b16 %v5121, %v5117
    %v5210 = vpack.c.b16 %v5122, %v5118
    %v5211 = vpack.c.b16 %v5127, %v5123
    %v5212 = vpack.c.b16 %v5128, %v5124
    %v5213 = vpack.c.b16 %v5129, %v5125
    %v5214 = vpack.c.b16 %v5130, %v5126
    %v5215 = vpack.c.b16 %v5135, %v5131
    %v5216 = vpack.c.b16 %v5136, %v5132
    %v5217 = vpack.c.b16 %v5137, %v5133
    %v5218 = vpack.c.b16 %v5138, %v5134
    %v5219 = vpack.c.b16 %v5143, %v5139
    %v5220 = vpack.c.b16 %v5144, %v5140
    %v5221 = vpack.c.b16 %v5145, %v5141
    %v5222 = vpack.c.b16 %v5146, %v5142
    %v5223 = vpack.c.b16 %v5151, %v5147
    %v5224 = vpack.c.b16 %v5152, %v5148
    %v5225 = vpack.c.b16 %v5153, %v5149
    %v5226 = vpack.c.b16 %v5154, %v5150
    %v5227 = vpack.c.b16 %v5159, %v5155
    %v5228 = vpack.c.b16 %v5160, %v5156
    %v5229 = vpack.c.b16 %v5161, %v5157
    %v5230 = vpack.c.b16 %v5162, %v5158
    %v5231 = vpack.c.b16 %v5167, %v5163
    %v5232 = vpack.c.b16 %v5168, %v5164
    %v5233 = vpack.c.b16 %v5169, %v5165
    %v5234 = vpack.c.b16 %v5170, %v5166
    %5299 = vmatprep.subr.bf16.mxu0 %v5200
    %5300 = vmatpush1.bf16.msra.mxu0 %v5199
    %5301 = vmatprep.subr.bf16.mxu0 %v5196
    %5302 = vmatpush1.bf16.msra.mxu0 %v5195
    %5303 = vmatprep.subr.bf16.mxu0 %v5192
    %5304 = vmatpush1.bf16.msra.mxu0 %v5191
    %5305 = vmatprep.subr.bf16.mxu0 %v5188
    %5306 = vmatpush1.bf16.msra.mxu0 %v5187
    %5307 = vmatprep.subr.bf16.mxu0 %v5184
    %5308 = vmatpush1.bf16.msra.mxu0 %v5183
    %5309 = vmatprep.subr.bf16.mxu0 %v5180
    %5310 = vmatpush1.bf16.msra.mxu0 %v5179
    %5311 = vmatprep.subr.bf16.mxu0 %v5176
    %5312 = vmatpush1.bf16.msra.mxu0 %v5175
    %5313 = vmatprep.subr.bf16.mxu0 %v5172
    %5314 = vmatpush1.bf16.msra.mxu0 %v5171
    %5315 = vmatprep.subr.bf16.mxu0 %v5232
    %5316 = vmatpush2.bf16.msra.mxu0 %v5231
    %5317 = vmatprep.subr.bf16.mxu0 %v5228
    %5318 = vmatpush2.bf16.msra.mxu0 %v5227
    %5319 = vmatprep.subr.bf16.mxu0 %v5224
    %5320 = vmatpush2.bf16.msra.mxu0 %v5223
    %5321 = vmatprep.subr.bf16.mxu0 %v5220
    %5322 = vmatpush2.bf16.msra.mxu0 %v5219
    %5323 = vmatprep.subr.bf16.mxu0 %v5216
    %5324 = vmatpush2.bf16.msra.mxu0 %v5215
    %5325 = vmatprep.subr.bf16.mxu0 %v5212
    %5326 = vmatpush2.bf16.msra.mxu0 %v5211
    %5327 = vmatprep.subr.bf16.mxu0 %v5208
    %5328 = vmatpush2.bf16.msra.mxu0 %v5207
    %5329 = vmatprep.subr.bf16.mxu0 %v5204
    %5330 = vmatpush2.bf16.msra.mxu0 %v5203
    %5331 = vmatprep.mubr.bf16.mxu0 %v4878
    %5332 = vmatmul.mubr.bf16.gmra.mxu0 %v4877
    %v5333 = vpop.f32.mrf.mxu0
    %v5334 = vadd.f32 %v4962, %v5333
    %v5335 = vpop.f32.mrf.mxu0
    %v5336 = vadd.f32 %v4966, %v5335
    %v5337 = vpop.f32.mrf.mxu0
    %v5338 = vadd.f32 %v4962, %v5337
    %v5339 = vpop.f32.mrf.mxu0
    %v5340 = vadd.f32 %v4966, %v5339
    %5341 = vmatprep.mubr.bf16.mxu0 %v4880
    %5342 = vmatmul.mubr.bf16.gmra.mxu0 %v4879
    %v5343 = vpop.f32.mrf.mxu0
    %v5344 = vadd.f32 %v4962, %v5343
    %v5345 = vpop.f32.mrf.mxu0
    %v5346 = vadd.f32 %v4966, %v5345
    %v5347 = vpop.f32.mrf.mxu0
    %v5348 = vadd.f32 %v4962, %v5347
    %v5349 = vpop.f32.mrf.mxu0
    %v5350 = vadd.f32 %v4966, %v5349
    %5351 = vmatprep.mubr.bf16.mxu0 %v4882
    %5352 = vmatmul.mubr.bf16.gmra.mxu0 %v4881
    %v5353 = vpop.f32.mrf.mxu0
    %v5354 = vadd.f32 %v4962, %v5353
    %v5355 = vpop.f32.mrf.mxu0
    %v5356 = vadd.f32 %v4966, %v5355
    %v5357 = vpop.f32.mrf.mxu0
    %v5358 = vadd.f32 %v4962, %v5357
    %v5359 = vpop.f32.mrf.mxu0
    %v5360 = vadd.f32 %v4966, %v5359
    %5361 = vmatprep.mubr.bf16.mxu0 %v4884
    %5362 = vmatmul.mubr.bf16.gmra.mxu0 %v4883
    %v5363 = vpop.f32.mrf.mxu0
    %v5364 = vadd.f32 %v4962, %v5363
    %v5365 = vpop.f32.mrf.mxu0
    %v5366 = vadd.f32 %v4966, %v5365
    %v5367 = vpop.f32.mrf.mxu0
    %v5368 = vadd.f32 %v4962, %v5367
    %v5369 = vpop.f32.mrf.mxu0
    %v5370 = vadd.f32 %v4966, %v5369
    %5371 = vmatprep.mubr.bf16.mxu0 %v4886
    %5372 = vmatmul.mubr.bf16.gmra.mxu0 %v4885
    %v5373 = vpop.f32.mrf.mxu0
    %v5374 = vadd.f32 %v4962, %v5373
    %v5375 = vpop.f32.mrf.mxu0
    %v5376 = vadd.f32 %v4966, %v5375
    %v5377 = vpop.f32.mrf.mxu0
    %v5378 = vadd.f32 %v4962, %v5377
    %v5379 = vpop.f32.mrf.mxu0
    %v5380 = vadd.f32 %v4966, %v5379
    %5381 = vmatprep.mubr.bf16.mxu0 %v4888
    %5382 = vmatmul.mubr.bf16.gmra.mxu0 %v4887
    %v5383 = vpop.f32.mrf.mxu0
    %v5384 = vadd.f32 %v4962, %v5383
    %v5385 = vpop.f32.mrf.mxu0
    %v5386 = vadd.f32 %v4966, %v5385
    %v5387 = vpop.f32.mrf.mxu0
    %v5388 = vadd.f32 %v4962, %v5387
    %v5389 = vpop.f32.mrf.mxu0
    %v5390 = vadd.f32 %v4966, %v5389
    %5391 = vmatprep.mubr.bf16.mxu0 %v4890
    %5392 = vmatmul.mubr.bf16.gmra.mxu0 %v4889
    %v5393 = vpop.f32.mrf.mxu0
    %v5394 = vadd.f32 %v4962, %v5393
    %v5395 = vpop.f32.mrf.mxu0
    %v5396 = vadd.f32 %v4966, %v5395
    %v5397 = vpop.f32.mrf.mxu0
    %v5398 = vadd.f32 %v4962, %v5397
    %v5399 = vpop.f32.mrf.mxu0
    %v5400 = vadd.f32 %v4966, %v5399
    %5401 = vmatprep.mubr.bf16.mxu0 %v4892
    %5402 = vmatmul.mubr.bf16.gmra.mxu0 %v4891
    %v5403 = vpop.f32.mrf.mxu0
    %v5404 = vadd.f32 %v4962, %v5403
    %v5405 = vpop.f32.mrf.mxu0
    %v5406 = vadd.f32 %v4966, %v5405
    %v5407 = vpop.f32.mrf.mxu0
    %v5408 = vadd.f32 %v4962, %v5407
    %v5409 = vpop.f32.mrf.mxu0
    %v5410 = vadd.f32 %v4966, %v5409
    %5411 = vdwg.mxu0
    %5412 = vmatprep.subr.bf16.mxu0 %v5202
    %5413 = vmatpush1.bf16.msra.mxu0 %v5201
    %5414 = vmatprep.subr.bf16.mxu0 %v5198
    %5415 = vmatpush1.bf16.msra.mxu0 %v5197
    %5416 = vmatprep.subr.bf16.mxu0 %v5194
    %5417 = vmatpush1.bf16.msra.mxu0 %v5193
    %5418 = vmatprep.subr.bf16.mxu0 %v5190
    %5419 = vmatpush1.bf16.msra.mxu0 %v5189
    %5420 = vmatprep.subr.bf16.mxu0 %v5186
    %5421 = vmatpush1.bf16.msra.mxu0 %v5185
    %5422 = vmatprep.subr.bf16.mxu0 %v5182
    %5423 = vmatpush1.bf16.msra.mxu0 %v5181
    %5424 = vmatprep.subr.bf16.mxu0 %v5178
    %5425 = vmatpush1.bf16.msra.mxu0 %v5177
    %5426 = vmatprep.subr.bf16.mxu0 %v5174
    %5427 = vmatpush1.bf16.msra.mxu0 %v5173
    %5428 = vmatprep.subr.bf16.mxu0 %v5234
    %5429 = vmatpush2.bf16.msra.mxu0 %v5233
    %5430 = vmatprep.subr.bf16.mxu0 %v5230
    %5431 = vmatpush2.bf16.msra.mxu0 %v5229
    %5432 = vmatprep.subr.bf16.mxu0 %v5226
    %5433 = vmatpush2.bf16.msra.mxu0 %v5225
    %5434 = vmatprep.subr.bf16.mxu0 %v5222
    %5435 = vmatpush2.bf16.msra.mxu0 %v5221
    %5436 = vmatprep.subr.bf16.mxu0 %v5218
    %5437 = vmatpush2.bf16.msra.mxu0 %v5217
    %5438 = vmatprep.subr.bf16.mxu0 %v5214
    %5439 = vmatpush2.bf16.msra.mxu0 %v5213
    %5440 = vmatprep.subr.bf16.mxu0 %v5210
    %5441 = vmatpush2.bf16.msra.mxu0 %v5209
    %5442 = vmatprep.subr.bf16.mxu0 %v5206
    %5443 = vmatpush2.bf16.msra.mxu0 %v5205
    %5444 = vmatprep.mubr.bf16.mxu0 %v4878
    %5445 = vmatmul.mubr.bf16.gmra.mxu0 %v4877
    %v5446 = vpop.f32.mrf.mxu0
    %v5447 = vadd.f32 %v4970, %v5446
    %v5448 = vpop.f32.mrf.mxu0
    %v5449 = vadd.f32 %v4974, %v5448
    %v5450 = vpop.f32.mrf.mxu0
    %v5451 = vadd.f32 %v4970, %v5450
    %v5452 = vpop.f32.mrf.mxu0
    %v5453 = vadd.f32 %v4974, %v5452
    %5454 = vmatprep.mubr.bf16.mxu0 %v4880
    %5455 = vmatmul.mubr.bf16.gmra.mxu0 %v4879
    %v5456 = vpop.f32.mrf.mxu0
    %v5457 = vadd.f32 %v4970, %v5456
    %v5458 = vpop.f32.mrf.mxu0
    %v5459 = vadd.f32 %v4974, %v5458
    %v5460 = vpop.f32.mrf.mxu0
    %v5461 = vadd.f32 %v4970, %v5460
    %v5462 = vpop.f32.mrf.mxu0
    %v5463 = vadd.f32 %v4974, %v5462
    %5464 = vmatprep.mubr.bf16.mxu0 %v4882
    %5465 = vmatmul.mubr.bf16.gmra.mxu0 %v4881
    %v5466 = vpop.f32.mrf.mxu0
    %v5467 = vadd.f32 %v4970, %v5466
    %v5468 = vpop.f32.mrf.mxu0
    %v5469 = vadd.f32 %v4974, %v5468
    %v5470 = vpop.f32.mrf.mxu0
    %v5471 = vadd.f32 %v4970, %v5470
    %v5472 = vpop.f32.mrf.mxu0
    %v5473 = vadd.f32 %v4974, %v5472
    %5474 = vmatprep.mubr.bf16.mxu0 %v4884
    %5475 = vmatmul.mubr.bf16.gmra.mxu0 %v4883
    %v5476 = vpop.f32.mrf.mxu0
    %v5477 = vadd.f32 %v4970, %v5476
    %v5478 = vpop.f32.mrf.mxu0
    %v5479 = vadd.f32 %v4974, %v5478
    %v5480 = vpop.f32.mrf.mxu0
    %v5481 = vadd.f32 %v4970, %v5480
    %v5482 = vpop.f32.mrf.mxu0
    %v5483 = vadd.f32 %v4974, %v5482
    %5484 = vmatprep.mubr.bf16.mxu0 %v4886
    %5485 = vmatmul.mubr.bf16.gmra.mxu0 %v4885
    %v5486 = vpop.f32.mrf.mxu0
    %v5487 = vadd.f32 %v4970, %v5486
    %v5488 = vpop.f32.mrf.mxu0
    %v5489 = vadd.f32 %v4974, %v5488
    %v5490 = vpop.f32.mrf.mxu0
    %v5491 = vadd.f32 %v4970, %v5490
    %v5492 = vpop.f32.mrf.mxu0
    %v5493 = vadd.f32 %v4974, %v5492
    %5494 = vmatprep.mubr.bf16.mxu0 %v4888
    %5495 = vmatmul.mubr.bf16.gmra.mxu0 %v4887
    %v5496 = vpop.f32.mrf.mxu0
    %v5497 = vadd.f32 %v4970, %v5496
    %v5498 = vpop.f32.mrf.mxu0
    %v5499 = vadd.f32 %v4974, %v5498
    %v5500 = vpop.f32.mrf.mxu0
    %v5501 = vadd.f32 %v4970, %v5500
    %v5502 = vpop.f32.mrf.mxu0
    %v5503 = vadd.f32 %v4974, %v5502
    %5504 = vmatprep.mubr.bf16.mxu0 %v4890
    %5505 = vmatmul.mubr.bf16.gmra.mxu0 %v4889
    %v5506 = vpop.f32.mrf.mxu0
    %v5507 = vadd.f32 %v4970, %v5506
    %v5508 = vpop.f32.mrf.mxu0
    %v5509 = vadd.f32 %v4974, %v5508
    %v5510 = vpop.f32.mrf.mxu0
    %v5511 = vadd.f32 %v4970, %v5510
    %v5512 = vpop.f32.mrf.mxu0
    %v5513 = vadd.f32 %v4974, %v5512
    %5514 = vmatprep.mubr.bf16.mxu0 %v4892
    %5515 = vmatmul.mubr.bf16.gmra.mxu0 %v4891
    %v5516 = vpop.f32.mrf.mxu0
    %v5517 = vadd.f32 %v4970, %v5516
    %v5518 = vpop.f32.mrf.mxu0
    %v5519 = vadd.f32 %v4974, %v5518
    %v5520 = vpop.f32.mrf.mxu0
    %v5521 = vadd.f32 %v4970, %v5520
    %v5522 = vpop.f32.mrf.mxu0
    %v5523 = vadd.f32 %v4974, %v5522
    %5524 = vdwg.mxu0
    %v5529 = vcombine.low %v4870, %v4872
    %v5530 = vcombine.low %v4874, %v4876
    %v5532 = vunpack.c.l.s4 1966171168
    %v5533 = vunpack.c.0.s8 %v5532
    %v5534 = vlaneseq
    %v5535 = vshrl.u32 %v5534, 7
    %v5536 = vsub.s32 %v5533, %v5535
    %v5537 = vrot.slane %v5529, %v5536
    %v5539 = vunpack.c.l.s4 1966171168
    %v5540 = vunpack.c.0.s8 %v5539
    %v5541 = vlaneseq
    %v5542 = vshrl.u32 %v5541, 7
    %v5543 = vsub.s32 %v5540, %v5542
    %v5544 = vrot.slane %v5530, %v5543
    %v5545 = vcombine.low %v5537, %v5544
    %v5546 = vcombine.high %v5537, %v5544
    %v5548 = vunpack.c.l.s4 1966171168
    %v5549 = vunpack.c.0.s8 %v5548
    %v5550 = vlaneseq
    %v5551 = vshrl.u32 %v5550, 7
    %v5552 = vsub.s32 %v5549, %v5551
    %v5553 = vrot.slane %v5545, %v5552
    %v5555 = vunpack.c.l.s4 1966171168
    %v5556 = vunpack.c.0.s8 %v5555
    %v5557 = vlaneseq
    %v5558 = vshrl.u32 %v5557, 7
    %v5559 = vsub.s32 %v5556, %v5558
    %v5560 = vrot.slane %v5546, %v5559
    %v5565 = vcombine.low %v4437, %v4439
    %v5566 = vcombine.low %v4519, %v4521
    %v5568 = vunpack.c.l.s4 1966171168
    %v5569 = vunpack.c.0.s8 %v5568
    %v5570 = vlaneseq
    %v5571 = vshrl.u32 %v5570, 7
    %v5572 = vsub.s32 %v5569, %v5571
    %v5573 = vrot.slane %v5565, %v5572
    %v5575 = vunpack.c.l.s4 1966171168
    %v5576 = vunpack.c.0.s8 %v5575
    %v5577 = vlaneseq
    %v5578 = vshrl.u32 %v5577, 7
    %v5579 = vsub.s32 %v5576, %v5578
    %v5580 = vrot.slane %v5566, %v5579
    %v5581 = vcombine.low %v5573, %v5580
    %v5582 = vcombine.high %v5573, %v5580
    %v5584 = vunpack.c.l.s4 1966171168
    %v5585 = vunpack.c.0.s8 %v5584
    %v5586 = vlaneseq
    %v5587 = vshrl.u32 %v5586, 7
    %v5588 = vsub.s32 %v5585, %v5587
    %v5589 = vrot.slane %v5581, %v5588
    %v5591 = vunpack.c.l.s4 1966171168
    %v5592 = vunpack.c.0.s8 %v5591
    %v5593 = vlaneseq
    %v5594 = vshrl.u32 %v5593, 7
    %v5595 = vsub.s32 %v5592, %v5594
    %v5596 = vrot.slane %v5582, %v5595
    %v5597 = vlaneseq
    %v5598 = vshrl.u32 %v5597, 7
    %v5599 = vsub.s32 0, %v5598
    %v5600 = vrot.slane %v5589, %v5599
    %v5601 = vlaneseq
    %v5602 = vshrl.u32 %v5601, 7
    %v5603 = vsub.s32 1, %v5602
    %v5604 = vrot.slane %v5589, %v5603
    %v5605 = vlaneseq
    %v5606 = vshrl.u32 %v5605, 7
    %v5607 = vsub.s32 2, %v5606
    %v5608 = vrot.slane %v5589, %v5607
    %v5609 = vlaneseq
    %v5610 = vshrl.u32 %v5609, 7
    %v5611 = vsub.s32 3, %v5610
    %v5612 = vrot.slane %v5589, %v5611
    %v5613 = vlaneseq
    %v5614 = vshrl.u32 %v5613, 7
    %v5615 = vsub.s32 0, %v5614
    %v5616 = vrot.slane %v5596, %v5615
    %v5617 = vlaneseq
    %v5618 = vshrl.u32 %v5617, 7
    %v5619 = vsub.s32 1, %v5618
    %v5620 = vrot.slane %v5596, %v5619
    %v5621 = vlaneseq
    %v5622 = vshrl.u32 %v5621, 7
    %v5623 = vsub.s32 2, %v5622
    %v5624 = vrot.slane %v5596, %v5623
    %v5625 = vlaneseq
    %v5626 = vshrl.u32 %v5625, 7
    %v5627 = vsub.s32 3, %v5626
    %v5628 = vrot.slane %v5596, %v5627
    %v5637 = vmul.f32 %v5334, %v5600
    %v5638 = vmul.f32 %v5336, %v5604
    %v5639 = vmul.f32 %v5447, %v5608
    %v5640 = vmul.f32 %v5449, %v5612
    %v5641 = vmul.f32 %v5338, %v5600
    %v5642 = vmul.f32 %v5340, %v5604
    %v5643 = vmul.f32 %v5451, %v5608
    %v5644 = vmul.f32 %v5453, %v5612
    %v5645 = vmul.f32 %v5344, %v5600
    %v5646 = vmul.f32 %v5346, %v5604
    %v5647 = vmul.f32 %v5457, %v5608
    %v5648 = vmul.f32 %v5459, %v5612
    %v5649 = vmul.f32 %v5348, %v5600
    %v5650 = vmul.f32 %v5350, %v5604
    %v5651 = vmul.f32 %v5461, %v5608
    %v5652 = vmul.f32 %v5463, %v5612
    %v5653 = vmul.f32 %v5354, %v5600
    %v5654 = vmul.f32 %v5356, %v5604
    %v5655 = vmul.f32 %v5467, %v5608
    %v5656 = vmul.f32 %v5469, %v5612
    %v5657 = vmul.f32 %v5358, %v5600
    %v5658 = vmul.f32 %v5360, %v5604
    %v5659 = vmul.f32 %v5471, %v5608
    %v5660 = vmul.f32 %v5473, %v5612
    %v5661 = vmul.f32 %v5364, %v5600
    %v5662 = vmul.f32 %v5366, %v5604
    %v5663 = vmul.f32 %v5477, %v5608
    %v5664 = vmul.f32 %v5479, %v5612
    %v5665 = vmul.f32 %v5368, %v5600
    %v5666 = vmul.f32 %v5370, %v5604
    %v5667 = vmul.f32 %v5481, %v5608
    %v5668 = vmul.f32 %v5483, %v5612
    %v5669 = vmul.f32 %v5374, %v5616
    %v5670 = vmul.f32 %v5376, %v5620
    %v5671 = vmul.f32 %v5487, %v5624
    %v5672 = vmul.f32 %v5489, %v5628
    %v5673 = vmul.f32 %v5378, %v5616
    %v5674 = vmul.f32 %v5380, %v5620
    %v5675 = vmul.f32 %v5491, %v5624
    %v5676 = vmul.f32 %v5493, %v5628
    %v5677 = vmul.f32 %v5384, %v5616
    %v5678 = vmul.f32 %v5386, %v5620
    %v5679 = vmul.f32 %v5497, %v5624
    %v5680 = vmul.f32 %v5499, %v5628
    %v5681 = vmul.f32 %v5388, %v5616
    %v5682 = vmul.f32 %v5390, %v5620
    %v5683 = vmul.f32 %v5501, %v5624
    %v5684 = vmul.f32 %v5503, %v5628
    %v5685 = vmul.f32 %v5394, %v5616
    %v5686 = vmul.f32 %v5396, %v5620
    %v5687 = vmul.f32 %v5507, %v5624
    %v5688 = vmul.f32 %v5509, %v5628
    %v5689 = vmul.f32 %v5398, %v5616
    %v5690 = vmul.f32 %v5400, %v5620
    %v5691 = vmul.f32 %v5511, %v5624
    %v5692 = vmul.f32 %v5513, %v5628
    %v5693 = vmul.f32 %v5404, %v5616
    %v5694 = vmul.f32 %v5406, %v5620
    %v5695 = vmul.f32 %v5517, %v5624
    %v5696 = vmul.f32 %v5519, %v5628
    %v5697 = vmul.f32 %v5408, %v5616
    %v5698 = vmul.f32 %v5410, %v5620
    %v5699 = vmul.f32 %v5521, %v5624
    %v5700 = vmul.f32 %v5523, %v5628
    %v5701 = vtanh.pop %v5637
    %v5702 = vtanh.pop %v5638
    %v5703 = vtanh.pop %v5639
    %v5704 = vtanh.pop %v5640
    %v5705 = vtanh.pop %v5641
    %v5706 = vtanh.pop %v5642
    %v5707 = vtanh.pop %v5643
    %v5708 = vtanh.pop %v5644
    %v5709 = vtanh.pop %v5645
    %v5710 = vtanh.pop %v5646
    %v5711 = vtanh.pop %v5647
    %v5712 = vtanh.pop %v5648
    %v5713 = vtanh.pop %v5649
    %v5714 = vtanh.pop %v5650
    %v5715 = vtanh.pop %v5651
    %v5716 = vtanh.pop %v5652
    %v5717 = vtanh.pop %v5653
    %v5718 = vtanh.pop %v5654
    %v5719 = vtanh.pop %v5655
    %v5720 = vtanh.pop %v5656
    %v5721 = vtanh.pop %v5657
    %v5722 = vtanh.pop %v5658
    %v5723 = vtanh.pop %v5659
    %v5724 = vtanh.pop %v5660
    %v5725 = vtanh.pop %v5661
    %v5726 = vtanh.pop %v5662
    %v5727 = vtanh.pop %v5663
    %v5728 = vtanh.pop %v5664
    %v5729 = vtanh.pop %v5665
    %v5730 = vtanh.pop %v5666
    %v5731 = vtanh.pop %v5667
    %v5732 = vtanh.pop %v5668
    %v5733 = vtanh.pop %v5669
    %v5734 = vtanh.pop %v5670
    %v5735 = vtanh.pop %v5671
    %v5736 = vtanh.pop %v5672
    %v5737 = vtanh.pop %v5673
    %v5738 = vtanh.pop %v5674
    %v5739 = vtanh.pop %v5675
    %v5740 = vtanh.pop %v5676
    %v5741 = vtanh.pop %v5677
    %v5742 = vtanh.pop %v5678
    %v5743 = vtanh.pop %v5679
    %v5744 = vtanh.pop %v5680
    %v5745 = vtanh.pop %v5681
    %v5746 = vtanh.pop %v5682
    %v5747 = vtanh.pop %v5683
    %v5748 = vtanh.pop %v5684
    %v5749 = vtanh.pop %v5685
    %v5750 = vtanh.pop %v5686
    %v5751 = vtanh.pop %v5687
    %v5752 = vtanh.pop %v5688
    %v5753 = vtanh.pop %v5689
    %v5754 = vtanh.pop %v5690
    %v5755 = vtanh.pop %v5691
    %v5756 = vtanh.pop %v5692
    %v5757 = vtanh.pop %v5693
    %v5758 = vtanh.pop %v5694
    %v5759 = vtanh.pop %v5695
    %v5760 = vtanh.pop %v5696
    %v5761 = vtanh.pop %v5697
    %v5762 = vtanh.pop %v5698
    %v5763 = vtanh.pop %v5699
    %v5764 = vtanh.pop %v5700
    %v5765 = vlaneseq
    %v5766 = vshrl.u32 %v5765, 7
    %v5767 = vsub.s32 0, %v5766
    %v5768 = vrot.slane %v5553, %v5767
    %v5769 = vlaneseq
    %v5770 = vshrl.u32 %v5769, 7
    %v5771 = vsub.s32 1, %v5770
    %v5772 = vrot.slane %v5553, %v5771
    %v5773 = vlaneseq
    %v5774 = vshrl.u32 %v5773, 7
    %v5775 = vsub.s32 2, %v5774
    %v5776 = vrot.slane %v5553, %v5775
    %v5777 = vlaneseq
    %v5778 = vshrl.u32 %v5777, 7
    %v5779 = vsub.s32 3, %v5778
    %v5780 = vrot.slane %v5553, %v5779
    %v5781 = vlaneseq
    %v5782 = vshrl.u32 %v5781, 7
    %v5783 = vsub.s32 0, %v5782
    %v5784 = vrot.slane %v5560, %v5783
    %v5785 = vlaneseq
    %v5786 = vshrl.u32 %v5785, 7
    %v5787 = vsub.s32 1, %v5786
    %v5788 = vrot.slane %v5560, %v5787
    %v5789 = vlaneseq
    %v5790 = vshrl.u32 %v5789, 7
    %v5791 = vsub.s32 2, %v5790
    %v5792 = vrot.slane %v5560, %v5791
    %v5793 = vlaneseq
    %v5794 = vshrl.u32 %v5793, 7
    %v5795 = vsub.s32 3, %v5794
    %v5796 = vrot.slane %v5560, %v5795
    %v5805 = vmul.f32 %v5768, %v5701
    %v5806 = vmul.f32 %v5772, %v5702
    %v5807 = vmul.f32 %v5776, %v5703
    %v5808 = vmul.f32 %v5780, %v5704
    %v5809 = vmul.f32 %v5768, %v5705
    %v5810 = vmul.f32 %v5772, %v5706
    %v5811 = vmul.f32 %v5776, %v5707
    %v5812 = vmul.f32 %v5780, %v5708
    %v5813 = vmul.f32 %v5768, %v5709
    %v5814 = vmul.f32 %v5772, %v5710
    %v5815 = vmul.f32 %v5776, %v5711
    %v5816 = vmul.f32 %v5780, %v5712
    %v5817 = vmul.f32 %v5768, %v5713
    %v5818 = vmul.f32 %v5772, %v5714
    %v5819 = vmul.f32 %v5776, %v5715
    %v5820 = vmul.f32 %v5780, %v5716
    %v5821 = vmul.f32 %v5768, %v5717
    %v5822 = vmul.f32 %v5772, %v5718
    %v5823 = vmul.f32 %v5776, %v5719
    %v5824 = vmul.f32 %v5780, %v5720
    %v5825 = vmul.f32 %v5768, %v5721
    %v5826 = vmul.f32 %v5772, %v5722
    %v5827 = vmul.f32 %v5776, %v5723
    %v5828 = vmul.f32 %v5780, %v5724
    %v5829 = vmul.f32 %v5768, %v5725
    %v5830 = vmul.f32 %v5772, %v5726
    %v5831 = vmul.f32 %v5776, %v5727
    %v5832 = vmul.f32 %v5780, %v5728
    %v5833 = vmul.f32 %v5768, %v5729
    %v5834 = vmul.f32 %v5772, %v5730
    %v5835 = vmul.f32 %v5776, %v5731
    %v5836 = vmul.f32 %v5780, %v5732
    %v5837 = vmul.f32 %v5784, %v5733
    %v5838 = vmul.f32 %v5788, %v5734
    %v5839 = vmul.f32 %v5792, %v5735
    %v5840 = vmul.f32 %v5796, %v5736
    %v5841 = vmul.f32 %v5784, %v5737
    %v5842 = vmul.f32 %v5788, %v5738
    %v5843 = vmul.f32 %v5792, %v5739
    %v5844 = vmul.f32 %v5796, %v5740
    %v5845 = vmul.f32 %v5784, %v5741
    %v5846 = vmul.f32 %v5788, %v5742
    %v5847 = vmul.f32 %v5792, %v5743
    %v5848 = vmul.f32 %v5796, %v5744
    %v5849 = vmul.f32 %v5784, %v5745
    %v5850 = vmul.f32 %v5788, %v5746
    %v5851 = vmul.f32 %v5792, %v5747
    %v5852 = vmul.f32 %v5796, %v5748
    %v5853 = vmul.f32 %v5784, %v5749
    %v5854 = vmul.f32 %v5788, %v5750
    %v5855 = vmul.f32 %v5792, %v5751
    %v5856 = vmul.f32 %v5796, %v5752
    %v5857 = vmul.f32 %v5784, %v5753
    %v5858 = vmul.f32 %v5788, %v5754
    %v5859 = vmul.f32 %v5792, %v5755
    %v5860 = vmul.f32 %v5796, %v5756
    %v5861 = vmul.f32 %v5784, %v5757
    %v5862 = vmul.f32 %v5788, %v5758
    %v5863 = vmul.f32 %v5792, %v5759
    %v5864 = vmul.f32 %v5796, %v5760
    %v5865 = vmul.f32 %v5784, %v5761
    %v5866 = vmul.f32 %v5788, %v5762
    %v5867 = vmul.f32 %v5792, %v5763
    %v5868 = vmul.f32 %v5796, %v5764
    %v5869 = vadd.f32 %v5334, %v5805
    %v5870 = vadd.f32 %v5336, %v5806
    %v5871 = vadd.f32 %v5447, %v5807
    %v5872 = vadd.f32 %v5449, %v5808
    %v5873 = vadd.f32 %v5338, %v5809
    %v5874 = vadd.f32 %v5340, %v5810
    %v5875 = vadd.f32 %v5451, %v5811
    %v5876 = vadd.f32 %v5453, %v5812
    %v5877 = vadd.f32 %v5344, %v5813
    %v5878 = vadd.f32 %v5346, %v5814
    %v5879 = vadd.f32 %v5457, %v5815
    %v5880 = vadd.f32 %v5459, %v5816
    %v5881 = vadd.f32 %v5348, %v5817
    %v5882 = vadd.f32 %v5350, %v5818
    %v5883 = vadd.f32 %v5461, %v5819
    %v5884 = vadd.f32 %v5463, %v5820
    %v5885 = vadd.f32 %v5354, %v5821
    %v5886 = vadd.f32 %v5356, %v5822
    %v5887 = vadd.f32 %v5467, %v5823
    %v5888 = vadd.f32 %v5469, %v5824
    %v5889 = vadd.f32 %v5358, %v5825
    %v5890 = vadd.f32 %v5360, %v5826
    %v5891 = vadd.f32 %v5471, %v5827
    %v5892 = vadd.f32 %v5473, %v5828
    %v5893 = vadd.f32 %v5364, %v5829
    %v5894 = vadd.f32 %v5366, %v5830
    %v5895 = vadd.f32 %v5477, %v5831
    %v5896 = vadd.f32 %v5479, %v5832
    %v5897 = vadd.f32 %v5368, %v5833
    %v5898 = vadd.f32 %v5370, %v5834
    %v5899 = vadd.f32 %v5481, %v5835
    %v5900 = vadd.f32 %v5483, %v5836
    %v5901 = vadd.f32 %v5374, %v5837
    %v5902 = vadd.f32 %v5376, %v5838
    %v5903 = vadd.f32 %v5487, %v5839
    %v5904 = vadd.f32 %v5489, %v5840
    %v5905 = vadd.f32 %v5378, %v5841
    %v5906 = vadd.f32 %v5380, %v5842
    %v5907 = vadd.f32 %v5491, %v5843
    %v5908 = vadd.f32 %v5493, %v5844
    %v5909 = vadd.f32 %v5384, %v5845
    %v5910 = vadd.f32 %v5386, %v5846
    %v5911 = vadd.f32 %v5497, %v5847
    %v5912 = vadd.f32 %v5499, %v5848
    %v5913 = vadd.f32 %v5388, %v5849
    %v5914 = vadd.f32 %v5390, %v5850
    %v5915 = vadd.f32 %v5501, %v5851
    %v5916 = vadd.f32 %v5503, %v5852
    %v5917 = vadd.f32 %v5394, %v5853
    %v5918 = vadd.f32 %v5396, %v5854
    %v5919 = vadd.f32 %v5507, %v5855
    %v5920 = vadd.f32 %v5509, %v5856
    %v5921 = vadd.f32 %v5398, %v5857
    %v5922 = vadd.f32 %v5400, %v5858
    %v5923 = vadd.f32 %v5511, %v5859
    %v5924 = vadd.f32 %v5513, %v5860
    %v5925 = vadd.f32 %v5404, %v5861
    %v5926 = vadd.f32 %v5406, %v5862
    %v5927 = vadd.f32 %v5517, %v5863
    %v5928 = vadd.f32 %v5519, %v5864
    %v5929 = vadd.f32 %v5408, %v5865
    %v5930 = vadd.f32 %v5410, %v5866
    %v5931 = vadd.f32 %v5521, %v5867
    %v5932 = vadd.f32 %v5523, %v5868
    %v5937 = vcombine.low %v4765, %v4767
    %v5938 = vcombine.low %v4847, %v4849
    %v5940 = vunpack.c.l.s4 1966171168
    %v5941 = vunpack.c.0.s8 %v5940
    %v5942 = vlaneseq
    %v5943 = vshrl.u32 %v5942, 7
    %v5944 = vsub.s32 %v5941, %v5943
    %v5945 = vrot.slane %v5937, %v5944
    %v5947 = vunpack.c.l.s4 1966171168
    %v5948 = vunpack.c.0.s8 %v5947
    %v5949 = vlaneseq
    %v5950 = vshrl.u32 %v5949, 7
    %v5951 = vsub.s32 %v5948, %v5950
    %v5952 = vrot.slane %v5938, %v5951
    %v5953 = vcombine.low %v5945, %v5952
    %v5954 = vcombine.high %v5945, %v5952
    %v5956 = vunpack.c.l.s4 1966171168
    %v5957 = vunpack.c.0.s8 %v5956
    %v5958 = vlaneseq
    %v5959 = vshrl.u32 %v5958, 7
    %v5960 = vsub.s32 %v5957, %v5959
    %v5961 = vrot.slane %v5953, %v5960
    %v5963 = vunpack.c.l.s4 1966171168
    %v5964 = vunpack.c.0.s8 %v5963
    %v5965 = vlaneseq
    %v5966 = vshrl.u32 %v5965, 7
    %v5967 = vsub.s32 %v5964, %v5966
    %v5968 = vrot.slane %v5954, %v5967
    %v5969 = vlaneseq
    %v5970 = vshrl.u32 %v5969, 7
    %v5971 = vsub.s32 0, %v5970
    %v5972 = vrot.slane %v5961, %v5971
    %v5973 = vlaneseq
    %v5974 = vshrl.u32 %v5973, 7
    %v5975 = vsub.s32 1, %v5974
    %v5976 = vrot.slane %v5961, %v5975
    %v5977 = vlaneseq
    %v5978 = vshrl.u32 %v5977, 7
    %v5979 = vsub.s32 2, %v5978
    %v5980 = vrot.slane %v5961, %v5979
    %v5981 = vlaneseq
    %v5982 = vshrl.u32 %v5981, 7
    %v5983 = vsub.s32 3, %v5982
    %v5984 = vrot.slane %v5961, %v5983
    %v5985 = vlaneseq
    %v5986 = vshrl.u32 %v5985, 7
    %v5987 = vsub.s32 0, %v5986
    %v5988 = vrot.slane %v5968, %v5987
    %v5989 = vlaneseq
    %v5990 = vshrl.u32 %v5989, 7
    %v5991 = vsub.s32 1, %v5990
    %v5992 = vrot.slane %v5968, %v5991
    %v5993 = vlaneseq
    %v5994 = vshrl.u32 %v5993, 7
    %v5995 = vsub.s32 2, %v5994
    %v5996 = vrot.slane %v5968, %v5995
    %v5997 = vlaneseq
    %v5998 = vshrl.u32 %v5997, 7
    %v5999 = vsub.s32 3, %v5998
    %v6000 = vrot.slane %v5968, %v5999
    %v6009 = vmul.f32 %v5869, %v5972
    %v6010 = vmul.f32 %v5870, %v5976
    %v6011 = vmul.f32 %v5871, %v5980
    %v6012 = vmul.f32 %v5872, %v5984
    %v6013 = vmul.f32 %v5873, %v5972
    %v6014 = vmul.f32 %v5874, %v5976
    %v6015 = vmul.f32 %v5875, %v5980
    %v6016 = vmul.f32 %v5876, %v5984
    %v6017 = vmul.f32 %v5877, %v5972
    %v6018 = vmul.f32 %v5878, %v5976
    %v6019 = vmul.f32 %v5879, %v5980
    %v6020 = vmul.f32 %v5880, %v5984
    %v6021 = vmul.f32 %v5881, %v5972
    %v6022 = vmul.f32 %v5882, %v5976
    %v6023 = vmul.f32 %v5883, %v5980
    %v6024 = vmul.f32 %v5884, %v5984
    %v6025 = vmul.f32 %v5885, %v5972
    %v6026 = vmul.f32 %v5886, %v5976
    %v6027 = vmul.f32 %v5887, %v5980
    %v6028 = vmul.f32 %v5888, %v5984
    %v6029 = vmul.f32 %v5889, %v5972
    %v6030 = vmul.f32 %v5890, %v5976
    %v6031 = vmul.f32 %v5891, %v5980
    %v6032 = vmul.f32 %v5892, %v5984
    %v6033 = vmul.f32 %v5893, %v5972
    %v6034 = vmul.f32 %v5894, %v5976
    %v6035 = vmul.f32 %v5895, %v5980
    %v6036 = vmul.f32 %v5896, %v5984
    %v6037 = vmul.f32 %v5897, %v5972
    %v6038 = vmul.f32 %v5898, %v5976
    %v6039 = vmul.f32 %v5899, %v5980
    %v6040 = vmul.f32 %v5900, %v5984
    %v6041 = vmul.f32 %v5901, %v5988
    %v6042 = vmul.f32 %v5902, %v5992
    %v6043 = vmul.f32 %v5903, %v5996
    %v6044 = vmul.f32 %v5904, %v6000
    %v6045 = vmul.f32 %v5905, %v5988
    %v6046 = vmul.f32 %v5906, %v5992
    %v6047 = vmul.f32 %v5907, %v5996
    %v6048 = vmul.f32 %v5908, %v6000
    %v6049 = vmul.f32 %v5909, %v5988
    %v6050 = vmul.f32 %v5910, %v5992
    %v6051 = vmul.f32 %v5911, %v5996
    %v6052 = vmul.f32 %v5912, %v6000
    %v6053 = vmul.f32 %v5913, %v5988
    %v6054 = vmul.f32 %v5914, %v5992
    %v6055 = vmul.f32 %v5915, %v5996
    %v6056 = vmul.f32 %v5916, %v6000
    %v6057 = vmul.f32 %v5917, %v5988
    %v6058 = vmul.f32 %v5918, %v5992
    %v6059 = vmul.f32 %v5919, %v5996
    %v6060 = vmul.f32 %v5920, %v6000
    %v6061 = vmul.f32 %v5921, %v5988
    %v6062 = vmul.f32 %v5922, %v5992
    %v6063 = vmul.f32 %v5923, %v5996
    %v6064 = vmul.f32 %v5924, %v6000
    %v6065 = vmul.f32 %v5925, %v5988
    %v6066 = vmul.f32 %v5926, %v5992
    %v6067 = vmul.f32 %v5927, %v5996
    %v6068 = vmul.f32 %v5928, %v6000
    %v6069 = vmul.f32 %v5929, %v5988
    %v6070 = vmul.f32 %v5930, %v5992
    %v6071 = vmul.f32 %v5931, %v5996
    %v6072 = vmul.f32 %v5932, %v6000
    %v6073 = vadd.f32 %v6009, %v6010
    %v6074 = vadd.f32 %v6073, %v6011
    %v6075 = vadd.f32 %v6074, %v6012
    %6076 = vadd.xlane.f32.xlu0 %v6075
    %v6077 = vpop.xlane.xlu0 %6076
    %v6078 = vadd.f32 %v6013, %v6014
    %v6079 = vadd.f32 %v6078, %v6015
    %v6080 = vadd.f32 %v6079, %v6016
    %6081 = vadd.xlane.f32.xlu0 %v6080
    %v6082 = vpop.xlane.xlu0 %6081
    %v6083 = vadd.f32 %v6017, %v6018
    %v6084 = vadd.f32 %v6083, %v6019
    %v6085 = vadd.f32 %v6084, %v6020
    %6086 = vadd.xlane.f32.xlu0 %v6085
    %v6087 = vpop.xlane.xlu0 %6086
    %v6088 = vadd.f32 %v6021, %v6022
    %v6089 = vadd.f32 %v6088, %v6023
    %v6090 = vadd.f32 %v6089, %v6024
    %6091 = vadd.xlane.f32.xlu0 %v6090
    %v6092 = vpop.xlane.xlu0 %6091
    %v6093 = vadd.f32 %v6025, %v6026
    %v6094 = vadd.f32 %v6093, %v6027
    %v6095 = vadd.f32 %v6094, %v6028
    %6096 = vadd.xlane.f32.xlu0 %v6095
    %v6097 = vpop.xlane.xlu0 %6096
    %v6098 = vadd.f32 %v6029, %v6030
    %v6099 = vadd.f32 %v6098, %v6031
    %v6100 = vadd.f32 %v6099, %v6032
    %6101 = vadd.xlane.f32.xlu0 %v6100
    %v6102 = vpop.xlane.xlu0 %6101
    %v6103 = vadd.f32 %v6033, %v6034
    %v6104 = vadd.f32 %v6103, %v6035
    %v6105 = vadd.f32 %v6104, %v6036
    %6106 = vadd.xlane.f32.xlu0 %v6105
    %v6107 = vpop.xlane.xlu0 %6106
    %v6108 = vadd.f32 %v6037, %v6038
    %v6109 = vadd.f32 %v6108, %v6039
    %v6110 = vadd.f32 %v6109, %v6040
    %6111 = vadd.xlane.f32.xlu0 %v6110
    %v6112 = vpop.xlane.xlu0 %6111
    %v6113 = vadd.f32 %v6041, %v6042
    %v6114 = vadd.f32 %v6113, %v6043
    %v6115 = vadd.f32 %v6114, %v6044
    %6116 = vadd.xlane.f32.xlu0 %v6115
    %v6117 = vpop.xlane.xlu0 %6116
    %v6118 = vadd.f32 %v6045, %v6046
    %v6119 = vadd.f32 %v6118, %v6047
    %v6120 = vadd.f32 %v6119, %v6048
    %6121 = vadd.xlane.f32.xlu0 %v6120
    %v6122 = vpop.xlane.xlu0 %6121
    %v6123 = vadd.f32 %v6049, %v6050
    %v6124 = vadd.f32 %v6123, %v6051
    %v6125 = vadd.f32 %v6124, %v6052
    %6126 = vadd.xlane.f32.xlu0 %v6125
    %v6127 = vpop.xlane.xlu0 %6126
    %v6128 = vadd.f32 %v6053, %v6054
    %v6129 = vadd.f32 %v6128, %v6055
    %v6130 = vadd.f32 %v6129, %v6056
    %6131 = vadd.xlane.f32.xlu0 %v6130
    %v6132 = vpop.xlane.xlu0 %6131
    %v6133 = vadd.f32 %v6057, %v6058
    %v6134 = vadd.f32 %v6133, %v6059
    %v6135 = vadd.f32 %v6134, %v6060
    %6136 = vadd.xlane.f32.xlu0 %v6135
    %v6137 = vpop.xlane.xlu0 %6136
    %v6138 = vadd.f32 %v6061, %v6062
    %v6139 = vadd.f32 %v6138, %v6063
    %v6140 = vadd.f32 %v6139, %v6064
    %6141 = vadd.xlane.f32.xlu0 %v6140
    %v6142 = vpop.xlane.xlu0 %6141
    %v6143 = vadd.f32 %v6065, %v6066
    %v6144 = vadd.f32 %v6143, %v6067
    %v6145 = vadd.f32 %v6144, %v6068
    %6146 = vadd.xlane.f32.xlu0 %v6145
    %v6147 = vpop.xlane.xlu0 %6146
    %v6148 = vadd.f32 %v6069, %v6070
    %v6149 = vadd.f32 %v6148, %v6071
    %v6150 = vadd.f32 %v6149, %v6072
    %6151 = vadd.xlane.f32.xlu0 %v6150
    %v6152 = vpop.xlane.xlu0 %6151
    %v6161 = vlaneseq
    %v6162 = vshrl.u32 %v6161, 7
    %v6163 = vsub.s32 %v635, %v6162
    %v6164 = vrot.slane %v6077, %v6163
    %v6165 = vadd.s32 %v635, 4294967288
    %v6166 = vlaneseq
    %v6167 = vshrl.u32 %v6166, 7
    %v6168 = vsub.s32 %v6165, %v6167
    %v6169 = vrot.slane %v6082, %v6168
    %vm6170 = vcmask 130112
    %v6171 = vsel %vm6170, %v6169, %v6164
    %v6172 = vadd.s32 %v635, 4294967280
    %v6173 = vlaneseq
    %v6174 = vshrl.u32 %v6173, 7
    %v6175 = vsub.s32 %v6172, %v6174
    %v6176 = vrot.slane %v6087, %v6175
    %vm6177 = vcmask 195712
    %v6178 = vsel %vm6177, %v6176, %v6171
    %v6179 = vadd.s32 %v635, 4294967272
    %v6180 = vlaneseq
    %v6181 = vshrl.u32 %v6180, 7
    %v6182 = vsub.s32 %v6179, %v6181
    %v6183 = vrot.slane %v6092, %v6182
    %vm6184 = vcmask 261312
    %v6185 = vsel %vm6184, %v6183, %v6178
    %v6186 = vadd.s32 %v635, 4294967264
    %v6187 = vlaneseq
    %v6188 = vshrl.u32 %v6187, 7
    %v6189 = vsub.s32 %v6186, %v6188
    %v6190 = vrot.slane %v6097, %v6189
    %vm6191 = vcmask 326912
    %v6192 = vsel %vm6191, %v6190, %v6185
    %v6193 = vadd.s32 %v635, 4294967256
    %v6194 = vlaneseq
    %v6195 = vshrl.u32 %v6194, 7
    %v6196 = vsub.s32 %v6193, %v6195
    %v6197 = vrot.slane %v6102, %v6196
    %vm6198 = vcmask 392512
    %v6199 = vsel %vm6198, %v6197, %v6192
    %v6200 = vadd.s32 %v635, 4294967248
    %v6201 = vlaneseq
    %v6202 = vshrl.u32 %v6201, 7
    %v6203 = vsub.s32 %v6200, %v6202
    %v6204 = vrot.slane %v6107, %v6203
    %vm6205 = vcmask 458112
    %v6206 = vsel %vm6205, %v6204, %v6199
    %v6207 = vadd.s32 %v635, 4294967240
    %v6208 = vlaneseq
    %v6209 = vshrl.u32 %v6208, 7
    %v6210 = vsub.s32 %v6207, %v6209
    %v6211 = vrot.slane %v6112, %v6210
    %vm6212 = vcmask 523712
    %v6213 = vsel %vm6212, %v6211, %v6206
    %vm6215 = vcmask 516096
    %6216 = vst.msk [vmem:[%s13] sm:$0x1] %vm6215, %v6213
    %v6225 = vadd.s32 %v635, 4294967232
    %v6226 = vlaneseq
    %v6227 = vshrl.u32 %v6226, 7
    %v6228 = vsub.s32 %v6225, %v6227
    %v6229 = vrot.slane %v6117, %v6228
    %v6230 = vadd.s32 %v635, 4294967224
    %v6231 = vlaneseq
    %v6232 = vshrl.u32 %v6231, 7
    %v6233 = vsub.s32 %v6230, %v6232
    %v6234 = vrot.slane %v6122, %v6233
    %vm6235 = vcmask 654912
    %v6236 = vsel %vm6235, %v6234, %v6229
    %v6237 = vadd.s32 %v635, 4294967216
    %v6238 = vlaneseq
    %v6239 = vshrl.u32 %v6238, 7
    %v6240 = vsub.s32 %v6237, %v6239
    %v6241 = vrot.slane %v6127, %v6240
    %vm6242 = vcmask 720512
    %v6243 = vsel %vm6242, %v6241, %v6236
    %v6244 = vadd.s32 %v635, 4294967208
    %v6245 = vlaneseq
    %v6246 = vshrl.u32 %v6245, 7
    %v6247 = vsub.s32 %v6244, %v6246
    %v6248 = vrot.slane %v6132, %v6247
    %vm6249 = vcmask 786112
    %v6250 = vsel %vm6249, %v6248, %v6243
    %v6251 = vadd.s32 %v635, 4294967200
    %v6252 = vlaneseq
    %v6253 = vshrl.u32 %v6252, 7
    %v6254 = vsub.s32 %v6251, %v6253
    %v6255 = vrot.slane %v6137, %v6254
    %vm6256 = vcmask 851712
    %v6257 = vsel %vm6256, %v6255, %v6250
    %v6258 = vadd.s32 %v635, 4294967192
    %v6259 = vlaneseq
    %v6260 = vshrl.u32 %v6259, 7
    %v6261 = vsub.s32 %v6258, %v6260
    %v6262 = vrot.slane %v6142, %v6261
    %vm6263 = vcmask 917312
    %v6264 = vsel %vm6263, %v6262, %v6257
    %v6265 = vadd.s32 %v635, 4294967184
    %v6266 = vlaneseq
    %v6267 = vshrl.u32 %v6266, 7
    %v6268 = vsub.s32 %v6265, %v6267
    %v6269 = vrot.slane %v6147, %v6268
    %vm6270 = vcmask 982912
    %v6271 = vsel %vm6270, %v6269, %v6264
    %v6272 = vadd.s32 %v635, 4294967176
    %v6273 = vlaneseq
    %v6274 = vshrl.u32 %v6273, 7
    %v6275 = vsub.s32 %v6272, %v6274
    %v6276 = vrot.slane %v6152, %v6275
    %vm6277 = vcmask 1048512
    %v6278 = vsel %vm6277, %v6276, %v6271
    %vm6280 = vcmask 1040896
    %6281 = vst.msk [vmem:[%s13] sm:$0x1] %vm6280, %v6278
    // Predicated region
    $region74: #{net_forward.1} parent=1 // pred_check
      _
    $region75: #{net_forward.1} parent=1 // pred_check_branch
      %6283 = sbr.rel (0) target = $region77
    $region76: #{net_forward.1} parent=1 // pred_region
      _
    $region77: #{net_forward.1} parent=1 // pred_fallthru
      _
    // Predicated region
    $region78: #{net_forward.1} parent=1 // pred_check
      _
    $region79: #{net_forward.1} parent=1 // pred_check_branch
      %6285 = sbr.rel (0) target = $region81
    $region80: #{net_forward.1} parent=1 // pred_region
      _
    $region81: #{net_forward.1} parent=1 // pred_fallthru
      _
    // Predicated region
    $region82: #{net_forward.1} parent=1 // pred_check
      _
    $region83: #{net_forward.1} parent=1 // pred_check_branch
      %6287 = sbr.rel (0) target = $region85
    $region84: #{net_forward.1} parent=1 // pred_region
      _
    $region85: #{net_forward.1} parent=1 // pred_fallthru
      _
    // Predicated region
    $region86: #{net_forward.1} parent=1 // pred_check
      _
    $region87: #{net_forward.1} parent=1 // pred_check_branch
      %6289 = sbr.rel (0) target = $region89
    $region88: #{net_forward.1} parent=1 // pred_region
      _
    $region89: #{net_forward.1} parent=1 // pred_fallthru
      _
    // Predicated region
    $region90: #{net_forward.1} parent=1 // pred_check
      _
    $region91: #{net_forward.1} parent=1 // pred_check_branch
      %6291 = sbr.rel (0) target = $region93
    $region92: #{net_forward.1} parent=1 // pred_region
      _
    $region93: #{net_forward.1} parent=1 // pred_fallthru
      _
    // Predicated region
    $region94: #{net_forward.1} parent=1 // pred_check
      _
    $region95: #{net_forward.1} parent=1 // pred_check_branch
      %6293 = sbr.rel (0) target = $region97
    $region96: #{net_forward.1} parent=1 // pred_region
      _
    $region97: #{net_forward.1} parent=1 // pred_fallthru
      _
    %6294 = vsyncpa [#allocation3], 1
    %6295 = vsyncpa [#allocation5], 1
    %6296 = vsyncpa [#allocation8], 1
    %6297 = vsyncpa [#allocation11], 1

</llo_original>
